<compile_context>
chip_gen: v7x
topology: tpu7x:2x2x1
jax: 0.10.0
libtpu: 0.0.40
codegen_flags: <defaults>
</compile_context>

<pallas_src>
import functools

import jax
import jax.numpy as jnp
from jax import lax
from jax.experimental import pallas as pl
from jax.experimental.pallas import tpu as pltpu


def _round_up(v, m):
    return (v + m - 1) // m * m


def _resblock_kernel(xq_ref, w1_ref, b1_ref, w2_ref, b2_ref, o_ref, *,
                     K, pad, H, W, left, res_scale):
    """One batch element per grid step.

    xq_ref: (1, Hq, Wq, Cp) f32 zero-padded NHWC input.
            Rows:  2*pad zero rows | H real rows | (pad+1) zero rows.
            Cols:  `left` zero cols | W real cols | right zero cols, Wq % 8 == 0.
    w*_ref: (K*K*Cp, Cp) bf16 conv weights, packed (ky, kx, cin)-major.
    b*_ref: (1, Cp) f32 biases (zero-padded channels).
    o_ref : (1, H, Wq, Cp) f32. Columns outside [left, left+W) are garbage and
            are cropped by the wrapper (keeps the store lane/sublane dense).
    """
    _, Hq, Wq, Cp = xq_ref.shape
    top = 2 * pad
    Mq = H * Wq

    x_f32 = xq_ref[...].reshape(Hq * Wq, Cp)          # aligned flatten (Wq%8==0)
    x_bf = x_f32.astype(jnp.bfloat16)

    def conv(inp_flat_bf, w_ref):
        # im2col via flat shifts: tap (ky,kx) of output (h, j) lives at flat
        # index h*Wq + j + (ky+pad)*Wq + (kx-pad).  All shifts are static,
        # in-bounds slices; wrap artifacts only land in the cropped columns.
        taps = []
        for ky in range(K):
            for kx in range(K):
                d = (ky + pad) * Wq + (kx - pad)
                taps.append(inp_flat_bf[d:d + Mq, :])
        patch = jnp.concatenate(taps, axis=1)          # (Mq, K*K*Cp) bf16
        return jnp.dot(patch, w_ref[...],
                       preferred_element_type=jnp.float32)   # (Mq, Cp) f32

    # Column validity mask: conv2's SAME padding must see zeros outside the
    # real W columns of the intermediate activation.
    col = lax.broadcasted_iota(jnp.int32, (H, Wq, Cp), 1).reshape(Mq, Cp)
    col_valid = (col >= left) & (col < left + W)

    # ---------------- conv1 + bias + ReLU (f32 elementwise) ----------------
    h1 = jnp.maximum(conv(x_bf, w1_ref) + b1_ref[...], 0.0)
    h1 = jnp.where(col_valid, h1, 0.0).astype(jnp.bfloat16)

    # Re-pad the intermediate to the same (Hq, Wq) geometry as the input —
    # pure value ops (aligned sublane concat), no VMEM scratch round-trip.
    parts = []
    if top > 0:
        parts.append(jnp.zeros((top * Wq, Cp), jnp.bfloat16))
    parts.append(h1)
    n_bot = Hq - H - top
    if n_bot > 0:
        parts.append(jnp.zeros((n_bot * Wq, Cp), jnp.bfloat16))
    h1q = jnp.concatenate(parts, axis=0)               # (Hq*Wq, Cp) bf16

    # ---------------- conv2 + bias, residual in f32 ----------------
    y2 = conv(h1q, w2_ref) + b2_ref[...]
    x_center = x_f32[top * Wq:(top + H) * Wq, :]       # aligned slice
    out = y2 * res_scale + x_center
    o_ref[...] = out.reshape(1, H, Wq, Cp).astype(o_ref.dtype)


def resblock_forward(x_nchw, w1, b1, w2, b2, *, res_scale=1.0):
    """x_nchw: (N, C, H, W) float32; w*: (K, K, C, C) HWIO; b*: (C,)."""
    N, C, H, W = x_nchw.shape
    K = w1.shape[0]
    pad = K // 2

    Cp = _round_up(C, 128)                  # lane-dense channel axis
    left = pad
    Wq = _round_up(W + 2 * pad, 8)          # sublane-aligned padded width
    right = Wq - W - left
    top = 2 * pad                           # halo so every tap shift is >= 0
    bot = pad + 1 if pad > 0 else 0         # extra row so all flat slices fit
    Hq = H + top + bot

    x = jnp.transpose(x_nchw, (0, 2, 3, 1)).astype(jnp.float32)   # -> NHWC
    xq = jnp.pad(x, ((0, 0), (top, bot), (left, right), (0, Cp - C)))

    def pack_w(w):
        wp = jnp.pad(w, ((0, 0), (0, 0), (0, Cp - C), (0, Cp - C)))
        return wp.reshape(K * K * Cp, Cp).astype(jnp.bfloat16)

    def pack_b(b):
        return jnp.pad(b, (0, Cp - C)).reshape(1, Cp).astype(jnp.float32)

    w1m, w2m = pack_w(w1), pack_w(w2)
    b1v, b2v = pack_b(b1), pack_b(b2)

    kern = functools.partial(_resblock_kernel, K=K, pad=pad, H=H, W=W,
                             left=left, res_scale=float(res_scale))

    flops = 2 * 2 * N * H * Wq * (K * K * Cp) * Cp
    bytes_accessed = (N * Hq * Wq * Cp * 4            # input
                      + 2 * K * K * Cp * Cp * 2       # weights (bf16)
                      + N * H * Wq * Cp * 4)          # output

    out_full = pl.pallas_call(
        kern,
        out_shape=jax.ShapeDtypeStruct((N, H, Wq, Cp), jnp.float32),
        grid=(N,),
        in_specs=[
            pl.BlockSpec((1, Hq, Wq, Cp), lambda n: (n, 0, 0, 0)),
            pl.BlockSpec((K * K * Cp, Cp), lambda n: (0, 0)),
            pl.BlockSpec((1, Cp), lambda n: (0, 0)),
            pl.BlockSpec((K * K * Cp, Cp), lambda n: (0, 0)),
            pl.BlockSpec((1, Cp), lambda n: (0, 0)),
        ],
        out_specs=pl.BlockSpec((1, H, Wq, Cp), lambda n: (n, 0, 0, 0)),
        compiler_params=pltpu.CompilerParams(
            dimension_semantics=("parallel",)),
        cost_estimate=pl.CostEstimate(flops=flops, transcendentals=0,
                                      bytes_accessed=bytes_accessed),
    )(xq, w1m, b1v, w2m, b2v)

    out = out_full[:, :, left:left + W, :C]            # crop pad cols/channels
    return jnp.transpose(out, (0, 3, 1, 2))            # -> NCHW


def _reference_forward(x_nchw, w1, b1, w2, b2, res_scale=1.0):
    """Pure-JAX f32 reference (mirrors the PyTorch module)."""
    dn = ('NCHW', 'HWIO', 'NCHW')
    y = lax.conv_general_dilated(x_nchw, w1, (1, 1), 'SAME',
                                 dimension_numbers=dn)
    y = jnp.maximum(y + b1.reshape(1, -1, 1, 1), 0.0)
    y = lax.conv_general_dilated(y, w2, (1, 1), 'SAME',
                                 dimension_numbers=dn)
    y = y + b2.reshape(1, -1, 1, 1)
    return y * res_scale + x_nchw


if __name__ == "__main__":
    # Small shapes consistent with ResBlock(conv, n_feats, kernel_size=3).
    N, C, H, W = 2, 8, 16, 16     # batch, n_feats, spatial
    K = 3                         # kernel_size
    res_scale = 1.0

    key = jax.random.PRNGKey(0)
    kx, kw1, kb1, kw2, kb2 = jax.random.split(key, 5)

    x = jax.random.normal(kx, (N, C, H, W), dtype=jnp.float32)
    w1 = 0.1 * jax.random.normal(kw1, (K, K, C, C), dtype=jnp.float32)
    b1 = 0.1 * jax.random.normal(kb1, (C,), dtype=jnp.float32)
    w2 = 0.1 * jax.random.normal(kw2, (K, K, C, C), dtype=jnp.float32)
    b2 = 0.1 * jax.random.normal(kb2, (C,), dtype=jnp.float32)

    fwd = jax.jit(functools.partial(resblock_forward, res_scale=res_scale))
    out = jax.block_until_ready(fwd(x, w1, b1, w2, b2))

    ref = _reference_forward(x, w1, b1, w2, b2, res_scale=res_scale)
    assert out.shape == (N, C, H, W)
    # bf16 matmul operands (f32 accumulation) -> loosened tolerance vs f32 ref.
    assert jnp.allclose(out, ref, atol=5e-2, rtol=5e-2), \
        f"max abs err {jnp.max(jnp.abs(out - ref))}"

    print("KERNEL_OK")
</pallas_src>

<mosaic_0001>
module attributes {stable_mosaic.version = 11 : i64} {
  func.func @_resblock_kernel(%arg0: i32, %arg1: memref<1x20x24x128xf32, #tpu.memory_space<vmem>>, %arg2: memref<1152x128xbf16, #tpu.memory_space<vmem>>, %arg3: memref<1x128xf32, #tpu.memory_space<vmem>>, %arg4: memref<1152x128xbf16, #tpu.memory_space<vmem>>, %arg5: memref<1x128xf32, #tpu.memory_space<vmem>>, %arg6: memref<1x16x24x128xf32, #tpu.memory_space<vmem>>) attributes {dimension_semantics = [#tpu.dimension_semantics<parallel>], iteration_bounds = array<i64: 2>, scalar_prefetch = 0 : i64, scratch_operands = 0 : i64, tpu.core_type = #tpu.core_type<tc>, window_params = [{transform_indices = @transform_0, window_bounds = array<i64: 1, 20, 24, 128>}, {pipeline_mode = #tpu.pipeline_mode<synchronous>, transform_indices = @transform_1, window_bounds = array<i64: 1152, 128>}, {pipeline_mode = #tpu.pipeline_mode<synchronous>, transform_indices = @transform_2, window_bounds = array<i64: 1, 128>}, {pipeline_mode = #tpu.pipeline_mode<synchronous>, transform_indices = @transform_3, window_bounds = array<i64: 1152, 128>}, {pipeline_mode = #tpu.pipeline_mode<synchronous>, transform_indices = @transform_4, window_bounds = array<i64: 1, 128>}, {transform_indices = @transform_5, window_bounds = array<i64: 1, 16, 24, 128>}]} {
    %c0 = arith.constant 0 : index
    %c0_0 = arith.constant 0 : index
    %c0_1 = arith.constant 0 : index
    %c0_2 = arith.constant 0 : index
    %0 = vector.load %arg1[%c0, %c0_0, %c0_1, %c0_2] : memref<1x20x24x128xf32, #tpu.memory_space<vmem>>, vector<1x20x24x128xf32>
    %1 = vector.shape_cast %0 : vector<1x20x24x128xf32> to vector<480x128xf32>
    %2 = arith.truncf %1 : vector<480x128xf32> to vector<480x128xbf16>
    %3 = tpu.iota {dimensions = array<i32: 1>} : vector<16x24x128xi32>
    %4 = vector.shape_cast %3 : vector<16x24x128xi32> to vector<384x128xi32>
    %c1_i32 = arith.constant 1 : i32
    %5 = vector.broadcast %c1_i32 : i32 to vector<384x128xi32>
    %6 = arith.cmpi sge, %4, %5 : vector<384x128xi32>
    %c17_i32 = arith.constant 17 : i32
    %7 = vector.broadcast %c17_i32 : i32 to vector<384x128xi32>
    %8 = arith.cmpi slt, %4, %7 : vector<384x128xi32>
    %9 = arith.andi %6, %8 : vector<384x128xi1>
    %10 = vector.extract_strided_slice %2 {offsets = [23, 0], sizes = [384, 128], strides = [1, 1]} : vector<480x128xbf16> to vector<384x128xbf16>
    %11 = vector.extract_strided_slice %2 {offsets = [24, 0], sizes = [384, 128], strides = [1, 1]} : vector<480x128xbf16> to vector<384x128xbf16>
    %12 = vector.extract_strided_slice %2 {offsets = [25, 0], sizes = [384, 128], strides = [1, 1]} : vector<480x128xbf16> to vector<384x128xbf16>
    %13 = vector.extract_strided_slice %2 {offsets = [47, 0], sizes = [384, 128], strides = [1, 1]} : vector<480x128xbf16> to vector<384x128xbf16>
    %14 = vector.extract_strided_slice %2 {offsets = [48, 0], sizes = [384, 128], strides = [1, 1]} : vector<480x128xbf16> to vector<384x128xbf16>
    %15 = vector.extract_strided_slice %2 {offsets = [49, 0], sizes = [384, 128], strides = [1, 1]} : vector<480x128xbf16> to vector<384x128xbf16>
    %16 = vector.extract_strided_slice %2 {offsets = [71, 0], sizes = [384, 128], strides = [1, 1]} : vector<480x128xbf16> to vector<384x128xbf16>
    %17 = vector.extract_strided_slice %2 {offsets = [72, 0], sizes = [384, 128], strides = [1, 1]} : vector<480x128xbf16> to vector<384x128xbf16>
    %18 = vector.extract_strided_slice %2 {offsets = [73, 0], sizes = [384, 128], strides = [1, 1]} : vector<480x128xbf16> to vector<384x128xbf16>
    %19 = tpu.concatenate %10, %11, %12, %13, %14, %15, %16, %17, %18 in 1 : vector<384x128xbf16>, vector<384x128xbf16>, vector<384x128xbf16>, vector<384x128xbf16>, vector<384x128xbf16>, vector<384x128xbf16>, vector<384x128xbf16>, vector<384x128xbf16>, vector<384x128xbf16> -> vector<384x1152xbf16>
    %c0_3 = arith.constant 0 : index
    %c0_4 = arith.constant 0 : index
    %20 = vector.load %arg2[%c0_3, %c0_4] : memref<1152x128xbf16, #tpu.memory_space<vmem>>, vector<1152x128xbf16>
    %cst = arith.constant dense<0.000000e+00> : vector<384x128xf32>
    %21 = tpu.matmul %19, %20, %cst {dimension_numbers = #tpu.dot_dimension_numbers<[1], [0], [0], [1], [0, 0, 1, 1], [], []>} : vector<384x1152xbf16>, vector<1152x128xbf16>, vector<384x128xf32> -> vector<384x128xf32>
    %c0_5 = arith.constant 0 : index
    %c0_6 = arith.constant 0 : index
    %22 = vector.load %arg3[%c0_5, %c0_6] : memref<1x128xf32, #tpu.memory_space<vmem>>, vector<1x128xf32>
    %23 = vector.broadcast %22 : vector<1x128xf32> to vector<384x128xf32>
    %24 = arith.addf %21, %23 : vector<384x128xf32>
    %cst_7 = arith.constant 0.000000e+00 : f32
    %25 = vector.broadcast %cst_7 : f32 to vector<384x128xf32>
    %26 = arith.maximumf %24, %25 : vector<384x128xf32>
    %cst_8 = arith.constant 0.000000e+00 : f32
    %27 = vector.broadcast %cst_8 : f32 to vector<384x128xf32>
    %28 = arith.select %9, %26, %27 : vector<384x128xi1>, vector<384x128xf32>
    %29 = arith.truncf %28 : vector<384x128xf32> to vector<384x128xbf16>
    %cst_9 = arith.constant 0.000000e+00 : bf16
    %30 = vector.broadcast %cst_9 : bf16 to vector<48x128xbf16>
    %cst_10 = arith.constant 0.000000e+00 : bf16
    %31 = vector.broadcast %cst_10 : bf16 to vector<48x128xbf16>
    %32 = tpu.concatenate %30, %29, %31 in 0 : vector<48x128xbf16>, vector<384x128xbf16>, vector<48x128xbf16> -> vector<480x128xbf16>
    %33 = vector.extract_strided_slice %32 {offsets = [23, 0], sizes = [384, 128], strides = [1, 1]} : vector<480x128xbf16> to vector<384x128xbf16>
    %34 = vector.extract_strided_slice %32 {offsets = [24, 0], sizes = [384, 128], strides = [1, 1]} : vector<480x128xbf16> to vector<384x128xbf16>
    %35 = vector.extract_strided_slice %32 {offsets = [25, 0], sizes = [384, 128], strides = [1, 1]} : vector<480x128xbf16> to vector<384x128xbf16>
    %36 = vector.extract_strided_slice %32 {offsets = [47, 0], sizes = [384, 128], strides = [1, 1]} : vector<480x128xbf16> to vector<384x128xbf16>
    %37 = vector.extract_strided_slice %32 {offsets = [48, 0], sizes = [384, 128], strides = [1, 1]} : vector<480x128xbf16> to vector<384x128xbf16>
    %38 = vector.extract_strided_slice %32 {offsets = [49, 0], sizes = [384, 128], strides = [1, 1]} : vector<480x128xbf16> to vector<384x128xbf16>
    %39 = vector.extract_strided_slice %32 {offsets = [71, 0], sizes = [384, 128], strides = [1, 1]} : vector<480x128xbf16> to vector<384x128xbf16>
    %40 = vector.extract_strided_slice %32 {offsets = [72, 0], sizes = [384, 128], strides = [1, 1]} : vector<480x128xbf16> to vector<384x128xbf16>
    %41 = vector.extract_strided_slice %32 {offsets = [73, 0], sizes = [384, 128], strides = [1, 1]} : vector<480x128xbf16> to vector<384x128xbf16>
    %42 = tpu.concatenate %33, %34, %35, %36, %37, %38, %39, %40, %41 in 1 : vector<384x128xbf16>, vector<384x128xbf16>, vector<384x128xbf16>, vector<384x128xbf16>, vector<384x128xbf16>, vector<384x128xbf16>, vector<384x128xbf16>, vector<384x128xbf16>, vector<384x128xbf16> -> vector<384x1152xbf16>
    %c0_11 = arith.constant 0 : index
    %c0_12 = arith.constant 0 : index
    %43 = vector.load %arg4[%c0_11, %c0_12] : memref<1152x128xbf16, #tpu.memory_space<vmem>>, vector<1152x128xbf16>
    %cst_13 = arith.constant dense<0.000000e+00> : vector<384x128xf32>
    %44 = tpu.matmul %42, %43, %cst_13 {dimension_numbers = #tpu.dot_dimension_numbers<[1], [0], [0], [1], [0, 0, 1, 1], [], []>} : vector<384x1152xbf16>, vector<1152x128xbf16>, vector<384x128xf32> -> vector<384x128xf32>
    %c0_14 = arith.constant 0 : index
    %c0_15 = arith.constant 0 : index
    %45 = vector.load %arg5[%c0_14, %c0_15] : memref<1x128xf32, #tpu.memory_space<vmem>>, vector<1x128xf32>
    %46 = vector.broadcast %45 : vector<1x128xf32> to vector<384x128xf32>
    %47 = arith.addf %44, %46 : vector<384x128xf32>
    %48 = vector.extract_strided_slice %1 {offsets = [48, 0], sizes = [384, 128], strides = [1, 1]} : vector<480x128xf32> to vector<384x128xf32>
    %cst_16 = arith.constant 1.000000e+00 : f32
    %49 = vector.broadcast %cst_16 : f32 to vector<384x128xf32>
    %50 = arith.mulf %47, %49 : vector<384x128xf32>
    %51 = arith.addf %50, %48 : vector<384x128xf32>
    %52 = vector.shape_cast %51 : vector<384x128xf32> to vector<1x16x24x128xf32>
    %c0_17 = arith.constant 0 : index
    %c0_18 = arith.constant 0 : index
    %c0_19 = arith.constant 0 : index
    %c0_20 = arith.constant 0 : index
    %53 = vector.load %arg6[%c0_17, %c0_18, %c0_19, %c0_20] : memref<1x16x24x128xf32, #tpu.memory_space<vmem>>, vector<1x16x24x128xf32>
    tpu.vector_store %arg6[%c0_17, %c0_18, %c0_19, %c0_20], %52 {strides = array<i32>} : memref<1x16x24x128xf32, #tpu.memory_space<vmem>>, vector<1x16x24x128xf32>,
    return
  }
  func.func @transform_0(%arg0: i32) -> (i32, i32, i32, i32) {
    %c0_i32 = arith.constant 0 : i32
    %c0_i32_0 = arith.constant 0 : i32
    %c0_i32_1 = arith.constant 0 : i32
    %c0_i32_2 = arith.constant 0 : i32
    return %arg0, %c0_i32, %c0_i32_0, %c0_i32_1 : i32, i32, i32, i32
  }
  func.func @transform_1(%arg0: i32) -> (i32, i32) {
    %c0_i32 = arith.constant 0 : i32
    %c0_i32_0 = arith.constant 0 : i32
    %c0_i32_1 = arith.constant 0 : i32
    return %c0_i32, %c0_i32_0 : i32, i32
  }
  func.func @transform_2(%arg0: i32) -> (i32, i32) {
    %c0_i32 = arith.constant 0 : i32
    %c0_i32_0 = arith.constant 0 : i32
    %c0_i32_1 = arith.constant 0 : i32
    return %c0_i32, %c0_i32_0 : i32, i32
  }
  func.func @transform_3(%arg0: i32) -> (i32, i32) {
    %c0_i32 = arith.constant 0 : i32
    %c0_i32_0 = arith.constant 0 : i32
    %c0_i32_1 = arith.constant 0 : i32
    return %c0_i32, %c0_i32_0 : i32, i32
  }
  func.func @transform_4(%arg0: i32) -> (i32, i32) {
    %c0_i32 = arith.constant 0 : i32
    %c0_i32_0 = arith.constant 0 : i32
    %c0_i32_1 = arith.constant 0 : i32
    return %c0_i32, %c0_i32_0 : i32, i32
  }
  func.func @transform_5(%arg0: i32) -> (i32, i32, i32, i32) {
    %c0_i32 = arith.constant 0 : i32
    %c0_i32_0 = arith.constant 0 : i32
    %c0_i32_1 = arith.constant 0 : i32
    %c0_i32_2 = arith.constant 0 : i32
    return %arg0, %c0_i32, %c0_i32_0, %c0_i32_1 : i32, i32, i32, i32
  }
}

</mosaic_0001>

<llo_original>
// kernel: resblock_forward.1
$region0: #{resblock_forward.1}
  #allocation0 [shape = 'u32[]', space=smem, size = 0x4, offset = 0x4, fixed_abs, tag = 'smem constant byte address 0x4 - core index']
  #allocation1 [shape = 'u32[144,128]{1,0:T(1,128)}', space=vmem, size = 0x12000, scoped, tag = 'internal scratch']
  %s0 = inlined_call_operand.vmem [shape: f32[2,20,24,128], index: 0, kind: input, shape index: {}]
  %s1 = inlined_call_operand.vmem [shape: bf16[1152,128], index: 1, kind: input, shape index: {}]
  %s2 = inlined_call_operand.vmem [shape: f32[1,128], index: 2, kind: input, shape index: {}]
  %s3 = inlined_call_operand.vmem [shape: bf16[1152,128], index: 3, kind: input, shape index: {}]
  %s4 = inlined_call_operand.vmem [shape: f32[1,128], index: 4, kind: input, shape index: {}]
  %s5 = inlined_call_operand.vmem [shape: f32[2,16,24,128], index: 5, kind: output, shape index: {}]
  %s6 = sld [smem:[#allocation0]]
  $region53: #{resblock_forward.1} parent=0
    _
  %s8 = ssub.s32 1, %s6
  %s9 = scalar_select 0, %s8, %s6
  loop: start=0, step=1, limit=4
  $region2: #{resblock_forward.1} parent=0 // loop_pre_header
    _
  $region3: #{resblock_forward.1} parent=0 // loop_header
    %s11 = sphi 0, %s15
    %p12 = scmp.ge.s32.totalorder %s11, 4
    %s21 = sphi 0, %s23
    %s24 = sphi 0, %s21
    %s25 = sphi 0, %s24
    %s41 = sphi 0, %s25
    %s45 = sphi 0, %s45
    %s47 = sphi 0, %s45
    %s48 = sphi 0, %s47
    %s62 = sphi 0, %s48
    %s66 = sphi 0, %s66
    %s68 = sphi 0, %s66
    %s69 = sphi 0, %s68
    %s83 = sphi 0, %s69
    %s87 = sphi 0, %s87
    %s89 = sphi 0, %s87
    %s90 = sphi 0, %s89
    %s104 = sphi 0, %s90
    %s108 = sphi 0, %s108
    %s110 = sphi 0, %s108
    %s111 = sphi 0, %s110
    %s125 = sphi 0, %s111
    %s131 = sphi 0, %s133
    %s134 = sphi 0, %s131
    %s135 = sphi 0, %s134
    %s151 = sphi 0, %s135
  $region4: #{resblock_forward.1} parent=0 // loop_header_branch
    %14 = sbr.rel (%p12) target = $region8
  $region5: #{resblock_forward.1} parent=0 // loop_body
    %s16 = ssub.s32 %s11, 1
    %s17 = ssub.s32 %s11, 2
    %s18 = sadd.s32 %s11, 1
    %s19 = ssub.s32 %s11, %s18
    %p20 = scmp.eq.s32.totalorder %s19, 0
    %s22 = sadd.s32 %s21, 1
    %s23 = scalar_select %p20, %s21, %s22
    %p26 = pneg %p20
    %p27 = scmp.eq.s32.totalorder %s11, 1
    %p28 = por %p26, %p27
    %p29 = scmp.ne.s32.totalorder %s21, %s24
    %p30 = scmp.eq.s32.totalorder %s11, 0
    %p31 = por %p29, %p30
    %p32 = scmp.ne.s32.totalorder %s21, %s24
    %p33 = scmp.eq.s32.totalorder %s16, 1
    %p34 = por %p32, %p33
    %p35 = scmp.ne.s32.totalorder %s24, %s25
    %p36 = scmp.eq.s32.totalorder %s16, 0
    %p37 = por %p35, %p36
    %p38 = scmp.ne.s32.totalorder %s24, %s25
    %p39 = scmp.eq.s32.totalorder %s17, 1
    %p40 = por %p38, %p39
    %p42 = scmp.ne.s32.totalorder %s25, %s41
    %p43 = scmp.eq.s32.totalorder %s17, 0
    %p44 = por %p42, %p43
    %s46 = sadd.s32 %s45, 1
    %p49 = scmp.eq.s32.totalorder %s11, 1
    %p50 = scmp.ne.s32.totalorder %s45, %s47
    %p51 = scmp.eq.s32.totalorder %s11, 0
    %p52 = por %p50, %p51
    %p53 = scmp.ne.s32.totalorder %s45, %s47
    %p54 = scmp.eq.s32.totalorder %s16, 1
    %p55 = por %p53, %p54
    %p56 = scmp.ne.s32.totalorder %s47, %s48
    %p57 = scmp.eq.s32.totalorder %s16, 0
    %p58 = por %p56, %p57
    %p59 = scmp.ne.s32.totalorder %s47, %s48
    %p60 = scmp.eq.s32.totalorder %s17, 1
    %p61 = por %p59, %p60
    %p63 = scmp.ne.s32.totalorder %s48, %s62
    %p64 = scmp.eq.s32.totalorder %s17, 0
    %p65 = por %p63, %p64
    %s67 = sadd.s32 %s66, 1
    %p70 = scmp.eq.s32.totalorder %s11, 1
    %p71 = scmp.ne.s32.totalorder %s66, %s68
    %p72 = scmp.eq.s32.totalorder %s11, 0
    %p73 = por %p71, %p72
    %p74 = scmp.ne.s32.totalorder %s66, %s68
    %p75 = scmp.eq.s32.totalorder %s16, 1
    %p76 = por %p74, %p75
    %p77 = scmp.ne.s32.totalorder %s68, %s69
    %p78 = scmp.eq.s32.totalorder %s16, 0
    %p79 = por %p77, %p78
    %p80 = scmp.ne.s32.totalorder %s68, %s69
    %p81 = scmp.eq.s32.totalorder %s17, 1
    %p82 = por %p80, %p81
    %p84 = scmp.ne.s32.totalorder %s69, %s83
    %p85 = scmp.eq.s32.totalorder %s17, 0
    %p86 = por %p84, %p85
    %s88 = sadd.s32 %s87, 1
    %p91 = scmp.eq.s32.totalorder %s11, 1
    %p92 = scmp.ne.s32.totalorder %s87, %s89
    %p93 = scmp.eq.s32.totalorder %s11, 0
    %p94 = por %p92, %p93
    %p95 = scmp.ne.s32.totalorder %s87, %s89
    %p96 = scmp.eq.s32.totalorder %s16, 1
    %p97 = por %p95, %p96
    %p98 = scmp.ne.s32.totalorder %s89, %s90
    %p99 = scmp.eq.s32.totalorder %s16, 0
    %p100 = por %p98, %p99
    %p101 = scmp.ne.s32.totalorder %s89, %s90
    %p102 = scmp.eq.s32.totalorder %s17, 1
    %p103 = por %p101, %p102
    %p105 = scmp.ne.s32.totalorder %s90, %s104
    %p106 = scmp.eq.s32.totalorder %s17, 0
    %p107 = por %p105, %p106
    %s109 = sadd.s32 %s108, 1
    %p112 = scmp.eq.s32.totalorder %s11, 1
    %p113 = scmp.ne.s32.totalorder %s108, %s110
    %p114 = scmp.eq.s32.totalorder %s11, 0
    %p115 = por %p113, %p114
    %p116 = scmp.ne.s32.totalorder %s108, %s110
    %p117 = scmp.eq.s32.totalorder %s16, 1
    %p118 = por %p116, %p117
    %p119 = scmp.ne.s32.totalorder %s110, %s111
    %p120 = scmp.eq.s32.totalorder %s16, 0
    %p121 = por %p119, %p120
    %p122 = scmp.ne.s32.totalorder %s110, %s111
    %p123 = scmp.eq.s32.totalorder %s17, 1
    %p124 = por %p122, %p123
    %p126 = scmp.ne.s32.totalorder %s111, %s125
    %p127 = scmp.eq.s32.totalorder %s17, 0
    %p128 = por %p126, %p127
    %s129 = ssub.s32 %s11, %s18
    %p130 = scmp.eq.s32.totalorder %s129, 0
    %s132 = sadd.s32 %s131, 1
    %s133 = scalar_select %p130, %s131, %s132
    %p136 = pneg %p130
    %p137 = scmp.eq.s32.totalorder %s11, 1
    %p138 = por %p136, %p137
    %p139 = scmp.ne.s32.totalorder %s131, %s134
    %p140 = scmp.eq.s32.totalorder %s11, 0
    %p141 = por %p139, %p140
    %p142 = scmp.ne.s32.totalorder %s131, %s134
    %p143 = scmp.eq.s32.totalorder %s16, 1
    %p144 = por %p142, %p143
    %p145 = scmp.ne.s32.totalorder %s134, %s135
    %p146 = scmp.eq.s32.totalorder %s16, 0
    %p147 = por %p145, %p146
    %p148 = scmp.ne.s32.totalorder %s134, %s135
    %p149 = scmp.eq.s32.totalorder %s17, 1
    %p150 = por %p148, %p149
    %p152 = scmp.ne.s32.totalorder %s135, %s151
    %p153 = scmp.eq.s32.totalorder %s17, 0
    %p154 = por %p152, %p153
    %p155 = scmp.le.s32.totalorder 1, %s11
    %p156 = scmp.lt.s32.totalorder %s11, 3
    %p157 = pnand %p155, %p156
    %p158 = pneg %p157
    // Predicated region
    $region9: #{resblock_forward.1} parent=5 // pred_check
      _
    $region10: #{resblock_forward.1} parent=5 // pred_check_branch
      %160 = sbr.rel (%p157) target = $region12
    $region11: #{resblock_forward.1} parent=5 // pred_region
      %s161 = ssub.s32 %s11, 1
      // Predicated region
      $region13: #{resblock_forward.1} parent=11 // pred_check
        %p162 = pneg %p58
      $region14: #{resblock_forward.1} parent=11 // pred_check_branch
        %164 = sbr.rel (%p162) target = $region16
      $region15: #{resblock_forward.1} parent=11 // pred_region
        _
      $region16: #{resblock_forward.1} parent=11 // pred_fallthru
        _
      // Predicated region
      $region17: #{resblock_forward.1} parent=11 // pred_check
        %p165 = pneg %p79
      $region18: #{resblock_forward.1} parent=11 // pred_check_branch
        %167 = sbr.rel (%p165) target = $region20
      $region19: #{resblock_forward.1} parent=11 // pred_region
        _
      $region20: #{resblock_forward.1} parent=11 // pred_fallthru
        _
      // Predicated region
      $region21: #{resblock_forward.1} parent=11 // pred_check
        %p168 = pneg %p100
      $region22: #{resblock_forward.1} parent=11 // pred_check_branch
        %170 = sbr.rel (%p168) target = $region24
      $region23: #{resblock_forward.1} parent=11 // pred_region
        _
      $region24: #{resblock_forward.1} parent=11 // pred_fallthru
        _
      // Predicated region
      $region25: #{resblock_forward.1} parent=11 // pred_check
        %p171 = pneg %p121
      $region26: #{resblock_forward.1} parent=11 // pred_check_branch
        %173 = sbr.rel (%p171) target = $region28
      $region27: #{resblock_forward.1} parent=11 // pred_region
        _
      $region28: #{resblock_forward.1} parent=11 // pred_fallthru
        _
    $region12: #{resblock_forward.1} parent=5 // pred_fallthru
      _
    %p174 = scmp.lt.s32.totalorder %s11, 2
    // Predicated region
    $region29: #{resblock_forward.1} parent=5 // pred_check
      %p175 = pneg %p174
    $region30: #{resblock_forward.1} parent=5 // pred_check_branch
      %177 = sbr.rel (%p175) target = $region32
    $region31: #{resblock_forward.1} parent=5 // pred_region
      // Predicated region
      $region33: #{resblock_forward.1} parent=31 // pred_check
        %p178 = pneg %p31
      $region34: #{resblock_forward.1} parent=31 // pred_check_branch
        %180 = sbr.rel (%p178) target = $region36
      $region35: #{resblock_forward.1} parent=31 // pred_region
        %p181 = scmp.lt.s32.totalorder %s11, 1
        %s182 = scalar_select %p181, %s11, 1
        %s183 = smul.addr %s182, 60
        %s184 = smul.addr %s183, 8
        %s185 = scalar_lea.vmem %s0, %s184
      $region36: #{resblock_forward.1} parent=31 // pred_fallthru
        _
    $region32: #{resblock_forward.1} parent=5 // pred_fallthru
      _
    %p186 = scmp.le.s32.totalorder 1, %s11
    %p187 = scmp.lt.s32.totalorder %s11, 3
    %p188 = pnand %p186, %p187
    %p189 = pneg %p188
    // Predicated region
    $region37: #{resblock_forward.1} parent=5 // pred_check
      _
    $region38: #{resblock_forward.1} parent=5 // pred_check_branch
      %191 = sbr.rel (%p188) target = $region40
    $region39: #{resblock_forward.1} parent=5 // pred_region
      %s192 = ssub.s32 %s11, 1
      %p193 = scmp.lt.s32.totalorder %s16, 1
      %s194 = scalar_select %p193, %s16, 1
      %s195 = smul.addr %s194, 60
      %s196 = smul.addr %s195, 8
      %s197 = scalar_lea.vmem %s0, %s196
      %p198 = pneg %p37
      %p199 = pneg %p34
      %p200 = pneg %p58
      %p201 = pneg %p55
      %p202 = pneg %p79
      %p203 = pneg %p76
      %p204 = pneg %p100
      %p205 = pneg %p97
      %p206 = pneg %p121
      %p207 = pneg %p118
      %p208 = pneg %p147
      %p209 = pneg %p144
      %p210 = scmp.lt.s32.totalorder %s16, 1
      %s211 = scalar_select %p210, %s16, 1
      %s212 = smul.addr %s211, 48
      %s213 = smul.addr %s212, 8
      %s214 = scalar_lea.vmem %s5, %s213
      %p215 = scmp.lt.s32.totalorder %s16, 1
      %s216 = scalar_select %p215, %s16, 1
      %s217 = smul.addr %s216, 60
      %s218 = smul.addr %s217, 8
      %s219 = scalar_lea.vmem %s0, %s218
      %p220 = scmp.lt.s32.totalorder %s16, 1
      %s221 = scalar_select %p220, %s16, 1
      %s222 = smul.addr %s221, 48
      %s223 = smul.addr %s222, 8
      %s224 = scalar_lea.vmem %s5, %s223
      %v226 = vld [vmem:[%s219 + $0x10] sm:$0xff]
      %v227 = vld [vmem:[%s219 + $0x18] sm:$0xff]
      %v228 = vld [vmem:[%s219 + $0x20] sm:$0xff]
      %v229 = vld [vmem:[%s219 + $0x28] sm:$0xff]
      %v230 = vld [vmem:[%s219 + $0x30] sm:$0xff]
      %v231 = vld [vmem:[%s219 + $0x38] sm:$0xff]
      %v232 = vld [vmem:[%s219 + $0x40] sm:$0xff]
      %v233 = vld [vmem:[%s219 + $0x48] sm:$0xff]
      %v234 = vld [vmem:[%s219 + $0x50] sm:$0xff]
      %v235 = vld [vmem:[%s219 + $0x58] sm:$0xff]
      %v236 = vld [vmem:[%s219 + $0x60] sm:$0xff]
      %v237 = vld [vmem:[%s219 + $0x68] sm:$0xff]
      %v238 = vld [vmem:[%s219 + $0x70] sm:$0xff]
      %v239 = vld [vmem:[%s219 + $0x78] sm:$0xff]
      %v240 = vld [vmem:[%s219 + $0x80] sm:$0xff]
      %v241 = vld [vmem:[%s219 + $0x88] sm:$0xff]
      %v242 = vld [vmem:[%s219 + $0x90] sm:$0xff]
      %v243 = vld [vmem:[%s219 + $0x98] sm:$0xff]
      %v244 = vld [vmem:[%s219 + $0xa0] sm:$0xff]
      %v245 = vld [vmem:[%s219 + $0xa8] sm:$0xff]
      %v246 = vld [vmem:[%s219 + $0xb0] sm:$0xff]
      %v247 = vld [vmem:[%s219 + $0xb8] sm:$0xff]
      %v248 = vld [vmem:[%s219 + $0xc0] sm:$0xff]
      %v249 = vld [vmem:[%s219 + $0xc8] sm:$0xff]
      %v250 = vld [vmem:[%s219 + $0xd0] sm:$0xff]
      %v251 = vld [vmem:[%s219 + $0xd8] sm:$0xff]
      %v252 = vld [vmem:[%s219 + $0xe0] sm:$0xff]
      %v253 = vld [vmem:[%s219 + $0xe8] sm:$0xff]
      %v254 = vld [vmem:[%s219 + $0xf0] sm:$0xff]
      %v255 = vld [vmem:[%s219 + $0xf8] sm:$0xff]
      %v256 = vld [vmem:[%s219 + $0x100] sm:$0xff]
      %v257 = vld [vmem:[%s219 + $0x108] sm:$0xff]
      %v258 = vld [vmem:[%s219 + $0x110] sm:$0xff]
      %v259 = vld [vmem:[%s219 + $0x118] sm:$0xff]
      %v260 = vld [vmem:[%s219 + $0x120] sm:$0xff]
      %v261 = vld [vmem:[%s219 + $0x128] sm:$0xff]
      %v262 = vld [vmem:[%s219 + $0x130] sm:$0xff]
      %v263 = vld [vmem:[%s219 + $0x138] sm:$0xff]
      %v264 = vld [vmem:[%s219 + $0x140] sm:$0xff]
      %v265 = vld [vmem:[%s219 + $0x148] sm:$0xff]
      %v266 = vld [vmem:[%s219 + $0x150] sm:$0xff]
      %v267 = vld [vmem:[%s219 + $0x158] sm:$0xff]
      %v268 = vld [vmem:[%s219 + $0x160] sm:$0xff]
      %v269 = vld [vmem:[%s219 + $0x168] sm:$0xff]
      %v270 = vld [vmem:[%s219 + $0x170] sm:$0xff]
      %v271 = vld [vmem:[%s219 + $0x178] sm:$0xff]
      %v272 = vld [vmem:[%s219 + $0x180] sm:$0xff]
      %v273 = vld [vmem:[%s219 + $0x188] sm:$0xff]
      %v274 = vld [vmem:[%s219 + $0x190] sm:$0xff]
      %v275 = vld [vmem:[%s219 + $0x198] sm:$0xff]
      %v276 = vld [vmem:[%s219 + $0x1a0] sm:$0xff]
      %v277 = vld [vmem:[%s219 + $0x1a8] sm:$0xff]
      %v278 = vld [vmem:[%s219 + $0x1b0] sm:$0xff]
      %v279 = vld [vmem:[%s219 + $0x1b8] sm:$0xff]
      %v280 = vld [vmem:[%s219 + $0x1c0] sm:$0xff]
      %v281 = vld [vmem:[%s219 + $0x1c8] sm:$0xff]
      %v282 = vpack.c.bf16 %v227, %v226
      %v283 = vpack.c.bf16 %v229, %v228
      %v284 = vpack.c.bf16 %v231, %v230
      %v285 = vpack.c.bf16 %v233, %v232
      %v286 = vpack.c.bf16 %v235, %v234
      %v287 = vpack.c.bf16 %v237, %v236
      %v288 = vpack.c.bf16 %v239, %v238
      %v289 = vpack.c.bf16 %v241, %v240
      %v290 = vpack.c.bf16 %v243, %v242
      %v291 = vpack.c.bf16 %v245, %v244
      %v292 = vpack.c.bf16 %v247, %v246
      %v293 = vpack.c.bf16 %v249, %v248
      %v294 = vpack.c.bf16 %v251, %v250
      %v295 = vpack.c.bf16 %v253, %v252
      %v296 = vpack.c.bf16 %v255, %v254
      %v297 = vpack.c.bf16 %v257, %v256
      %v298 = vpack.c.bf16 %v259, %v258
      %v299 = vpack.c.bf16 %v261, %v260
      %v300 = vpack.c.bf16 %v263, %v262
      %v301 = vpack.c.bf16 %v265, %v264
      %v302 = vpack.c.bf16 %v267, %v266
      %v303 = vpack.c.bf16 %v269, %v268
      %v304 = vpack.c.bf16 %v271, %v270
      %v305 = vpack.c.bf16 %v273, %v272
      %v306 = vpack.c.bf16 %v275, %v274
      %v307 = vpack.c.bf16 %v277, %v276
      %v308 = vpack.c.bf16 %v279, %v278
      %v309 = vpack.c.bf16 %v281, %v280
      %v310 = vlaneseq
      %v311 = vshrl.u32 %v310, 7
      %v312 = vadd.s32 %v311, 8
      %v313 = vadd.s32 %v311, 16
      %vm314 = vcmp.ge.s32.totalorder %v311, 1
      %vm315 = vcmp.ge.s32.totalorder %v312, 1
      %vm316 = vcmp.ge.s32.totalorder %v313, 1
      %vm317 = vcmp.lt.s32.totalorder %v311, 17
      %vm318 = vcmp.lt.s32.totalorder %v312, 17
      %vm319 = vcmp.lt.s32.totalorder %v313, 17
      %vm320 = vmand %vm314, %vm317
      %vm321 = vmand %vm315, %vm318
      %vm322 = vmand %vm316, %vm319
      %vm323 = vsmask.f32 7424
      %v325 = vshrl.u32 %v282, 16
      %v327 = vshll.u32 %v282, 16
      %v329 = vrot.slane %v327, 1
      %v330 = vor.u32 %v325, %v329
      %v332 = vshll.u32 %v283, 16
      %v334 = vrot.slane %v332, 1
      %v335 = vsel %vm323, %v330, %v334
      %v336 = vshrl.u32 %v283, 16
      %v338 = vor.u32 %v336, %v334
      %v340 = vshll.u32 %v284, 16
      %v342 = vrot.slane %v340, 1
      %v343 = vsel %vm323, %v338, %v342
      %v344 = vshrl.u32 %v284, 16
      %v346 = vor.u32 %v344, %v342
      %v348 = vshll.u32 %v285, 16
      %v350 = vrot.slane %v348, 1
      %v351 = vsel %vm323, %v346, %v350
      %v352 = vshrl.u32 %v285, 16
      %v354 = vor.u32 %v352, %v350
      %v356 = vshll.u32 %v286, 16
      %v358 = vrot.slane %v356, 1
      %v359 = vsel %vm323, %v354, %v358
      %v360 = vshrl.u32 %v286, 16
      %v362 = vor.u32 %v360, %v358
      %v364 = vshll.u32 %v287, 16
      %v366 = vrot.slane %v364, 1
      %v367 = vsel %vm323, %v362, %v366
      %v368 = vshrl.u32 %v287, 16
      %v370 = vor.u32 %v368, %v366
      %v372 = vshll.u32 %v288, 16
      %v374 = vrot.slane %v372, 1
      %v375 = vsel %vm323, %v370, %v374
      %v376 = vshrl.u32 %v288, 16
      %v378 = vor.u32 %v376, %v374
      %v380 = vshll.u32 %v289, 16
      %v382 = vrot.slane %v380, 1
      %v383 = vsel %vm323, %v378, %v382
      %v384 = vshrl.u32 %v289, 16
      %v386 = vor.u32 %v384, %v382
      %v388 = vshll.u32 %v290, 16
      %v390 = vrot.slane %v388, 1
      %v391 = vsel %vm323, %v386, %v390
      %v392 = vshrl.u32 %v290, 16
      %v394 = vor.u32 %v392, %v390
      %v396 = vshll.u32 %v291, 16
      %v398 = vrot.slane %v396, 1
      %v399 = vsel %vm323, %v394, %v398
      %v400 = vshrl.u32 %v291, 16
      %v402 = vor.u32 %v400, %v398
      %v404 = vshll.u32 %v292, 16
      %v406 = vrot.slane %v404, 1
      %v407 = vsel %vm323, %v402, %v406
      %v408 = vshrl.u32 %v292, 16
      %v410 = vor.u32 %v408, %v406
      %v412 = vshll.u32 %v293, 16
      %v414 = vrot.slane %v412, 1
      %v415 = vsel %vm323, %v410, %v414
      %v416 = vshrl.u32 %v293, 16
      %v418 = vor.u32 %v416, %v414
      %v420 = vshll.u32 %v294, 16
      %v422 = vrot.slane %v420, 1
      %v423 = vsel %vm323, %v418, %v422
      %v424 = vshrl.u32 %v294, 16
      %v426 = vor.u32 %v424, %v422
      %v428 = vshll.u32 %v295, 16
      %v430 = vrot.slane %v428, 1
      %v431 = vsel %vm323, %v426, %v430
      %v432 = vshrl.u32 %v295, 16
      %v434 = vor.u32 %v432, %v430
      %v436 = vshll.u32 %v296, 16
      %v438 = vrot.slane %v436, 1
      %v439 = vsel %vm323, %v434, %v438
      %v440 = vshrl.u32 %v296, 16
      %v442 = vor.u32 %v440, %v438
      %v444 = vshll.u32 %v297, 16
      %v446 = vrot.slane %v444, 1
      %v447 = vsel %vm323, %v442, %v446
      %v448 = vshrl.u32 %v297, 16
      %v450 = vor.u32 %v448, %v446
      %v452 = vshll.u32 %v298, 16
      %v454 = vrot.slane %v452, 1
      %v455 = vsel %vm323, %v450, %v454
      %v456 = vshrl.u32 %v298, 16
      %v458 = vor.u32 %v456, %v454
      %v460 = vshll.u32 %v299, 16
      %v462 = vrot.slane %v460, 1
      %v463 = vsel %vm323, %v458, %v462
      %v464 = vshrl.u32 %v299, 16
      %v466 = vor.u32 %v464, %v462
      %v468 = vshll.u32 %v300, 16
      %v470 = vrot.slane %v468, 1
      %v471 = vsel %vm323, %v466, %v470
      %v472 = vshrl.u32 %v300, 16
      %v474 = vor.u32 %v472, %v470
      %v476 = vshll.u32 %v301, 16
      %v478 = vrot.slane %v476, 1
      %v479 = vsel %vm323, %v474, %v478
      %v480 = vshrl.u32 %v301, 16
      %v482 = vor.u32 %v480, %v478
      %v484 = vshll.u32 %v302, 16
      %v486 = vrot.slane %v484, 1
      %v487 = vsel %vm323, %v482, %v486
      %v488 = vshrl.u32 %v302, 16
      %v490 = vor.u32 %v488, %v486
      %v492 = vshll.u32 %v303, 16
      %v494 = vrot.slane %v492, 1
      %v495 = vsel %vm323, %v490, %v494
      %v496 = vshrl.u32 %v303, 16
      %v498 = vor.u32 %v496, %v494
      %v500 = vshll.u32 %v304, 16
      %v502 = vrot.slane %v500, 1
      %v503 = vsel %vm323, %v498, %v502
      %v504 = vshrl.u32 %v304, 16
      %v506 = vor.u32 %v504, %v502
      %v508 = vshll.u32 %v305, 16
      %v510 = vrot.slane %v508, 1
      %v511 = vsel %vm323, %v506, %v510
      %v512 = vshrl.u32 %v305, 16
      %v514 = vor.u32 %v512, %v510
      %v516 = vshll.u32 %v306, 16
      %v518 = vrot.slane %v516, 1
      %v519 = vsel %vm323, %v514, %v518
      %v520 = vshrl.u32 %v306, 16
      %v522 = vor.u32 %v520, %v518
      %vm548 = vcmask 1046528
      %v549 = vrot.slane %v282, 1
      %v550 = vrot.slane %v283, 1
      %v551 = vsel %vm548, %v549, %v550
      %v552 = vrot.slane %v284, 1
      %v553 = vsel %vm548, %v550, %v552
      %v554 = vrot.slane %v285, 1
      %v555 = vsel %vm548, %v552, %v554
      %v556 = vrot.slane %v286, 1
      %v557 = vsel %vm548, %v554, %v556
      %v558 = vrot.slane %v287, 1
      %v559 = vsel %vm548, %v556, %v558
      %v560 = vrot.slane %v288, 1
      %v561 = vsel %vm548, %v558, %v560
      %v562 = vrot.slane %v289, 1
      %v563 = vsel %vm548, %v560, %v562
      %v564 = vrot.slane %v290, 1
      %v565 = vsel %vm548, %v562, %v564
      %v566 = vrot.slane %v291, 1
      %v567 = vsel %vm548, %v564, %v566
      %v568 = vrot.slane %v292, 1
      %v569 = vsel %vm548, %v566, %v568
      %v570 = vrot.slane %v293, 1
      %v571 = vsel %vm548, %v568, %v570
      %v572 = vrot.slane %v294, 1
      %v573 = vsel %vm548, %v570, %v572
      %v574 = vrot.slane %v295, 1
      %v575 = vsel %vm548, %v572, %v574
      %v576 = vrot.slane %v296, 1
      %v577 = vsel %vm548, %v574, %v576
      %v578 = vrot.slane %v297, 1
      %v579 = vsel %vm548, %v576, %v578
      %v580 = vrot.slane %v298, 1
      %v581 = vsel %vm548, %v578, %v580
      %v582 = vrot.slane %v299, 1
      %v583 = vsel %vm548, %v580, %v582
      %v584 = vrot.slane %v300, 1
      %v585 = vsel %vm548, %v582, %v584
      %v586 = vrot.slane %v301, 1
      %v587 = vsel %vm548, %v584, %v586
      %v588 = vrot.slane %v302, 1
      %v589 = vsel %vm548, %v586, %v588
      %v590 = vrot.slane %v303, 1
      %v591 = vsel %vm548, %v588, %v590
      %v592 = vrot.slane %v304, 1
      %v593 = vsel %vm548, %v590, %v592
      %v594 = vrot.slane %v305, 1
      %v595 = vsel %vm548, %v592, %v594
      %v596 = vrot.slane %v306, 1
      %v597 = vsel %vm548, %v594, %v596
      %vm599 = vcmask 1043456
      %v600 = vrot.slane %v283, 4
      %v601 = vrot.slane %v284, 4
      %v602 = vsel %vm599, %v600, %v601
      %v603 = vrot.slane %v285, 4
      %v604 = vsel %vm599, %v601, %v603
      %v605 = vrot.slane %v286, 4
      %v606 = vsel %vm599, %v603, %v605
      %v607 = vrot.slane %v287, 4
      %v608 = vsel %vm599, %v605, %v607
      %v609 = vrot.slane %v288, 4
      %v610 = vsel %vm599, %v607, %v609
      %v611 = vrot.slane %v289, 4
      %v612 = vsel %vm599, %v609, %v611
      %v613 = vrot.slane %v290, 4
      %v614 = vsel %vm599, %v611, %v613
      %v615 = vrot.slane %v291, 4
      %v616 = vsel %vm599, %v613, %v615
      %v617 = vrot.slane %v292, 4
      %v618 = vsel %vm599, %v615, %v617
      %v619 = vrot.slane %v293, 4
      %v620 = vsel %vm599, %v617, %v619
      %v621 = vrot.slane %v294, 4
      %v622 = vsel %vm599, %v619, %v621
      %v623 = vrot.slane %v295, 4
      %v624 = vsel %vm599, %v621, %v623
      %v625 = vrot.slane %v296, 4
      %v626 = vsel %vm599, %v623, %v625
      %v627 = vrot.slane %v297, 4
      %v628 = vsel %vm599, %v625, %v627
      %v629 = vrot.slane %v298, 4
      %v630 = vsel %vm599, %v627, %v629
      %v631 = vrot.slane %v299, 4
      %v632 = vsel %vm599, %v629, %v631
      %v633 = vrot.slane %v300, 4
      %v634 = vsel %vm599, %v631, %v633
      %v635 = vrot.slane %v301, 4
      %v636 = vsel %vm599, %v633, %v635
      %v637 = vrot.slane %v302, 4
      %v638 = vsel %vm599, %v635, %v637
      %v639 = vrot.slane %v303, 4
      %v640 = vsel %vm599, %v637, %v639
      %v641 = vrot.slane %v304, 4
      %v642 = vsel %vm599, %v639, %v641
      %v643 = vrot.slane %v305, 4
      %v644 = vsel %vm599, %v641, %v643
      %v645 = vrot.slane %v306, 4
      %v646 = vsel %vm599, %v643, %v645
      %v647 = vrot.slane %v307, 4
      %v648 = vsel %vm599, %v645, %v647
      %vm649 = vsmask.f32 3328
      %v650 = vrot.slane %v344, 4
      %v651 = vrot.slane %v340, 5
      %v652 = vor.u32 %v650, %v651
      %v653 = vrot.slane %v352, 4
      %v654 = vrot.slane %v348, 5
      %v655 = vor.u32 %v653, %v654
      %v656 = vsel %vm649, %v652, %v655
      %v657 = vrot.slane %v360, 4
      %v658 = vrot.slane %v356, 5
      %v659 = vor.u32 %v657, %v658
      %v660 = vsel %vm649, %v655, %v659
      %v661 = vrot.slane %v368, 4
      %v662 = vrot.slane %v364, 5
      %v663 = vor.u32 %v661, %v662
      %v664 = vsel %vm649, %v659, %v663
      %v665 = vrot.slane %v376, 4
      %v666 = vrot.slane %v372, 5
      %v667 = vor.u32 %v665, %v666
      %v668 = vsel %vm649, %v663, %v667
      %v669 = vrot.slane %v384, 4
      %v670 = vrot.slane %v380, 5
      %v671 = vor.u32 %v669, %v670
      %v672 = vsel %vm649, %v667, %v671
      %v673 = vrot.slane %v392, 4
      %v674 = vrot.slane %v388, 5
      %v675 = vor.u32 %v673, %v674
      %v676 = vsel %vm649, %v671, %v675
      %v677 = vrot.slane %v400, 4
      %v678 = vrot.slane %v396, 5
      %v679 = vor.u32 %v677, %v678
      %v680 = vsel %vm649, %v675, %v679
      %v681 = vrot.slane %v408, 4
      %v682 = vrot.slane %v404, 5
      %v683 = vor.u32 %v681, %v682
      %v684 = vsel %vm649, %v679, %v683
      %v685 = vrot.slane %v416, 4
      %v686 = vrot.slane %v412, 5
      %v687 = vor.u32 %v685, %v686
      %v688 = vsel %vm649, %v683, %v687
      %v689 = vrot.slane %v424, 4
      %v690 = vrot.slane %v420, 5
      %v691 = vor.u32 %v689, %v690
      %v692 = vsel %vm649, %v687, %v691
      %v693 = vrot.slane %v432, 4
      %v694 = vrot.slane %v428, 5
      %v695 = vor.u32 %v693, %v694
      %v696 = vsel %vm649, %v691, %v695
      %v697 = vrot.slane %v440, 4
      %v698 = vrot.slane %v436, 5
      %v699 = vor.u32 %v697, %v698
      %v700 = vsel %vm649, %v695, %v699
      %v701 = vrot.slane %v448, 4
      %v702 = vrot.slane %v444, 5
      %v703 = vor.u32 %v701, %v702
      %v704 = vsel %vm649, %v699, %v703
      %v705 = vrot.slane %v456, 4
      %v706 = vrot.slane %v452, 5
      %v707 = vor.u32 %v705, %v706
      %v708 = vsel %vm649, %v703, %v707
      %v709 = vrot.slane %v464, 4
      %v710 = vrot.slane %v460, 5
      %v711 = vor.u32 %v709, %v710
      %v712 = vsel %vm649, %v707, %v711
      %v713 = vrot.slane %v472, 4
      %v714 = vrot.slane %v468, 5
      %v715 = vor.u32 %v713, %v714
      %v716 = vsel %vm649, %v711, %v715
      %v717 = vrot.slane %v480, 4
      %v718 = vrot.slane %v476, 5
      %v719 = vor.u32 %v717, %v718
      %v720 = vsel %vm649, %v715, %v719
      %v721 = vrot.slane %v488, 4
      %v722 = vrot.slane %v484, 5
      %v723 = vor.u32 %v721, %v722
      %v724 = vsel %vm649, %v719, %v723
      %v725 = vrot.slane %v496, 4
      %v726 = vrot.slane %v492, 5
      %v727 = vor.u32 %v725, %v726
      %v728 = vsel %vm649, %v723, %v727
      %v729 = vrot.slane %v504, 4
      %v730 = vrot.slane %v500, 5
      %v731 = vor.u32 %v729, %v730
      %v732 = vsel %vm649, %v727, %v731
      %v733 = vrot.slane %v512, 4
      %v734 = vrot.slane %v508, 5
      %v735 = vor.u32 %v733, %v734
      %v736 = vsel %vm649, %v731, %v735
      %v737 = vrot.slane %v520, 4
      %v738 = vrot.slane %v516, 5
      %v739 = vor.u32 %v737, %v738
      %v740 = vsel %vm649, %v735, %v739
      %v742 = vshrl.u32 %v307, 16
      %v744 = vrot.slane %v742, 4
      %v745 = vshll.u32 %v307, 16
      %v747 = vrot.slane %v745, 5
      %v748 = vor.u32 %v744, %v747
      %v749 = vsel %vm649, %v739, %v748
      %vm751 = vcmask 1042432
      %v752 = vrot.slane %v284, 5
      %v753 = vrot.slane %v285, 5
      %v754 = vsel %vm751, %v752, %v753
      %v755 = vrot.slane %v286, 5
      %v756 = vsel %vm751, %v753, %v755
      %v757 = vrot.slane %v287, 5
      %v758 = vsel %vm751, %v755, %v757
      %v759 = vrot.slane %v288, 5
      %v760 = vsel %vm751, %v757, %v759
      %v761 = vrot.slane %v289, 5
      %v762 = vsel %vm751, %v759, %v761
      %v763 = vrot.slane %v290, 5
      %v764 = vsel %vm751, %v761, %v763
      %v765 = vrot.slane %v291, 5
      %v766 = vsel %vm751, %v763, %v765
      %v767 = vrot.slane %v292, 5
      %v768 = vsel %vm751, %v765, %v767
      %v769 = vrot.slane %v293, 5
      %v770 = vsel %vm751, %v767, %v769
      %v771 = vrot.slane %v294, 5
      %v772 = vsel %vm751, %v769, %v771
      %v773 = vrot.slane %v295, 5
      %v774 = vsel %vm751, %v771, %v773
      %v775 = vrot.slane %v296, 5
      %v776 = vsel %vm751, %v773, %v775
      %v777 = vrot.slane %v297, 5
      %v778 = vsel %vm751, %v775, %v777
      %v779 = vrot.slane %v298, 5
      %v780 = vsel %vm751, %v777, %v779
      %v781 = vrot.slane %v299, 5
      %v782 = vsel %vm751, %v779, %v781
      %v783 = vrot.slane %v300, 5
      %v784 = vsel %vm751, %v781, %v783
      %v785 = vrot.slane %v301, 5
      %v786 = vsel %vm751, %v783, %v785
      %v787 = vrot.slane %v302, 5
      %v788 = vsel %vm751, %v785, %v787
      %v789 = vrot.slane %v303, 5
      %v790 = vsel %vm751, %v787, %v789
      %v791 = vrot.slane %v304, 5
      %v792 = vsel %vm751, %v789, %v791
      %v793 = vrot.slane %v305, 5
      %v794 = vsel %vm751, %v791, %v793
      %v795 = vrot.slane %v306, 5
      %v796 = vsel %vm751, %v793, %v795
      %v797 = vrot.slane %v307, 5
      %v798 = vsel %vm751, %v795, %v797
      %v799 = vrot.slane %v308, 5
      %v800 = vsel %vm751, %v797, %v799
      %v801 = vrot.slane %v745, 1
      %v802 = vsel %vm323, %v522, %v801
      %v803 = vor.u32 %v742, %v801
      %v805 = vshll.u32 %v308, 16
      %v807 = vrot.slane %v805, 1
      %v808 = vsel %vm323, %v803, %v807
      %v809 = vshrl.u32 %v308, 16
      %v811 = vor.u32 %v809, %v807
      %v813 = vshll.u32 %v309, 16
      %v815 = vrot.slane %v813, 1
      %v816 = vsel %vm323, %v811, %v815
      %v817 = vshrl.u32 %v309, 16
      %v819 = vor.u32 %v817, %v815
      %v821 = vrot.slane %v307, 1
      %v822 = vsel %vm548, %v596, %v821
      %v823 = vrot.slane %v308, 1
      %v824 = vsel %vm548, %v821, %v823
      %v825 = vrot.slane %v309, 1
      %v826 = vsel %vm548, %v823, %v825
      %v827 = vld [vmem:[%s1] sm:$0xf]
      %v828 = vld [vmem:[%s1 + $0x4] sm:$0xf]
      %v829 = vld [vmem:[%s1 + $0x8] sm:$0xf]
      %v830 = vld [vmem:[%s1 + $0xc] sm:$0xf]
      %v831 = vld [vmem:[%s1 + $0x10] sm:$0xf]
      %v832 = vld [vmem:[%s1 + $0x14] sm:$0xf]
      %v833 = vld [vmem:[%s1 + $0x18] sm:$0xf]
      %v834 = vld [vmem:[%s1 + $0x1c] sm:$0xf]
      %v835 = vld [vmem:[%s1 + $0x20] sm:$0xf]
      %v836 = vld [vmem:[%s1 + $0x24] sm:$0xf]
      %v837 = vld [vmem:[%s1 + $0x28] sm:$0xf]
      %v838 = vld [vmem:[%s1 + $0x2c] sm:$0xf]
      %v839 = vld [vmem:[%s1 + $0x30] sm:$0xf]
      %v840 = vld [vmem:[%s1 + $0x34] sm:$0xf]
      %v841 = vld [vmem:[%s1 + $0x38] sm:$0xf]
      %v842 = vld [vmem:[%s1 + $0x3c] sm:$0xf]
      %v843 = vld [vmem:[%s1 + $0x40] sm:$0xf]
      %v844 = vld [vmem:[%s1 + $0x44] sm:$0xf]
      %v845 = vld [vmem:[%s1 + $0x48] sm:$0xf]
      %v846 = vld [vmem:[%s1 + $0x4c] sm:$0xf]
      %v847 = vld [vmem:[%s1 + $0x50] sm:$0xf]
      %v848 = vld [vmem:[%s1 + $0x54] sm:$0xf]
      %v849 = vld [vmem:[%s1 + $0x58] sm:$0xf]
      %v850 = vld [vmem:[%s1 + $0x5c] sm:$0xf]
      %v851 = vld [vmem:[%s1 + $0x60] sm:$0xf]
      %v852 = vld [vmem:[%s1 + $0x64] sm:$0xf]
      %v853 = vld [vmem:[%s1 + $0x68] sm:$0xf]
      %v854 = vld [vmem:[%s1 + $0x6c] sm:$0xf]
      %v855 = vld [vmem:[%s1 + $0x70] sm:$0xf]
      %v856 = vld [vmem:[%s1 + $0x74] sm:$0xf]
      %v857 = vld [vmem:[%s1 + $0x78] sm:$0xf]
      %v858 = vld [vmem:[%s1 + $0x7c] sm:$0xf]
      %v859 = vld [vmem:[%s1 + $0x80] sm:$0xf]
      %v860 = vld [vmem:[%s1 + $0x84] sm:$0xf]
      %v861 = vld [vmem:[%s1 + $0x88] sm:$0xf]
      %v862 = vld [vmem:[%s1 + $0x8c] sm:$0xf]
      %v863 = vld [vmem:[%s1 + $0x90] sm:$0xf]
      %v864 = vld [vmem:[%s1 + $0x94] sm:$0xf]
      %v865 = vld [vmem:[%s1 + $0x98] sm:$0xf]
      %v866 = vld [vmem:[%s1 + $0x9c] sm:$0xf]
      %v867 = vld [vmem:[%s1 + $0xa0] sm:$0xf]
      %v868 = vld [vmem:[%s1 + $0xa4] sm:$0xf]
      %v869 = vld [vmem:[%s1 + $0xa8] sm:$0xf]
      %v870 = vld [vmem:[%s1 + $0xac] sm:$0xf]
      %v871 = vld [vmem:[%s1 + $0xb0] sm:$0xf]
      %v872 = vld [vmem:[%s1 + $0xb4] sm:$0xf]
      %v873 = vld [vmem:[%s1 + $0xb8] sm:$0xf]
      %v874 = vld [vmem:[%s1 + $0xbc] sm:$0xf]
      %v875 = vld [vmem:[%s1 + $0xc0] sm:$0xf]
      %v876 = vld [vmem:[%s1 + $0xc4] sm:$0xf]
      %v877 = vld [vmem:[%s1 + $0xc8] sm:$0xf]
      %v878 = vld [vmem:[%s1 + $0xcc] sm:$0xf]
      %v879 = vld [vmem:[%s1 + $0xd0] sm:$0xf]
      %v880 = vld [vmem:[%s1 + $0xd4] sm:$0xf]
      %v881 = vld [vmem:[%s1 + $0xd8] sm:$0xf]
      %v882 = vld [vmem:[%s1 + $0xdc] sm:$0xf]
      %v883 = vld [vmem:[%s1 + $0xe0] sm:$0xf]
      %v884 = vld [vmem:[%s1 + $0xe4] sm:$0xf]
      %v885 = vld [vmem:[%s1 + $0xe8] sm:$0xf]
      %v886 = vld [vmem:[%s1 + $0xec] sm:$0xf]
      %v887 = vld [vmem:[%s1 + $0xf0] sm:$0xf]
      %v888 = vld [vmem:[%s1 + $0xf4] sm:$0xf]
      %v889 = vld [vmem:[%s1 + $0xf8] sm:$0xf]
      %v890 = vld [vmem:[%s1 + $0xfc] sm:$0xf]
      %v891 = vld [vmem:[%s1 + $0x100] sm:$0xf]
      %v892 = vld [vmem:[%s1 + $0x104] sm:$0xf]
      %v893 = vld [vmem:[%s1 + $0x108] sm:$0xf]
      %v894 = vld [vmem:[%s1 + $0x10c] sm:$0xf]
      %v895 = vld [vmem:[%s1 + $0x110] sm:$0xf]
      %v896 = vld [vmem:[%s1 + $0x114] sm:$0xf]
      %v897 = vld [vmem:[%s1 + $0x118] sm:$0xf]
      %v898 = vld [vmem:[%s1 + $0x11c] sm:$0xf]
      %v899 = vld [vmem:[%s1 + $0x120] sm:$0xf]
      %v900 = vld [vmem:[%s1 + $0x124] sm:$0xf]
      %v901 = vld [vmem:[%s1 + $0x128] sm:$0xf]
      %v902 = vld [vmem:[%s1 + $0x12c] sm:$0xf]
      %v903 = vld [vmem:[%s1 + $0x130] sm:$0xf]
      %v904 = vld [vmem:[%s1 + $0x134] sm:$0xf]
      %v905 = vld [vmem:[%s1 + $0x138] sm:$0xf]
      %v906 = vld [vmem:[%s1 + $0x13c] sm:$0xf]
      %v907 = vld [vmem:[%s1 + $0x140] sm:$0xf]
      %v908 = vld [vmem:[%s1 + $0x144] sm:$0xf]
      %v909 = vld [vmem:[%s1 + $0x148] sm:$0xf]
      %v910 = vld [vmem:[%s1 + $0x14c] sm:$0xf]
      %v911 = vld [vmem:[%s1 + $0x150] sm:$0xf]
      %v912 = vld [vmem:[%s1 + $0x154] sm:$0xf]
      %v913 = vld [vmem:[%s1 + $0x158] sm:$0xf]
      %v914 = vld [vmem:[%s1 + $0x15c] sm:$0xf]
      %v915 = vld [vmem:[%s1 + $0x160] sm:$0xf]
      %v916 = vld [vmem:[%s1 + $0x164] sm:$0xf]
      %v917 = vld [vmem:[%s1 + $0x168] sm:$0xf]
      %v918 = vld [vmem:[%s1 + $0x16c] sm:$0xf]
      %v919 = vld [vmem:[%s1 + $0x170] sm:$0xf]
      %v920 = vld [vmem:[%s1 + $0x174] sm:$0xf]
      %v921 = vld [vmem:[%s1 + $0x178] sm:$0xf]
      %v922 = vld [vmem:[%s1 + $0x17c] sm:$0xf]
      %v923 = vld [vmem:[%s1 + $0x180] sm:$0xf]
      %v924 = vld [vmem:[%s1 + $0x184] sm:$0xf]
      %v925 = vld [vmem:[%s1 + $0x188] sm:$0xf]
      %v926 = vld [vmem:[%s1 + $0x18c] sm:$0xf]
      %v927 = vld [vmem:[%s1 + $0x190] sm:$0xf]
      %v928 = vld [vmem:[%s1 + $0x194] sm:$0xf]
      %v929 = vld [vmem:[%s1 + $0x198] sm:$0xf]
      %v930 = vld [vmem:[%s1 + $0x19c] sm:$0xf]
      %v931 = vld [vmem:[%s1 + $0x1a0] sm:$0xf]
      %v932 = vld [vmem:[%s1 + $0x1a4] sm:$0xf]
      %v933 = vld [vmem:[%s1 + $0x1a8] sm:$0xf]
      %v934 = vld [vmem:[%s1 + $0x1ac] sm:$0xf]
      %v935 = vld [vmem:[%s1 + $0x1b0] sm:$0xf]
      %v936 = vld [vmem:[%s1 + $0x1b4] sm:$0xf]
      %v937 = vld [vmem:[%s1 + $0x1b8] sm:$0xf]
      %v938 = vld [vmem:[%s1 + $0x1bc] sm:$0xf]
      %v939 = vld [vmem:[%s1 + $0x1c0] sm:$0xf]
      %v940 = vld [vmem:[%s1 + $0x1c4] sm:$0xf]
      %v941 = vld [vmem:[%s1 + $0x1c8] sm:$0xf]
      %v942 = vld [vmem:[%s1 + $0x1cc] sm:$0xf]
      %v943 = vld [vmem:[%s1 + $0x1d0] sm:$0xf]
      %v944 = vld [vmem:[%s1 + $0x1d4] sm:$0xf]
      %v945 = vld [vmem:[%s1 + $0x1d8] sm:$0xf]
      %v946 = vld [vmem:[%s1 + $0x1dc] sm:$0xf]
      %v947 = vld [vmem:[%s1 + $0x1e0] sm:$0xf]
      %v948 = vld [vmem:[%s1 + $0x1e4] sm:$0xf]
      %v949 = vld [vmem:[%s1 + $0x1e8] sm:$0xf]
      %v950 = vld [vmem:[%s1 + $0x1ec] sm:$0xf]
      %v951 = vld [vmem:[%s1 + $0x1f0] sm:$0xf]
      %v952 = vld [vmem:[%s1 + $0x1f4] sm:$0xf]
      %v953 = vld [vmem:[%s1 + $0x1f8] sm:$0xf]
      %v954 = vld [vmem:[%s1 + $0x1fc] sm:$0xf]
      %v955 = vld [vmem:[%s1 + $0x200] sm:$0xf]
      %v956 = vld [vmem:[%s1 + $0x204] sm:$0xf]
      %v957 = vld [vmem:[%s1 + $0x208] sm:$0xf]
      %v958 = vld [vmem:[%s1 + $0x20c] sm:$0xf]
      %v959 = vld [vmem:[%s1 + $0x210] sm:$0xf]
      %v960 = vld [vmem:[%s1 + $0x214] sm:$0xf]
      %v961 = vld [vmem:[%s1 + $0x218] sm:$0xf]
      %v962 = vld [vmem:[%s1 + $0x21c] sm:$0xf]
      %v963 = vld [vmem:[%s1 + $0x220] sm:$0xf]
      %v964 = vld [vmem:[%s1 + $0x224] sm:$0xf]
      %v965 = vld [vmem:[%s1 + $0x228] sm:$0xf]
      %v966 = vld [vmem:[%s1 + $0x22c] sm:$0xf]
      %v967 = vld [vmem:[%s1 + $0x230] sm:$0xf]
      %v968 = vld [vmem:[%s1 + $0x234] sm:$0xf]
      %v969 = vld [vmem:[%s1 + $0x238] sm:$0xf]
      %v970 = vld [vmem:[%s1 + $0x23c] sm:$0xf]
      %v971 = vld [vmem:[%s2] sm:$0x1]
      %v973 = vlaneseq
      %v974 = vshrl.u32 %v973, 7
      %v975 = vsub.s32 0, %v974
      %v976 = vrot.slane %v971, %v975
      %vm978 = vsmask.f32 4352
      %v979 = vrot.slane %v325, 3
      %v980 = vrot.slane %v327, 4
      %v981 = vor.u32 %v979, %v980
      %v982 = vrot.slane %v336, 3
      %v983 = vrot.slane %v332, 4
      %v984 = vor.u32 %v982, %v983
      %v985 = vsel %vm978, %v981, %v984
      %v987 = vshrl.u32 %v335, 16
      %v989 = vrot.slane %v987, 3
      %v990 = vshll.u32 %v335, 16
      %v992 = vrot.slane %v990, 4
      %v993 = vor.u32 %v989, %v992
      %v995 = vshrl.u32 %v343, 16
      %v997 = vrot.slane %v995, 3
      %v998 = vshll.u32 %v343, 16
      %v1000 = vrot.slane %v998, 4
      %v1001 = vor.u32 %v997, %v1000
      %v1002 = vsel %vm978, %v993, %v1001
      %v1004 = vshrl.u32 %v551, 16
      %v1006 = vrot.slane %v1004, 3
      %v1007 = vshll.u32 %v551, 16
      %v1009 = vrot.slane %v1007, 4
      %v1010 = vor.u32 %v1006, %v1009
      %v1012 = vshrl.u32 %v553, 16
      %v1014 = vrot.slane %v1012, 3
      %v1015 = vshll.u32 %v553, 16
      %v1017 = vrot.slane %v1015, 4
      %v1018 = vor.u32 %v1014, %v1017
      %v1019 = vsel %vm978, %v1010, %v1018
      %v1021 = vshrl.u32 %v602, 16
      %v1023 = vrot.slane %v1021, 3
      %v1024 = vshll.u32 %v602, 16
      %v1026 = vrot.slane %v1024, 4
      %v1027 = vor.u32 %v1023, %v1026
      %v1029 = vshrl.u32 %v604, 16
      %v1031 = vrot.slane %v1029, 3
      %v1032 = vshll.u32 %v604, 16
      %v1034 = vrot.slane %v1032, 4
      %v1035 = vor.u32 %v1031, %v1034
      %v1036 = vsel %vm978, %v1027, %v1035
      %v1038 = vshrl.u32 %v652, 16
      %v1040 = vrot.slane %v1038, 3
      %v1041 = vshll.u32 %v652, 16
      %v1043 = vrot.slane %v1041, 4
      %v1044 = vor.u32 %v1040, %v1043
      %v1046 = vshrl.u32 %v656, 16
      %v1048 = vrot.slane %v1046, 3
      %v1049 = vshll.u32 %v656, 16
      %v1051 = vrot.slane %v1049, 4
      %v1052 = vor.u32 %v1048, %v1051
      %v1053 = vsel %vm978, %v1044, %v1052
      %v1055 = vshrl.u32 %v752, 16
      %v1057 = vrot.slane %v1055, 3
      %v1058 = vshll.u32 %v752, 16
      %v1060 = vrot.slane %v1058, 4
      %v1061 = vor.u32 %v1057, %v1060
      %v1063 = vshrl.u32 %v754, 16
      %v1065 = vrot.slane %v1063, 3
      %v1066 = vshll.u32 %v754, 16
      %v1068 = vrot.slane %v1066, 4
      %v1069 = vor.u32 %v1065, %v1068
      %v1070 = vsel %vm978, %v1061, %v1069
      %v1071 = vrot.slane %v352, 3
      %v1072 = vrot.slane %v348, 4
      %v1073 = vor.u32 %v1071, %v1072
      %v1074 = vrot.slane %v360, 3
      %v1075 = vrot.slane %v356, 4
      %v1076 = vor.u32 %v1074, %v1075
      %v1077 = vsel %vm978, %v1073, %v1076
      %v1079 = vshrl.u32 %v359, 16
      %v1081 = vrot.slane %v1079, 3
      %v1082 = vshll.u32 %v359, 16
      %v1084 = vrot.slane %v1082, 4
      %v1085 = vor.u32 %v1081, %v1084
      %v1087 = vshrl.u32 %v367, 16
      %v1089 = vrot.slane %v1087, 3
      %v1090 = vshll.u32 %v367, 16
      %v1092 = vrot.slane %v1090, 4
      %v1093 = vor.u32 %v1089, %v1092
      %v1094 = vsel %vm978, %v1085, %v1093
      %v1096 = vshrl.u32 %v557, 16
      %v1098 = vrot.slane %v1096, 3
      %v1099 = vshll.u32 %v557, 16
      %v1101 = vrot.slane %v1099, 4
      %v1102 = vor.u32 %v1098, %v1101
      %v1104 = vshrl.u32 %v559, 16
      %v1106 = vrot.slane %v1104, 3
      %v1107 = vshll.u32 %v559, 16
      %v1109 = vrot.slane %v1107, 4
      %v1110 = vor.u32 %v1106, %v1109
      %v1111 = vsel %vm978, %v1102, %v1110
      %v1112 = vrot.slane %v344, 3
      %v1113 = vrot.slane %v340, 4
      %v1114 = vor.u32 %v1112, %v1113
      %v1115 = vsel %vm978, %v984, %v1114
      %v1117 = vshrl.u32 %v351, 16
      %v1119 = vrot.slane %v1117, 3
      %v1120 = vshll.u32 %v351, 16
      %v1122 = vrot.slane %v1120, 4
      %v1123 = vor.u32 %v1119, %v1122
      %v1124 = vsel %vm978, %v1001, %v1123
      %v1126 = vshrl.u32 %v555, 16
      %v1128 = vrot.slane %v1126, 3
      %v1129 = vshll.u32 %v555, 16
      %v1131 = vrot.slane %v1129, 4
      %v1132 = vor.u32 %v1128, %v1131
      %v1133 = vsel %vm978, %v1018, %v1132
      %v1135 = vshrl.u32 %v606, 16
      %v1137 = vrot.slane %v1135, 3
      %v1138 = vshll.u32 %v606, 16
      %v1140 = vrot.slane %v1138, 4
      %v1141 = vor.u32 %v1137, %v1140
      %v1142 = vsel %vm978, %v1035, %v1141
      %v1144 = vshrl.u32 %v660, 16
      %v1146 = vrot.slane %v1144, 3
      %v1147 = vshll.u32 %v660, 16
      %v1149 = vrot.slane %v1147, 4
      %v1150 = vor.u32 %v1146, %v1149
      %v1151 = vsel %vm978, %v1052, %v1150
      %v1153 = vshrl.u32 %v756, 16
      %v1155 = vrot.slane %v1153, 3
      %v1156 = vshll.u32 %v756, 16
      %v1158 = vrot.slane %v1156, 4
      %v1159 = vor.u32 %v1155, %v1158
      %v1160 = vsel %vm978, %v1069, %v1159
      %v1161 = vrot.slane %v368, 3
      %v1162 = vrot.slane %v364, 4
      %v1163 = vor.u32 %v1161, %v1162
      %v1164 = vsel %vm978, %v1076, %v1163
      %v1166 = vshrl.u32 %v375, 16
      %v1168 = vrot.slane %v1166, 3
      %v1169 = vshll.u32 %v375, 16
      %v1171 = vrot.slane %v1169, 4
      %v1172 = vor.u32 %v1168, %v1171
      %v1173 = vsel %vm978, %v1093, %v1172
      %v1175 = vshrl.u32 %v561, 16
      %v1177 = vrot.slane %v1175, 3
      %v1178 = vshll.u32 %v561, 16
      %v1180 = vrot.slane %v1178, 4
      %v1181 = vor.u32 %v1177, %v1180
      %v1182 = vsel %vm978, %v1110, %v1181
      %v1183 = vsel %vm978, %v1114, %v1073
      %v1184 = vsel %vm978, %v1123, %v1085
      %v1185 = vsel %vm978, %v1132, %v1102
      %v1187 = vshrl.u32 %v608, 16
      %v1189 = vrot.slane %v1187, 3
      %v1190 = vshll.u32 %v608, 16
      %v1192 = vrot.slane %v1190, 4
      %v1193 = vor.u32 %v1189, %v1192
      %v1194 = vsel %vm978, %v1141, %v1193
      %v1196 = vshrl.u32 %v664, 16
      %v1198 = vrot.slane %v1196, 3
      %v1199 = vshll.u32 %v664, 16
      %v1201 = vrot.slane %v1199, 4
      %v1202 = vor.u32 %v1198, %v1201
      %v1203 = vsel %vm978, %v1150, %v1202
      %v1205 = vshrl.u32 %v758, 16
      %v1207 = vrot.slane %v1205, 3
      %v1208 = vshll.u32 %v758, 16
      %v1210 = vrot.slane %v1208, 4
      %v1211 = vor.u32 %v1207, %v1210
      %v1212 = vsel %vm978, %v1159, %v1211
      %v1213 = vrot.slane %v376, 3
      %v1214 = vrot.slane %v372, 4
      %v1215 = vor.u32 %v1213, %v1214
      %v1216 = vsel %vm978, %v1163, %v1215
      %v1218 = vshrl.u32 %v383, 16
      %v1220 = vrot.slane %v1218, 3
      %v1221 = vshll.u32 %v383, 16
      %v1223 = vrot.slane %v1221, 4
      %v1224 = vor.u32 %v1220, %v1223
      %v1225 = vsel %vm978, %v1172, %v1224
      %v1227 = vshrl.u32 %v563, 16
      %v1229 = vrot.slane %v1227, 3
      %v1230 = vshll.u32 %v563, 16
      %v1232 = vrot.slane %v1230, 4
      %v1233 = vor.u32 %v1229, %v1232
      %v1234 = vsel %vm978, %v1181, %v1233
      %v1236 = vshrl.u32 %v610, 16
      %v1238 = vrot.slane %v1236, 3
      %v1239 = vshll.u32 %v610, 16
      %v1241 = vrot.slane %v1239, 4
      %v1242 = vor.u32 %v1238, %v1241
      %v1243 = vsel %vm978, %v1193, %v1242
      %v1245 = vshrl.u32 %v668, 16
      %v1247 = vrot.slane %v1245, 3
      %v1248 = vshll.u32 %v668, 16
      %v1250 = vrot.slane %v1248, 4
      %v1251 = vor.u32 %v1247, %v1250
      %v1252 = vsel %vm978, %v1202, %v1251
      %v1254 = vshrl.u32 %v760, 16
      %v1256 = vrot.slane %v1254, 3
      %v1257 = vshll.u32 %v760, 16
      %v1259 = vrot.slane %v1257, 4
      %v1260 = vor.u32 %v1256, %v1259
      %v1261 = vsel %vm978, %v1211, %v1260
      %v1262 = vrot.slane %v384, 3
      %v1263 = vrot.slane %v380, 4
      %v1264 = vor.u32 %v1262, %v1263
      %v1265 = vsel %vm978, %v1215, %v1264
      %v1267 = vshrl.u32 %v391, 16
      %v1269 = vrot.slane %v1267, 3
      %v1270 = vshll.u32 %v391, 16
      %v1272 = vrot.slane %v1270, 4
      %v1273 = vor.u32 %v1269, %v1272
      %v1274 = vsel %vm978, %v1224, %v1273
      %v1276 = vshrl.u32 %v565, 16
      %v1278 = vrot.slane %v1276, 3
      %v1279 = vshll.u32 %v565, 16
      %v1281 = vrot.slane %v1279, 4
      %v1282 = vor.u32 %v1278, %v1281
      %v1283 = vsel %vm978, %v1233, %v1282
      %v1285 = vshrl.u32 %v612, 16
      %v1287 = vrot.slane %v1285, 3
      %v1288 = vshll.u32 %v612, 16
      %v1290 = vrot.slane %v1288, 4
      %v1291 = vor.u32 %v1287, %v1290
      %v1292 = vsel %vm978, %v1242, %v1291
      %v1294 = vshrl.u32 %v672, 16
      %v1296 = vrot.slane %v1294, 3
      %v1297 = vshll.u32 %v672, 16
      %v1299 = vrot.slane %v1297, 4
      %v1300 = vor.u32 %v1296, %v1299
      %v1301 = vsel %vm978, %v1251, %v1300
      %v1303 = vshrl.u32 %v762, 16
      %v1305 = vrot.slane %v1303, 3
      %v1306 = vshll.u32 %v762, 16
      %v1308 = vrot.slane %v1306, 4
      %v1309 = vor.u32 %v1305, %v1308
      %v1310 = vsel %vm978, %v1260, %v1309
      %v1311 = vrot.slane %v392, 3
      %v1312 = vrot.slane %v388, 4
      %v1313 = vor.u32 %v1311, %v1312
      %v1314 = vsel %vm978, %v1264, %v1313
      %v1316 = vshrl.u32 %v399, 16
      %v1318 = vrot.slane %v1316, 3
      %v1319 = vshll.u32 %v399, 16
      %v1321 = vrot.slane %v1319, 4
      %v1322 = vor.u32 %v1318, %v1321
      %v1323 = vsel %vm978, %v1273, %v1322
      %v1325 = vshrl.u32 %v567, 16
      %v1327 = vrot.slane %v1325, 3
      %v1328 = vshll.u32 %v567, 16
      %v1330 = vrot.slane %v1328, 4
      %v1331 = vor.u32 %v1327, %v1330
      %v1332 = vsel %vm978, %v1282, %v1331
      %v1334 = vshrl.u32 %v614, 16
      %v1336 = vrot.slane %v1334, 3
      %v1337 = vshll.u32 %v614, 16
      %v1339 = vrot.slane %v1337, 4
      %v1340 = vor.u32 %v1336, %v1339
      %v1341 = vsel %vm978, %v1291, %v1340
      %v1343 = vshrl.u32 %v676, 16
      %v1345 = vrot.slane %v1343, 3
      %v1346 = vshll.u32 %v676, 16
      %v1348 = vrot.slane %v1346, 4
      %v1349 = vor.u32 %v1345, %v1348
      %v1350 = vsel %vm978, %v1300, %v1349
      %v1352 = vshrl.u32 %v764, 16
      %v1354 = vrot.slane %v1352, 3
      %v1355 = vshll.u32 %v764, 16
      %v1357 = vrot.slane %v1355, 4
      %v1358 = vor.u32 %v1354, %v1357
      %v1359 = vsel %vm978, %v1309, %v1358
      %v1360 = vrot.slane %v400, 3
      %v1361 = vrot.slane %v396, 4
      %v1362 = vor.u32 %v1360, %v1361
      %v1363 = vsel %vm978, %v1313, %v1362
      %v1365 = vshrl.u32 %v407, 16
      %v1367 = vrot.slane %v1365, 3
      %v1368 = vshll.u32 %v407, 16
      %v1370 = vrot.slane %v1368, 4
      %v1371 = vor.u32 %v1367, %v1370
      %v1372 = vsel %vm978, %v1322, %v1371
      %v1374 = vshrl.u32 %v569, 16
      %v1376 = vrot.slane %v1374, 3
      %v1377 = vshll.u32 %v569, 16
      %v1379 = vrot.slane %v1377, 4
      %v1380 = vor.u32 %v1376, %v1379
      %v1381 = vsel %vm978, %v1331, %v1380
      %v1383 = vshrl.u32 %v616, 16
      %v1385 = vrot.slane %v1383, 3
      %v1386 = vshll.u32 %v616, 16
      %v1388 = vrot.slane %v1386, 4
      %v1389 = vor.u32 %v1385, %v1388
      %v1390 = vsel %vm978, %v1340, %v1389
      %v1392 = vshrl.u32 %v680, 16
      %v1394 = vrot.slane %v1392, 3
      %v1395 = vshll.u32 %v680, 16
      %v1397 = vrot.slane %v1395, 4
      %v1398 = vor.u32 %v1394, %v1397
      %v1399 = vsel %vm978, %v1349, %v1398
      %v1401 = vshrl.u32 %v766, 16
      %v1403 = vrot.slane %v1401, 3
      %v1404 = vshll.u32 %v766, 16
      %v1406 = vrot.slane %v1404, 4
      %v1407 = vor.u32 %v1403, %v1406
      %v1408 = vsel %vm978, %v1358, %v1407
      %v1409 = vrot.slane %v408, 3
      %v1410 = vrot.slane %v404, 4
      %v1411 = vor.u32 %v1409, %v1410
      %v1412 = vsel %vm978, %v1362, %v1411
      %v1414 = vshrl.u32 %v415, 16
      %v1416 = vrot.slane %v1414, 3
      %v1417 = vshll.u32 %v415, 16
      %v1419 = vrot.slane %v1417, 4
      %v1420 = vor.u32 %v1416, %v1419
      %v1421 = vsel %vm978, %v1371, %v1420
      %v1423 = vshrl.u32 %v571, 16
      %v1425 = vrot.slane %v1423, 3
      %v1426 = vshll.u32 %v571, 16
      %v1428 = vrot.slane %v1426, 4
      %v1429 = vor.u32 %v1425, %v1428
      %v1430 = vsel %vm978, %v1380, %v1429
      %v1432 = vshrl.u32 %v618, 16
      %v1434 = vrot.slane %v1432, 3
      %v1435 = vshll.u32 %v618, 16
      %v1437 = vrot.slane %v1435, 4
      %v1438 = vor.u32 %v1434, %v1437
      %v1439 = vsel %vm978, %v1389, %v1438
      %v1441 = vshrl.u32 %v684, 16
      %v1443 = vrot.slane %v1441, 3
      %v1444 = vshll.u32 %v684, 16
      %v1446 = vrot.slane %v1444, 4
      %v1447 = vor.u32 %v1443, %v1446
      %v1448 = vsel %vm978, %v1398, %v1447
      %v1450 = vshrl.u32 %v768, 16
      %v1452 = vrot.slane %v1450, 3
      %v1453 = vshll.u32 %v768, 16
      %v1455 = vrot.slane %v1453, 4
      %v1456 = vor.u32 %v1452, %v1455
      %v1457 = vsel %vm978, %v1407, %v1456
      %v1458 = vrot.slane %v416, 3
      %v1459 = vrot.slane %v412, 4
      %v1460 = vor.u32 %v1458, %v1459
      %v1461 = vsel %vm978, %v1411, %v1460
      %v1463 = vshrl.u32 %v423, 16
      %v1465 = vrot.slane %v1463, 3
      %v1466 = vshll.u32 %v423, 16
      %v1468 = vrot.slane %v1466, 4
      %v1469 = vor.u32 %v1465, %v1468
      %v1470 = vsel %vm978, %v1420, %v1469
      %v1472 = vshrl.u32 %v573, 16
      %v1474 = vrot.slane %v1472, 3
      %v1475 = vshll.u32 %v573, 16
      %v1477 = vrot.slane %v1475, 4
      %v1478 = vor.u32 %v1474, %v1477
      %v1479 = vsel %vm978, %v1429, %v1478
      %v1481 = vshrl.u32 %v620, 16
      %v1483 = vrot.slane %v1481, 3
      %v1484 = vshll.u32 %v620, 16
      %v1486 = vrot.slane %v1484, 4
      %v1487 = vor.u32 %v1483, %v1486
      %v1488 = vsel %vm978, %v1438, %v1487
      %v1490 = vshrl.u32 %v688, 16
      %v1492 = vrot.slane %v1490, 3
      %v1493 = vshll.u32 %v688, 16
      %v1495 = vrot.slane %v1493, 4
      %v1496 = vor.u32 %v1492, %v1495
      %v1497 = vsel %vm978, %v1447, %v1496
      %v1499 = vshrl.u32 %v770, 16
      %v1501 = vrot.slane %v1499, 3
      %v1502 = vshll.u32 %v770, 16
      %v1504 = vrot.slane %v1502, 4
      %v1505 = vor.u32 %v1501, %v1504
      %v1506 = vsel %vm978, %v1456, %v1505
      %v1507 = vrot.slane %v424, 3
      %v1508 = vrot.slane %v420, 4
      %v1509 = vor.u32 %v1507, %v1508
      %v1510 = vsel %vm978, %v1460, %v1509
      %v1512 = vshrl.u32 %v431, 16
      %v1514 = vrot.slane %v1512, 3
      %v1515 = vshll.u32 %v431, 16
      %v1517 = vrot.slane %v1515, 4
      %v1518 = vor.u32 %v1514, %v1517
      %v1519 = vsel %vm978, %v1469, %v1518
      %v1521 = vshrl.u32 %v575, 16
      %v1523 = vrot.slane %v1521, 3
      %v1524 = vshll.u32 %v575, 16
      %v1526 = vrot.slane %v1524, 4
      %v1527 = vor.u32 %v1523, %v1526
      %v1528 = vsel %vm978, %v1478, %v1527
      %v1530 = vshrl.u32 %v622, 16
      %v1532 = vrot.slane %v1530, 3
      %v1533 = vshll.u32 %v622, 16
      %v1535 = vrot.slane %v1533, 4
      %v1536 = vor.u32 %v1532, %v1535
      %v1537 = vsel %vm978, %v1487, %v1536
      %v1539 = vshrl.u32 %v692, 16
      %v1541 = vrot.slane %v1539, 3
      %v1542 = vshll.u32 %v692, 16
      %v1544 = vrot.slane %v1542, 4
      %v1545 = vor.u32 %v1541, %v1544
      %v1546 = vsel %vm978, %v1496, %v1545
      %v1548 = vshrl.u32 %v772, 16
      %v1550 = vrot.slane %v1548, 3
      %v1551 = vshll.u32 %v772, 16
      %v1553 = vrot.slane %v1551, 4
      %v1554 = vor.u32 %v1550, %v1553
      %v1555 = vsel %vm978, %v1505, %v1554
      %v1556 = vrot.slane %v432, 3
      %v1557 = vrot.slane %v428, 4
      %v1558 = vor.u32 %v1556, %v1557
      %v1559 = vsel %vm978, %v1509, %v1558
      %v1561 = vshrl.u32 %v439, 16
      %v1563 = vrot.slane %v1561, 3
      %v1564 = vshll.u32 %v439, 16
      %v1566 = vrot.slane %v1564, 4
      %v1567 = vor.u32 %v1563, %v1566
      %v1568 = vsel %vm978, %v1518, %v1567
      %v1570 = vshrl.u32 %v577, 16
      %v1572 = vrot.slane %v1570, 3
      %v1573 = vshll.u32 %v577, 16
      %v1575 = vrot.slane %v1573, 4
      %v1576 = vor.u32 %v1572, %v1575
      %v1577 = vsel %vm978, %v1527, %v1576
      %v1579 = vshrl.u32 %v624, 16
      %v1581 = vrot.slane %v1579, 3
      %v1582 = vshll.u32 %v624, 16
      %v1584 = vrot.slane %v1582, 4
      %v1585 = vor.u32 %v1581, %v1584
      %v1586 = vsel %vm978, %v1536, %v1585
      %v1588 = vshrl.u32 %v696, 16
      %v1590 = vrot.slane %v1588, 3
      %v1591 = vshll.u32 %v696, 16
      %v1593 = vrot.slane %v1591, 4
      %v1594 = vor.u32 %v1590, %v1593
      %v1595 = vsel %vm978, %v1545, %v1594
      %v1597 = vshrl.u32 %v774, 16
      %v1599 = vrot.slane %v1597, 3
      %v1600 = vshll.u32 %v774, 16
      %v1602 = vrot.slane %v1600, 4
      %v1603 = vor.u32 %v1599, %v1602
      %v1604 = vsel %vm978, %v1554, %v1603
      %v1605 = vrot.slane %v440, 3
      %v1606 = vrot.slane %v436, 4
      %v1607 = vor.u32 %v1605, %v1606
      %v1608 = vsel %vm978, %v1558, %v1607
      %v1610 = vshrl.u32 %v447, 16
      %v1612 = vrot.slane %v1610, 3
      %v1613 = vshll.u32 %v447, 16
      %v1615 = vrot.slane %v1613, 4
      %v1616 = vor.u32 %v1612, %v1615
      %v1617 = vsel %vm978, %v1567, %v1616
      %v1619 = vshrl.u32 %v579, 16
      %v1621 = vrot.slane %v1619, 3
      %v1622 = vshll.u32 %v579, 16
      %v1624 = vrot.slane %v1622, 4
      %v1625 = vor.u32 %v1621, %v1624
      %v1626 = vsel %vm978, %v1576, %v1625
      %v1628 = vshrl.u32 %v626, 16
      %v1630 = vrot.slane %v1628, 3
      %v1631 = vshll.u32 %v626, 16
      %v1633 = vrot.slane %v1631, 4
      %v1634 = vor.u32 %v1630, %v1633
      %v1635 = vsel %vm978, %v1585, %v1634
      %v1637 = vshrl.u32 %v700, 16
      %v1639 = vrot.slane %v1637, 3
      %v1640 = vshll.u32 %v700, 16
      %v1642 = vrot.slane %v1640, 4
      %v1643 = vor.u32 %v1639, %v1642
      %v1644 = vsel %vm978, %v1594, %v1643
      %v1646 = vshrl.u32 %v776, 16
      %v1648 = vrot.slane %v1646, 3
      %v1649 = vshll.u32 %v776, 16
      %v1651 = vrot.slane %v1649, 4
      %v1652 = vor.u32 %v1648, %v1651
      %v1653 = vsel %vm978, %v1603, %v1652
      %v1654 = vrot.slane %v448, 3
      %v1655 = vrot.slane %v444, 4
      %v1656 = vor.u32 %v1654, %v1655
      %v1657 = vsel %vm978, %v1607, %v1656
      %v1659 = vshrl.u32 %v455, 16
      %v1661 = vrot.slane %v1659, 3
      %v1662 = vshll.u32 %v455, 16
      %v1664 = vrot.slane %v1662, 4
      %v1665 = vor.u32 %v1661, %v1664
      %v1666 = vsel %vm978, %v1616, %v1665
      %v1668 = vshrl.u32 %v581, 16
      %v1670 = vrot.slane %v1668, 3
      %v1671 = vshll.u32 %v581, 16
      %v1673 = vrot.slane %v1671, 4
      %v1674 = vor.u32 %v1670, %v1673
      %v1675 = vsel %vm978, %v1625, %v1674
      %v1677 = vshrl.u32 %v628, 16
      %v1679 = vrot.slane %v1677, 3
      %v1680 = vshll.u32 %v628, 16
      %v1682 = vrot.slane %v1680, 4
      %v1683 = vor.u32 %v1679, %v1682
      %v1684 = vsel %vm978, %v1634, %v1683
      %v1686 = vshrl.u32 %v704, 16
      %v1688 = vrot.slane %v1686, 3
      %v1689 = vshll.u32 %v704, 16
      %v1691 = vrot.slane %v1689, 4
      %v1692 = vor.u32 %v1688, %v1691
      %v1693 = vsel %vm978, %v1643, %v1692
      %v1695 = vshrl.u32 %v778, 16
      %v1697 = vrot.slane %v1695, 3
      %v1698 = vshll.u32 %v778, 16
      %v1700 = vrot.slane %v1698, 4
      %v1701 = vor.u32 %v1697, %v1700
      %v1702 = vsel %vm978, %v1652, %v1701
      %v1703 = vrot.slane %v456, 3
      %v1704 = vrot.slane %v452, 4
      %v1705 = vor.u32 %v1703, %v1704
      %v1706 = vsel %vm978, %v1656, %v1705
      %v1708 = vshrl.u32 %v463, 16
      %v1710 = vrot.slane %v1708, 3
      %v1711 = vshll.u32 %v463, 16
      %v1713 = vrot.slane %v1711, 4
      %v1714 = vor.u32 %v1710, %v1713
      %v1715 = vsel %vm978, %v1665, %v1714
      %v1717 = vshrl.u32 %v583, 16
      %v1719 = vrot.slane %v1717, 3
      %v1720 = vshll.u32 %v583, 16
      %v1722 = vrot.slane %v1720, 4
      %v1723 = vor.u32 %v1719, %v1722
      %v1724 = vsel %vm978, %v1674, %v1723
      %v1726 = vshrl.u32 %v630, 16
      %v1728 = vrot.slane %v1726, 3
      %v1729 = vshll.u32 %v630, 16
      %v1731 = vrot.slane %v1729, 4
      %v1732 = vor.u32 %v1728, %v1731
      %v1733 = vsel %vm978, %v1683, %v1732
      %v1735 = vshrl.u32 %v708, 16
      %v1737 = vrot.slane %v1735, 3
      %v1738 = vshll.u32 %v708, 16
      %v1740 = vrot.slane %v1738, 4
      %v1741 = vor.u32 %v1737, %v1740
      %v1742 = vsel %vm978, %v1692, %v1741
      %v1744 = vshrl.u32 %v780, 16
      %v1746 = vrot.slane %v1744, 3
      %v1747 = vshll.u32 %v780, 16
      %v1749 = vrot.slane %v1747, 4
      %v1750 = vor.u32 %v1746, %v1749
      %v1751 = vsel %vm978, %v1701, %v1750
      %v1752 = vrot.slane %v464, 3
      %v1753 = vrot.slane %v460, 4
      %v1754 = vor.u32 %v1752, %v1753
      %v1755 = vsel %vm978, %v1705, %v1754
      %v1757 = vshrl.u32 %v471, 16
      %v1759 = vrot.slane %v1757, 3
      %v1760 = vshll.u32 %v471, 16
      %v1762 = vrot.slane %v1760, 4
      %v1763 = vor.u32 %v1759, %v1762
      %v1764 = vsel %vm978, %v1714, %v1763
      %v1766 = vshrl.u32 %v585, 16
      %v1768 = vrot.slane %v1766, 3
      %v1769 = vshll.u32 %v585, 16
      %v1771 = vrot.slane %v1769, 4
      %v1772 = vor.u32 %v1768, %v1771
      %v1773 = vsel %vm978, %v1723, %v1772
      %v1775 = vshrl.u32 %v632, 16
      %v1777 = vrot.slane %v1775, 3
      %v1778 = vshll.u32 %v632, 16
      %v1780 = vrot.slane %v1778, 4
      %v1781 = vor.u32 %v1777, %v1780
      %v1782 = vsel %vm978, %v1732, %v1781
      %v1784 = vshrl.u32 %v712, 16
      %v1786 = vrot.slane %v1784, 3
      %v1787 = vshll.u32 %v712, 16
      %v1789 = vrot.slane %v1787, 4
      %v1790 = vor.u32 %v1786, %v1789
      %v1791 = vsel %vm978, %v1741, %v1790
      %v1793 = vshrl.u32 %v782, 16
      %v1795 = vrot.slane %v1793, 3
      %v1796 = vshll.u32 %v782, 16
      %v1798 = vrot.slane %v1796, 4
      %v1799 = vor.u32 %v1795, %v1798
      %v1800 = vsel %vm978, %v1750, %v1799
      %v1801 = vrot.slane %v472, 3
      %v1802 = vrot.slane %v468, 4
      %v1803 = vor.u32 %v1801, %v1802
      %v1804 = vsel %vm978, %v1754, %v1803
      %v1806 = vshrl.u32 %v479, 16
      %v1808 = vrot.slane %v1806, 3
      %v1809 = vshll.u32 %v479, 16
      %v1811 = vrot.slane %v1809, 4
      %v1812 = vor.u32 %v1808, %v1811
      %v1813 = vsel %vm978, %v1763, %v1812
      %v1815 = vshrl.u32 %v587, 16
      %v1817 = vrot.slane %v1815, 3
      %v1818 = vshll.u32 %v587, 16
      %v1820 = vrot.slane %v1818, 4
      %v1821 = vor.u32 %v1817, %v1820
      %v1822 = vsel %vm978, %v1772, %v1821
      %v1824 = vshrl.u32 %v634, 16
      %v1826 = vrot.slane %v1824, 3
      %v1827 = vshll.u32 %v634, 16
      %v1829 = vrot.slane %v1827, 4
      %v1830 = vor.u32 %v1826, %v1829
      %v1831 = vsel %vm978, %v1781, %v1830
      %v1833 = vshrl.u32 %v716, 16
      %v1835 = vrot.slane %v1833, 3
      %v1836 = vshll.u32 %v716, 16
      %v1838 = vrot.slane %v1836, 4
      %v1839 = vor.u32 %v1835, %v1838
      %v1840 = vsel %vm978, %v1790, %v1839
      %v1842 = vshrl.u32 %v784, 16
      %v1844 = vrot.slane %v1842, 3
      %v1845 = vshll.u32 %v784, 16
      %v1847 = vrot.slane %v1845, 4
      %v1848 = vor.u32 %v1844, %v1847
      %v1849 = vsel %vm978, %v1799, %v1848
      %v1850 = vrot.slane %v480, 3
      %v1851 = vrot.slane %v476, 4
      %v1852 = vor.u32 %v1850, %v1851
      %v1853 = vsel %vm978, %v1803, %v1852
      %v1855 = vshrl.u32 %v487, 16
      %v1857 = vrot.slane %v1855, 3
      %v1858 = vshll.u32 %v487, 16
      %v1860 = vrot.slane %v1858, 4
      %v1861 = vor.u32 %v1857, %v1860
      %v1862 = vsel %vm978, %v1812, %v1861
      %v1864 = vshrl.u32 %v589, 16
      %v1866 = vrot.slane %v1864, 3
      %v1867 = vshll.u32 %v589, 16
      %v1869 = vrot.slane %v1867, 4
      %v1870 = vor.u32 %v1866, %v1869
      %v1871 = vsel %vm978, %v1821, %v1870
      %v1873 = vshrl.u32 %v636, 16
      %v1875 = vrot.slane %v1873, 3
      %v1876 = vshll.u32 %v636, 16
      %v1878 = vrot.slane %v1876, 4
      %v1879 = vor.u32 %v1875, %v1878
      %v1880 = vsel %vm978, %v1830, %v1879
      %v1882 = vshrl.u32 %v720, 16
      %v1884 = vrot.slane %v1882, 3
      %v1885 = vshll.u32 %v720, 16
      %v1887 = vrot.slane %v1885, 4
      %v1888 = vor.u32 %v1884, %v1887
      %v1889 = vsel %vm978, %v1839, %v1888
      %v1891 = vshrl.u32 %v786, 16
      %v1893 = vrot.slane %v1891, 3
      %v1894 = vshll.u32 %v786, 16
      %v1896 = vrot.slane %v1894, 4
      %v1897 = vor.u32 %v1893, %v1896
      %v1898 = vsel %vm978, %v1848, %v1897
      %v1899 = vrot.slane %v488, 3
      %v1900 = vrot.slane %v484, 4
      %v1901 = vor.u32 %v1899, %v1900
      %v1902 = vsel %vm978, %v1852, %v1901
      %v1904 = vshrl.u32 %v495, 16
      %v1906 = vrot.slane %v1904, 3
      %v1907 = vshll.u32 %v495, 16
      %v1909 = vrot.slane %v1907, 4
      %v1910 = vor.u32 %v1906, %v1909
      %v1911 = vsel %vm978, %v1861, %v1910
      %v1913 = vshrl.u32 %v591, 16
      %v1915 = vrot.slane %v1913, 3
      %v1916 = vshll.u32 %v591, 16
      %v1918 = vrot.slane %v1916, 4
      %v1919 = vor.u32 %v1915, %v1918
      %v1920 = vsel %vm978, %v1870, %v1919
      %v1922 = vshrl.u32 %v638, 16
      %v1924 = vrot.slane %v1922, 3
      %v1925 = vshll.u32 %v638, 16
      %v1927 = vrot.slane %v1925, 4
      %v1928 = vor.u32 %v1924, %v1927
      %v1929 = vsel %vm978, %v1879, %v1928
      %v1931 = vshrl.u32 %v724, 16
      %v1933 = vrot.slane %v1931, 3
      %v1934 = vshll.u32 %v724, 16
      %v1936 = vrot.slane %v1934, 4
      %v1937 = vor.u32 %v1933, %v1936
      %v1938 = vsel %vm978, %v1888, %v1937
      %v1940 = vshrl.u32 %v788, 16
      %v1942 = vrot.slane %v1940, 3
      %v1943 = vshll.u32 %v788, 16
      %v1945 = vrot.slane %v1943, 4
      %v1946 = vor.u32 %v1942, %v1945
      %v1947 = vsel %vm978, %v1897, %v1946
      %v1948 = vrot.slane %v496, 3
      %v1949 = vrot.slane %v492, 4
      %v1950 = vor.u32 %v1948, %v1949
      %v1951 = vsel %vm978, %v1901, %v1950
      %v1953 = vshrl.u32 %v503, 16
      %v1955 = vrot.slane %v1953, 3
      %v1956 = vshll.u32 %v503, 16
      %v1958 = vrot.slane %v1956, 4
      %v1959 = vor.u32 %v1955, %v1958
      %v1960 = vsel %vm978, %v1910, %v1959
      %v1962 = vshrl.u32 %v593, 16
      %v1964 = vrot.slane %v1962, 3
      %v1965 = vshll.u32 %v593, 16
      %v1967 = vrot.slane %v1965, 4
      %v1968 = vor.u32 %v1964, %v1967
      %v1969 = vsel %vm978, %v1919, %v1968
      %v1971 = vshrl.u32 %v640, 16
      %v1973 = vrot.slane %v1971, 3
      %v1974 = vshll.u32 %v640, 16
      %v1976 = vrot.slane %v1974, 4
      %v1977 = vor.u32 %v1973, %v1976
      %v1978 = vsel %vm978, %v1928, %v1977
      %v1980 = vshrl.u32 %v728, 16
      %v1982 = vrot.slane %v1980, 3
      %v1983 = vshll.u32 %v728, 16
      %v1985 = vrot.slane %v1983, 4
      %v1986 = vor.u32 %v1982, %v1985
      %v1987 = vsel %vm978, %v1937, %v1986
      %v1989 = vshrl.u32 %v790, 16
      %v1991 = vrot.slane %v1989, 3
      %v1992 = vshll.u32 %v790, 16
      %v1994 = vrot.slane %v1992, 4
      %v1995 = vor.u32 %v1991, %v1994
      %v1996 = vsel %vm978, %v1946, %v1995
      %v1997 = vrot.slane %v504, 3
      %v1998 = vrot.slane %v500, 4
      %v1999 = vor.u32 %v1997, %v1998
      %v2000 = vsel %vm978, %v1950, %v1999
      %v2002 = vshrl.u32 %v511, 16
      %v2004 = vrot.slane %v2002, 3
      %v2005 = vshll.u32 %v511, 16
      %v2007 = vrot.slane %v2005, 4
      %v2008 = vor.u32 %v2004, %v2007
      %v2009 = vsel %vm978, %v1959, %v2008
      %v2011 = vshrl.u32 %v595, 16
      %v2013 = vrot.slane %v2011, 3
      %v2014 = vshll.u32 %v595, 16
      %v2016 = vrot.slane %v2014, 4
      %v2017 = vor.u32 %v2013, %v2016
      %v2018 = vsel %vm978, %v1968, %v2017
      %v2020 = vshrl.u32 %v642, 16
      %v2022 = vrot.slane %v2020, 3
      %v2023 = vshll.u32 %v642, 16
      %v2025 = vrot.slane %v2023, 4
      %v2026 = vor.u32 %v2022, %v2025
      %v2027 = vsel %vm978, %v1977, %v2026
      %v2029 = vshrl.u32 %v732, 16
      %v2031 = vrot.slane %v2029, 3
      %v2032 = vshll.u32 %v732, 16
      %v2034 = vrot.slane %v2032, 4
      %v2035 = vor.u32 %v2031, %v2034
      %v2036 = vsel %vm978, %v1986, %v2035
      %v2038 = vshrl.u32 %v792, 16
      %v2040 = vrot.slane %v2038, 3
      %v2041 = vshll.u32 %v792, 16
      %v2043 = vrot.slane %v2041, 4
      %v2044 = vor.u32 %v2040, %v2043
      %v2045 = vsel %vm978, %v1995, %v2044
      %v2046 = vrot.slane %v512, 3
      %v2047 = vrot.slane %v508, 4
      %v2048 = vor.u32 %v2046, %v2047
      %v2049 = vsel %vm978, %v1999, %v2048
      %v2051 = vshrl.u32 %v519, 16
      %v2053 = vrot.slane %v2051, 3
      %v2054 = vshll.u32 %v519, 16
      %v2056 = vrot.slane %v2054, 4
      %v2057 = vor.u32 %v2053, %v2056
      %v2058 = vsel %vm978, %v2008, %v2057
      %v2060 = vshrl.u32 %v597, 16
      %v2062 = vrot.slane %v2060, 3
      %v2063 = vshll.u32 %v597, 16
      %v2065 = vrot.slane %v2063, 4
      %v2066 = vor.u32 %v2062, %v2065
      %v2067 = vsel %vm978, %v2017, %v2066
      %v2069 = vshrl.u32 %v644, 16
      %v2071 = vrot.slane %v2069, 3
      %v2072 = vshll.u32 %v644, 16
      %v2074 = vrot.slane %v2072, 4
      %v2075 = vor.u32 %v2071, %v2074
      %v2076 = vsel %vm978, %v2026, %v2075
      %v2078 = vshrl.u32 %v736, 16
      %v2080 = vrot.slane %v2078, 3
      %v2081 = vshll.u32 %v736, 16
      %v2083 = vrot.slane %v2081, 4
      %v2084 = vor.u32 %v2080, %v2083
      %v2085 = vsel %vm978, %v2035, %v2084
      %v2087 = vshrl.u32 %v794, 16
      %v2089 = vrot.slane %v2087, 3
      %v2090 = vshll.u32 %v794, 16
      %v2092 = vrot.slane %v2090, 4
      %v2093 = vor.u32 %v2089, %v2092
      %v2094 = vsel %vm978, %v2044, %v2093
      %v2095 = vrot.slane %v520, 3
      %v2096 = vrot.slane %v516, 4
      %v2097 = vor.u32 %v2095, %v2096
      %v2098 = vsel %vm978, %v2048, %v2097
      %v2100 = vshrl.u32 %v802, 16
      %v2102 = vrot.slane %v2100, 3
      %v2103 = vshll.u32 %v802, 16
      %v2105 = vrot.slane %v2103, 4
      %v2106 = vor.u32 %v2102, %v2105
      %v2107 = vsel %vm978, %v2057, %v2106
      %v2109 = vshrl.u32 %v822, 16
      %v2111 = vrot.slane %v2109, 3
      %v2112 = vshll.u32 %v822, 16
      %v2114 = vrot.slane %v2112, 4
      %v2115 = vor.u32 %v2111, %v2114
      %v2116 = vsel %vm978, %v2066, %v2115
      %v2118 = vshrl.u32 %v646, 16
      %v2120 = vrot.slane %v2118, 3
      %v2121 = vshll.u32 %v646, 16
      %v2123 = vrot.slane %v2121, 4
      %v2124 = vor.u32 %v2120, %v2123
      %v2125 = vsel %vm978, %v2075, %v2124
      %v2127 = vshrl.u32 %v740, 16
      %v2129 = vrot.slane %v2127, 3
      %v2130 = vshll.u32 %v740, 16
      %v2132 = vrot.slane %v2130, 4
      %v2133 = vor.u32 %v2129, %v2132
      %v2134 = vsel %vm978, %v2084, %v2133
      %v2136 = vshrl.u32 %v796, 16
      %v2138 = vrot.slane %v2136, 3
      %v2139 = vshll.u32 %v796, 16
      %v2141 = vrot.slane %v2139, 4
      %v2142 = vor.u32 %v2138, %v2141
      %v2143 = vsel %vm978, %v2093, %v2142
      %v2144 = vrot.slane %v742, 3
      %v2145 = vrot.slane %v745, 4
      %v2146 = vor.u32 %v2144, %v2145
      %v2147 = vsel %vm978, %v2097, %v2146
      %v2149 = vshrl.u32 %v808, 16
      %v2151 = vrot.slane %v2149, 3
      %v2152 = vshll.u32 %v808, 16
      %v2154 = vrot.slane %v2152, 4
      %v2155 = vor.u32 %v2151, %v2154
      %v2156 = vsel %vm978, %v2106, %v2155
      %v2158 = vshrl.u32 %v824, 16
      %v2160 = vrot.slane %v2158, 3
      %v2161 = vshll.u32 %v824, 16
      %v2163 = vrot.slane %v2161, 4
      %v2164 = vor.u32 %v2160, %v2163
      %v2165 = vsel %vm978, %v2115, %v2164
      %v2167 = vshrl.u32 %v648, 16
      %v2169 = vrot.slane %v2167, 3
      %v2170 = vshll.u32 %v648, 16
      %v2172 = vrot.slane %v2170, 4
      %v2173 = vor.u32 %v2169, %v2172
      %v2174 = vsel %vm978, %v2124, %v2173
      %v2176 = vshrl.u32 %v749, 16
      %v2178 = vrot.slane %v2176, 3
      %v2179 = vshll.u32 %v749, 16
      %v2181 = vrot.slane %v2179, 4
      %v2182 = vor.u32 %v2178, %v2181
      %v2183 = vsel %vm978, %v2133, %v2182
      %v2185 = vshrl.u32 %v798, 16
      %v2187 = vrot.slane %v2185, 3
      %v2188 = vshll.u32 %v798, 16
      %v2190 = vrot.slane %v2188, 4
      %v2191 = vor.u32 %v2187, %v2190
      %v2192 = vsel %vm978, %v2142, %v2191
      %v2193 = vrot.slane %v809, 3
      %v2194 = vrot.slane %v805, 4
      %v2195 = vor.u32 %v2193, %v2194
      %v2196 = vsel %vm978, %v2146, %v2195
      %v2198 = vshrl.u32 %v816, 16
      %v2200 = vrot.slane %v2198, 3
      %v2201 = vshll.u32 %v816, 16
      %v2203 = vrot.slane %v2201, 4
      %v2204 = vor.u32 %v2200, %v2203
      %v2205 = vsel %vm978, %v2155, %v2204
      %v2207 = vshrl.u32 %v826, 16
      %v2209 = vrot.slane %v2207, 3
      %v2210 = vshll.u32 %v826, 16
      %v2212 = vrot.slane %v2210, 4
      %v2213 = vor.u32 %v2209, %v2212
      %v2214 = vsel %vm978, %v2164, %v2213
      %v2216 = vshrl.u32 %v522, 16
      %v2218 = vrot.slane %v2216, 3
      %v2219 = vshll.u32 %v522, 16
      %v2221 = vrot.slane %v2219, 4
      %v2222 = vor.u32 %v2218, %v2221
      %v2223 = vsel %vm978, %v2057, %v2222
      %v2225 = vshrl.u32 %v596, 16
      %v2227 = vrot.slane %v2225, 3
      %v2228 = vshll.u32 %v596, 16
      %v2230 = vrot.slane %v2228, 4
      %v2231 = vor.u32 %v2227, %v2230
      %v2232 = vsel %vm978, %v2066, %v2231
      %v2234 = vshrl.u32 %v647, 16
      %v2236 = vrot.slane %v2234, 3
      %v2237 = vshll.u32 %v647, 16
      %v2239 = vrot.slane %v2237, 4
      %v2240 = vor.u32 %v2236, %v2239
      %v2241 = vsel %vm978, %v2173, %v2240
      %v2243 = vshrl.u32 %v748, 16
      %v2245 = vrot.slane %v2243, 3
      %v2246 = vshll.u32 %v748, 16
      %v2248 = vrot.slane %v2246, 4
      %v2249 = vor.u32 %v2245, %v2248
      %v2250 = vsel %vm978, %v2182, %v2249
      %v2252 = vshrl.u32 %v800, 16
      %v2254 = vrot.slane %v2252, 3
      %v2255 = vshll.u32 %v800, 16
      %v2257 = vrot.slane %v2255, 4
      %v2258 = vor.u32 %v2254, %v2257
      %v2259 = vsel %vm978, %v2191, %v2258
      %v2260 = vrot.slane %v817, 3
      %v2261 = vrot.slane %v813, 4
      %v2262 = vor.u32 %v2260, %v2261
      %v2263 = vsel %vm978, %v2195, %v2262
      %v2265 = vshrl.u32 %v819, 16
      %v2267 = vrot.slane %v2265, 3
      %v2268 = vshll.u32 %v819, 16
      %v2270 = vrot.slane %v2268, 4
      %v2271 = vor.u32 %v2267, %v2270
      %v2272 = vsel %vm978, %v2204, %v2271
      %v2274 = vshrl.u32 %v825, 16
      %v2276 = vrot.slane %v2274, 3
      %v2277 = vshll.u32 %v825, 16
      %v2279 = vrot.slane %v2277, 4
      %v2280 = vor.u32 %v2276, %v2279
      %v2281 = vsel %vm978, %v2213, %v2280
      %v2581 = vunpack.c.l.b16 %v827
      %v2582 = vunpack.c.l.b16 %v828
      %v2583 = vunpack.c.l.b16 %v829
      %v2584 = vunpack.c.l.b16 %v830
      %v2585 = vunpack.c.l.b16 %v831
      %v2586 = vunpack.c.l.b16 %v832
      %v2587 = vunpack.c.l.b16 %v833
      %v2588 = vunpack.c.l.b16 %v834
      %v2589 = vunpack.c.l.b16 %v835
      %v2590 = vunpack.c.l.b16 %v836
      %v2591 = vunpack.c.l.b16 %v837
      %v2592 = vunpack.c.l.b16 %v838
      %v2593 = vunpack.c.l.b16 %v839
      %v2594 = vunpack.c.l.b16 %v840
      %v2595 = vunpack.c.l.b16 %v841
      %v2596 = vunpack.c.l.b16 %v842
      %v2597 = vunpack.c.l.b16 %v843
      %v2598 = vunpack.c.l.b16 %v844
      %v2599 = vunpack.c.l.b16 %v845
      %v2600 = vunpack.c.l.b16 %v846
      %v2601 = vunpack.c.l.b16 %v847
      %v2602 = vunpack.c.l.b16 %v848
      %v2603 = vunpack.c.l.b16 %v849
      %v2604 = vunpack.c.l.b16 %v850
      %v2605 = vunpack.c.l.b16 %v851
      %v2606 = vunpack.c.l.b16 %v852
      %v2607 = vunpack.c.l.b16 %v853
      %v2608 = vunpack.c.l.b16 %v854
      %v2609 = vunpack.c.l.b16 %v855
      %v2610 = vunpack.c.l.b16 %v856
      %v2611 = vunpack.c.l.b16 %v857
      %v2612 = vunpack.c.l.b16 %v858
      %v2613 = vunpack.c.l.b16 %v859
      %v2614 = vunpack.c.l.b16 %v860
      %v2615 = vunpack.c.l.b16 %v861
      %v2616 = vunpack.c.l.b16 %v862
      %v2617 = vunpack.c.l.b16 %v863
      %v2618 = vunpack.c.l.b16 %v864
      %v2619 = vunpack.c.l.b16 %v865
      %v2620 = vunpack.c.l.b16 %v866
      %v2621 = vunpack.c.l.b16 %v867
      %v2622 = vunpack.c.l.b16 %v868
      %v2623 = vunpack.c.l.b16 %v869
      %v2624 = vunpack.c.l.b16 %v870
      %v2625 = vunpack.c.l.b16 %v871
      %v2626 = vunpack.c.l.b16 %v872
      %v2627 = vunpack.c.l.b16 %v873
      %v2628 = vunpack.c.l.b16 %v874
      %v2629 = vunpack.c.l.b16 %v875
      %v2630 = vunpack.c.l.b16 %v876
      %v2631 = vunpack.c.l.b16 %v877
      %v2632 = vunpack.c.l.b16 %v878
      %v2633 = vunpack.c.l.b16 %v879
      %v2634 = vunpack.c.l.b16 %v880
      %v2635 = vunpack.c.l.b16 %v881
      %v2636 = vunpack.c.l.b16 %v882
      %v2637 = vunpack.c.l.b16 %v883
      %v2638 = vunpack.c.l.b16 %v884
      %v2639 = vunpack.c.l.b16 %v885
      %v2640 = vunpack.c.l.b16 %v886
      %v2641 = vunpack.c.l.b16 %v887
      %v2642 = vunpack.c.l.b16 %v888
      %v2643 = vunpack.c.l.b16 %v889
      %v2644 = vunpack.c.l.b16 %v890
      %v2645 = vunpack.c.l.b16 %v891
      %v2646 = vunpack.c.l.b16 %v892
      %v2647 = vunpack.c.l.b16 %v893
      %v2648 = vunpack.c.l.b16 %v894
      %v2649 = vunpack.c.l.b16 %v895
      %v2650 = vunpack.c.l.b16 %v896
      %v2651 = vunpack.c.l.b16 %v897
      %v2652 = vunpack.c.l.b16 %v898
      %v2653 = vunpack.c.l.b16 %v899
      %v2654 = vunpack.c.l.b16 %v900
      %v2655 = vunpack.c.l.b16 %v901
      %v2656 = vunpack.c.l.b16 %v902
      %v2657 = vunpack.c.l.b16 %v903
      %v2658 = vunpack.c.l.b16 %v904
      %v2659 = vunpack.c.l.b16 %v905
      %v2660 = vunpack.c.l.b16 %v906
      %v2661 = vunpack.c.l.b16 %v907
      %v2662 = vunpack.c.l.b16 %v908
      %v2663 = vunpack.c.l.b16 %v909
      %v2664 = vunpack.c.l.b16 %v910
      %v2665 = vunpack.c.l.b16 %v911
      %v2666 = vunpack.c.l.b16 %v912
      %v2667 = vunpack.c.l.b16 %v913
      %v2668 = vunpack.c.l.b16 %v914
      %v2669 = vunpack.c.l.b16 %v915
      %v2670 = vunpack.c.l.b16 %v916
      %v2671 = vunpack.c.l.b16 %v917
      %v2672 = vunpack.c.l.b16 %v918
      %v2673 = vunpack.c.l.b16 %v919
      %v2674 = vunpack.c.l.b16 %v920
      %v2675 = vunpack.c.l.b16 %v921
      %v2676 = vunpack.c.l.b16 %v922
      %v2677 = vunpack.c.l.b16 %v923
      %v2678 = vunpack.c.l.b16 %v924
      %v2679 = vunpack.c.l.b16 %v925
      %v2680 = vunpack.c.l.b16 %v926
      %v2681 = vunpack.c.l.b16 %v927
      %v2682 = vunpack.c.l.b16 %v928
      %v2683 = vunpack.c.l.b16 %v929
      %v2684 = vunpack.c.l.b16 %v930
      %v2685 = vunpack.c.l.b16 %v931
      %v2686 = vunpack.c.l.b16 %v932
      %v2687 = vunpack.c.l.b16 %v933
      %v2688 = vunpack.c.l.b16 %v934
      %v2689 = vunpack.c.l.b16 %v935
      %v2690 = vunpack.c.l.b16 %v936
      %v2691 = vunpack.c.l.b16 %v937
      %v2692 = vunpack.c.l.b16 %v938
      %v2693 = vunpack.c.l.b16 %v939
      %v2694 = vunpack.c.l.b16 %v940
      %v2695 = vunpack.c.l.b16 %v941
      %v2696 = vunpack.c.l.b16 %v942
      %v2697 = vunpack.c.l.b16 %v943
      %v2698 = vunpack.c.l.b16 %v944
      %v2699 = vunpack.c.l.b16 %v945
      %v2700 = vunpack.c.l.b16 %v946
      %v2701 = vunpack.c.l.b16 %v947
      %v2702 = vunpack.c.l.b16 %v948
      %v2703 = vunpack.c.l.b16 %v949
      %v2704 = vunpack.c.l.b16 %v950
      %v2705 = vunpack.c.l.b16 %v951
      %v2706 = vunpack.c.l.b16 %v952
      %v2707 = vunpack.c.l.b16 %v953
      %v2708 = vunpack.c.l.b16 %v954
      %v2709 = vunpack.c.l.b16 %v955
      %v2710 = vunpack.c.l.b16 %v956
      %v2711 = vunpack.c.l.b16 %v957
      %v2712 = vunpack.c.l.b16 %v958
      %v2713 = vunpack.c.l.b16 %v959
      %v2714 = vunpack.c.l.b16 %v960
      %v2715 = vunpack.c.l.b16 %v961
      %v2716 = vunpack.c.l.b16 %v962
      %v2717 = vunpack.c.l.b16 %v963
      %v2718 = vunpack.c.l.b16 %v964
      %v2719 = vunpack.c.l.b16 %v965
      %v2720 = vunpack.c.l.b16 %v966
      %v2721 = vunpack.c.l.b16 %v967
      %v2722 = vunpack.c.l.b16 %v968
      %v2723 = vunpack.c.l.b16 %v969
      %v2724 = vunpack.c.l.b16 %v970
      %v2725 = vpack.c.b16 %v2582, %v2581
      %v2726 = vpack.c.b16 %v2584, %v2583
      %v2727 = vpack.c.b16 %v2586, %v2585
      %v2728 = vpack.c.b16 %v2588, %v2587
      %v2729 = vpack.c.b16 %v2590, %v2589
      %v2730 = vpack.c.b16 %v2592, %v2591
      %v2731 = vpack.c.b16 %v2594, %v2593
      %v2732 = vpack.c.b16 %v2596, %v2595
      %v2733 = vpack.c.b16 %v2598, %v2597
      %v2734 = vpack.c.b16 %v2600, %v2599
      %v2735 = vpack.c.b16 %v2602, %v2601
      %v2736 = vpack.c.b16 %v2604, %v2603
      %v2737 = vpack.c.b16 %v2606, %v2605
      %v2738 = vpack.c.b16 %v2608, %v2607
      %v2739 = vpack.c.b16 %v2610, %v2609
      %v2740 = vpack.c.b16 %v2612, %v2611
      %v2741 = vpack.c.b16 %v2614, %v2613
      %v2742 = vpack.c.b16 %v2616, %v2615
      %v2743 = vpack.c.b16 %v2618, %v2617
      %v2744 = vpack.c.b16 %v2620, %v2619
      %v2745 = vpack.c.b16 %v2622, %v2621
      %v2746 = vpack.c.b16 %v2624, %v2623
      %v2747 = vpack.c.b16 %v2626, %v2625
      %v2748 = vpack.c.b16 %v2628, %v2627
      %v2749 = vpack.c.b16 %v2630, %v2629
      %v2750 = vpack.c.b16 %v2632, %v2631
      %v2751 = vpack.c.b16 %v2634, %v2633
      %v2752 = vpack.c.b16 %v2636, %v2635
      %v2753 = vpack.c.b16 %v2638, %v2637
      %v2754 = vpack.c.b16 %v2640, %v2639
      %v2755 = vpack.c.b16 %v2642, %v2641
      %v2756 = vpack.c.b16 %v2644, %v2643
      %v2757 = vpack.c.b16 %v2646, %v2645
      %v2758 = vpack.c.b16 %v2648, %v2647
      %v2759 = vpack.c.b16 %v2650, %v2649
      %v2760 = vpack.c.b16 %v2652, %v2651
      %v2761 = vpack.c.b16 %v2654, %v2653
      %v2762 = vpack.c.b16 %v2656, %v2655
      %v2763 = vpack.c.b16 %v2658, %v2657
      %v2764 = vpack.c.b16 %v2660, %v2659
      %v2765 = vpack.c.b16 %v2662, %v2661
      %v2766 = vpack.c.b16 %v2664, %v2663
      %v2767 = vpack.c.b16 %v2666, %v2665
      %v2768 = vpack.c.b16 %v2668, %v2667
      %v2769 = vpack.c.b16 %v2670, %v2669
      %v2770 = vpack.c.b16 %v2672, %v2671
      %v2771 = vpack.c.b16 %v2674, %v2673
      %v2772 = vpack.c.b16 %v2676, %v2675
      %v2773 = vpack.c.b16 %v2678, %v2677
      %v2774 = vpack.c.b16 %v2680, %v2679
      %v2775 = vpack.c.b16 %v2682, %v2681
      %v2776 = vpack.c.b16 %v2684, %v2683
      %v2777 = vpack.c.b16 %v2686, %v2685
      %v2778 = vpack.c.b16 %v2688, %v2687
      %v2779 = vpack.c.b16 %v2690, %v2689
      %v2780 = vpack.c.b16 %v2692, %v2691
      %v2781 = vpack.c.b16 %v2694, %v2693
      %v2782 = vpack.c.b16 %v2696, %v2695
      %v2783 = vpack.c.b16 %v2698, %v2697
      %v2784 = vpack.c.b16 %v2700, %v2699
      %v2785 = vpack.c.b16 %v2702, %v2701
      %v2786 = vpack.c.b16 %v2704, %v2703
      %v2787 = vpack.c.b16 %v2706, %v2705
      %v2788 = vpack.c.b16 %v2708, %v2707
      %v2789 = vpack.c.b16 %v2710, %v2709
      %v2790 = vpack.c.b16 %v2712, %v2711
      %v2791 = vpack.c.b16 %v2714, %v2713
      %v2792 = vpack.c.b16 %v2716, %v2715
      %v2793 = vpack.c.b16 %v2718, %v2717
      %v2794 = vpack.c.b16 %v2720, %v2719
      %v2795 = vpack.c.b16 %v2722, %v2721
      %v2796 = vpack.c.b16 %v2724, %v2723
      %2869 = vmatprep.subr.bf16.mxu0 0
      %2870 = vmatpush1.bf16.msra.mxu0 %v2725
      %2871 = vmatprep.subr.bf16.mxu0 0
      %2872 = vmatpush1.bf16.msra.mxu0 %v2726
      %2873 = vmatprep.subr.bf16.mxu0 0
      %2874 = vmatpush1.bf16.msra.mxu0 %v2727
      %2875 = vmatprep.subr.bf16.mxu0 0
      %2876 = vmatpush1.bf16.msra.mxu0 %v2728
      %2877 = vmatprep.subr.bf16.mxu0 0
      %2878 = vmatpush1.bf16.msra.mxu0 %v2729
      %2879 = vmatprep.subr.bf16.mxu0 0
      %2880 = vmatpush1.bf16.msra.mxu0 %v2730
      %2881 = vmatprep.subr.bf16.mxu0 0
      %2882 = vmatpush1.bf16.msra.mxu0 %v2731
      %2883 = vmatprep.subr.bf16.mxu0 0
      %2884 = vmatpush1.bf16.msra.mxu0 %v2732
      %2885 = vmatprep.subr.bf16.mxu0 0
      %2886 = vmatpush1.bf16.msra.mxu0 %v2733
      %2887 = vmatprep.subr.bf16.mxu0 0
      %2888 = vmatpush1.bf16.msra.mxu0 %v2734
      %2889 = vmatprep.subr.bf16.mxu0 0
      %2890 = vmatpush1.bf16.msra.mxu0 %v2735
      %2891 = vmatprep.subr.bf16.mxu0 0
      %2892 = vmatpush1.bf16.msra.mxu0 %v2736
      %2893 = vmatprep.subr.bf16.mxu0 0
      %2894 = vmatpush1.bf16.msra.mxu0 %v2737
      %2895 = vmatprep.subr.bf16.mxu0 0
      %2896 = vmatpush1.bf16.msra.mxu0 %v2738
      %2897 = vmatprep.subr.bf16.mxu0 0
      %2898 = vmatpush1.bf16.msra.mxu0 %v2739
      %2899 = vmatprep.subr.bf16.mxu0 0
      %2900 = vmatpush1.bf16.msra.mxu0 %v2740
      %2901 = vmatprep.mubr.bf16.mxu0 %v1002
      %2902 = vmatmul.mubr.bf16.gmra.mrb[0].mxu0 %v985
      %v2903 = vpop.f32.mrb[0].mxu0
      %v2904 = vadd.f32 %v976, %v2903
      %v2905 = vpop.f32.mrb[0].mxu0
      %v2906 = vpop.f32.mrb[0].mxu0
      %v2907 = vadd.f32 %v976, %v2906
      %v2908 = vpop.f32.mrb[0].mxu0
      %2909 = vmatprep.mubr.bf16.mxu0 %v1124
      %2910 = vmatmul.mubr.bf16.gmra.mrb[0].mxu0 %v1115
      %v2911 = vpop.f32.mrb[0].mxu0
      %v2912 = vadd.f32 %v976, %v2911
      %v2913 = vpop.f32.mrb[0].mxu0
      %v2914 = vpop.f32.mrb[0].mxu0
      %v2915 = vadd.f32 %v976, %v2914
      %v2916 = vpop.f32.mrb[0].mxu0
      %2917 = vmatprep.mubr.bf16.mxu0 %v1184
      %2918 = vmatmul.mubr.bf16.gmra.mrb[0].mxu0 %v1183
      %v2919 = vpop.f32.mrb[0].mxu0
      %v2920 = vadd.f32 %v976, %v2919
      %v2921 = vpop.f32.mrb[0].mxu0
      %v2922 = vpop.f32.mrb[0].mxu0
      %v2923 = vadd.f32 %v976, %v2922
      %v2924 = vpop.f32.mrb[0].mxu0
      %2925 = vmatprep.mubr.bf16.mxu0 %v1094
      %2926 = vmatmul.mubr.bf16.gmra.mrb[0].mxu0 %v1077
      %v2927 = vpop.f32.mrb[0].mxu0
      %v2928 = vadd.f32 %v976, %v2927
      %v2929 = vpop.f32.mrb[0].mxu0
      %v2930 = vpop.f32.mrb[0].mxu0
      %v2931 = vadd.f32 %v976, %v2930
      %v2932 = vpop.f32.mrb[0].mxu0
      %2933 = vmatprep.mubr.bf16.mxu0 %v1173
      %2934 = vmatmul.mubr.bf16.gmra.mrb[0].mxu0 %v1164
      %v2935 = vpop.f32.mrb[0].mxu0
      %v2936 = vadd.f32 %v976, %v2935
      %v2937 = vpop.f32.mrb[0].mxu0
      %v2938 = vpop.f32.mrb[0].mxu0
      %v2939 = vadd.f32 %v976, %v2938
      %v2940 = vpop.f32.mrb[0].mxu0
      %2941 = vmatprep.mubr.bf16.mxu0 %v1225
      %2942 = vmatmul.mubr.bf16.gmra.mrb[0].mxu0 %v1216
      %v2943 = vpop.f32.mrb[0].mxu0
      %v2944 = vadd.f32 %v976, %v2943
      %v2945 = vpop.f32.mrb[0].mxu0
      %v2946 = vpop.f32.mrb[0].mxu0
      %v2947 = vadd.f32 %v976, %v2946
      %v2948 = vpop.f32.mrb[0].mxu0
      %2949 = vmatprep.mubr.bf16.mxu0 %v1274
      %2950 = vmatmul.mubr.bf16.gmra.mrb[0].mxu0 %v1265
      %v2951 = vpop.f32.mrb[0].mxu0
      %v2952 = vadd.f32 %v976, %v2951
      %v2953 = vpop.f32.mrb[0].mxu0
      %v2954 = vpop.f32.mrb[0].mxu0
      %v2955 = vadd.f32 %v976, %v2954
      %v2956 = vpop.f32.mrb[0].mxu0
      %2957 = vmatprep.mubr.bf16.mxu0 %v1323
      %2958 = vmatmul.mubr.bf16.gmra.mrb[0].mxu0 %v1314
      %v2959 = vpop.f32.mrb[0].mxu0
      %v2960 = vadd.f32 %v976, %v2959
      %v2961 = vpop.f32.mrb[0].mxu0
      %v2962 = vpop.f32.mrb[0].mxu0
      %v2963 = vadd.f32 %v976, %v2962
      %v2964 = vpop.f32.mrb[0].mxu0
      %2965 = vmatprep.mubr.bf16.mxu0 %v1372
      %2966 = vmatmul.mubr.bf16.gmra.mrb[0].mxu0 %v1363
      %v2967 = vpop.f32.mrb[0].mxu0
      %v2968 = vadd.f32 %v976, %v2967
      %v2969 = vpop.f32.mrb[0].mxu0
      %v2970 = vpop.f32.mrb[0].mxu0
      %v2971 = vadd.f32 %v976, %v2970
      %v2972 = vpop.f32.mrb[0].mxu0
      %2973 = vmatprep.mubr.bf16.mxu0 %v1421
      %2974 = vmatmul.mubr.bf16.gmra.mrb[0].mxu0 %v1412
      %v2975 = vpop.f32.mrb[0].mxu0
      %v2976 = vadd.f32 %v976, %v2975
      %v2977 = vpop.f32.mrb[0].mxu0
      %v2978 = vpop.f32.mrb[0].mxu0
      %v2979 = vadd.f32 %v976, %v2978
      %v2980 = vpop.f32.mrb[0].mxu0
      %2981 = vmatprep.mubr.bf16.mxu0 %v1470
      %2982 = vmatmul.mubr.bf16.gmra.mrb[0].mxu0 %v1461
      %v2983 = vpop.f32.mrb[0].mxu0
      %v2984 = vadd.f32 %v976, %v2983
      %v2985 = vpop.f32.mrb[0].mxu0
      %v2986 = vpop.f32.mrb[0].mxu0
      %v2987 = vadd.f32 %v976, %v2986
      %v2988 = vpop.f32.mrb[0].mxu0
      %2989 = vmatprep.mubr.bf16.mxu0 %v1519
      %2990 = vmatmul.mubr.bf16.gmra.mrb[0].mxu0 %v1510
      %v2991 = vpop.f32.mrb[0].mxu0
      %v2992 = vadd.f32 %v976, %v2991
      %v2993 = vpop.f32.mrb[0].mxu0
      %v2994 = vpop.f32.mrb[0].mxu0
      %v2995 = vadd.f32 %v976, %v2994
      %v2996 = vpop.f32.mrb[0].mxu0
      %2997 = vmatprep.mubr.bf16.mxu0 %v1568
      %2998 = vmatmul.mubr.bf16.gmra.mrb[0].mxu0 %v1559
      %v2999 = vpop.f32.mrb[0].mxu0
      %v3000 = vadd.f32 %v976, %v2999
      %v3001 = vpop.f32.mrb[0].mxu0
      %v3002 = vpop.f32.mrb[0].mxu0
      %v3003 = vadd.f32 %v976, %v3002
      %v3004 = vpop.f32.mrb[0].mxu0
      %3005 = vmatprep.mubr.bf16.mxu0 %v1617
      %3006 = vmatmul.mubr.bf16.gmra.mrb[0].mxu0 %v1608
      %v3007 = vpop.f32.mrb[0].mxu0
      %v3008 = vadd.f32 %v976, %v3007
      %v3009 = vpop.f32.mrb[0].mxu0
      %v3010 = vpop.f32.mrb[0].mxu0
      %v3011 = vadd.f32 %v976, %v3010
      %v3012 = vpop.f32.mrb[0].mxu0
      %3013 = vmatprep.mubr.bf16.mxu0 %v1666
      %3014 = vmatmul.mubr.bf16.gmra.mrb[0].mxu0 %v1657
      %v3015 = vpop.f32.mrb[0].mxu0
      %v3016 = vadd.f32 %v976, %v3015
      %v3017 = vpop.f32.mrb[0].mxu0
      %v3018 = vpop.f32.mrb[0].mxu0
      %v3019 = vadd.f32 %v976, %v3018
      %v3020 = vpop.f32.mrb[0].mxu0
      %3021 = vmatprep.mubr.bf16.mxu0 %v1715
      %3022 = vmatmul.mubr.bf16.gmra.mrb[0].mxu0 %v1706
      %v3023 = vpop.f32.mrb[0].mxu0
      %v3024 = vadd.f32 %v976, %v3023
      %v3025 = vpop.f32.mrb[0].mxu0
      %v3026 = vpop.f32.mrb[0].mxu0
      %v3027 = vadd.f32 %v976, %v3026
      %v3028 = vpop.f32.mrb[0].mxu0
      %3029 = vmatprep.mubr.bf16.mxu0 %v1764
      %3030 = vmatmul.mubr.bf16.gmra.mrb[0].mxu0 %v1755
      %v3031 = vpop.f32.mrb[0].mxu0
      %v3032 = vadd.f32 %v976, %v3031
      %v3033 = vpop.f32.mrb[0].mxu0
      %v3034 = vpop.f32.mrb[0].mxu0
      %v3035 = vadd.f32 %v976, %v3034
      %v3036 = vpop.f32.mrb[0].mxu0
      %3037 = vmatprep.mubr.bf16.mxu0 %v1813
      %3038 = vmatmul.mubr.bf16.gmra.mrb[0].mxu0 %v1804
      %v3039 = vpop.f32.mrb[0].mxu0
      %v3040 = vadd.f32 %v976, %v3039
      %v3041 = vpop.f32.mrb[0].mxu0
      %v3042 = vpop.f32.mrb[0].mxu0
      %v3043 = vadd.f32 %v976, %v3042
      %v3044 = vpop.f32.mrb[0].mxu0
      %3045 = vmatprep.mubr.bf16.mxu0 %v1862
      %3046 = vmatmul.mubr.bf16.gmra.mrb[0].mxu0 %v1853
      %v3047 = vpop.f32.mrb[0].mxu0
      %v3048 = vadd.f32 %v976, %v3047
      %v3049 = vpop.f32.mrb[0].mxu0
      %v3050 = vpop.f32.mrb[0].mxu0
      %v3051 = vadd.f32 %v976, %v3050
      %v3052 = vpop.f32.mrb[0].mxu0
      %3053 = vmatprep.mubr.bf16.mxu0 %v1911
      %3054 = vmatmul.mubr.bf16.gmra.mrb[0].mxu0 %v1902
      %v3055 = vpop.f32.mrb[0].mxu0
      %v3056 = vadd.f32 %v976, %v3055
      %v3057 = vpop.f32.mrb[0].mxu0
      %v3058 = vpop.f32.mrb[0].mxu0
      %v3059 = vadd.f32 %v976, %v3058
      %v3060 = vpop.f32.mrb[0].mxu0
      %3061 = vmatprep.mubr.bf16.mxu0 %v1960
      %3062 = vmatmul.mubr.bf16.gmra.mrb[0].mxu0 %v1951
      %v3063 = vpop.f32.mrb[0].mxu0
      %v3064 = vadd.f32 %v976, %v3063
      %v3065 = vpop.f32.mrb[0].mxu0
      %v3066 = vpop.f32.mrb[0].mxu0
      %v3067 = vadd.f32 %v976, %v3066
      %v3068 = vpop.f32.mrb[0].mxu0
      %3069 = vmatprep.mubr.bf16.mxu0 %v2009
      %3070 = vmatmul.mubr.bf16.gmra.mrb[0].mxu0 %v2000
      %v3071 = vpop.f32.mrb[0].mxu0
      %v3072 = vadd.f32 %v976, %v3071
      %v3073 = vpop.f32.mrb[0].mxu0
      %v3074 = vpop.f32.mrb[0].mxu0
      %v3075 = vadd.f32 %v976, %v3074
      %v3076 = vpop.f32.mrb[0].mxu0
      %3077 = vmatprep.mubr.bf16.mxu0 %v2058
      %3078 = vmatmul.mubr.bf16.gmra.mrb[0].mxu0 %v2049
      %v3079 = vpop.f32.mrb[0].mxu0
      %v3080 = vadd.f32 %v976, %v3079
      %v3081 = vpop.f32.mrb[0].mxu0
      %v3082 = vpop.f32.mrb[0].mxu0
      %v3083 = vadd.f32 %v976, %v3082
      %v3084 = vpop.f32.mrb[0].mxu0
      %3085 = vmatprep.mubr.bf16.mxu0 %v2223
      %3086 = vmatmul.mubr.bf16.gmra.mrb[0].mxu0 %v2098
      %v3087 = vpop.f32.mrb[0].mxu0
      %v3088 = vadd.f32 %v976, %v3087
      %v3089 = vpop.f32.mrb[0].mxu0
      %v3090 = vpop.f32.mrb[0].mxu0
      %v3091 = vadd.f32 %v976, %v3090
      %v3092 = vpop.f32.mrb[0].mxu0
      %3093 = vdwg.mxu0
      %3094 = vmatprep.subr.bf16.mxu0 0
      %3095 = vmatpush1.bf16.msra.mxu0 %v2741
      %3096 = vmatprep.subr.bf16.mxu0 0
      %3097 = vmatpush1.bf16.msra.mxu0 %v2742
      %3098 = vmatprep.subr.bf16.mxu0 0
      %3099 = vmatpush1.bf16.msra.mxu0 %v2743
      %3100 = vmatprep.subr.bf16.mxu0 0
      %3101 = vmatpush1.bf16.msra.mxu0 %v2744
      %3102 = vmatprep.subr.bf16.mxu0 0
      %3103 = vmatpush1.bf16.msra.mxu0 %v2745
      %3104 = vmatprep.subr.bf16.mxu0 0
      %3105 = vmatpush1.bf16.msra.mxu0 %v2746
      %3106 = vmatprep.subr.bf16.mxu0 0
      %3107 = vmatpush1.bf16.msra.mxu0 %v2747
      %3108 = vmatprep.subr.bf16.mxu0 0
      %3109 = vmatpush1.bf16.msra.mxu0 %v2748
      %3110 = vmatprep.subr.bf16.mxu0 0
      %3111 = vmatpush1.bf16.msra.mxu0 %v2749
      %3112 = vmatprep.subr.bf16.mxu0 0
      %3113 = vmatpush1.bf16.msra.mxu0 %v2750
      %3114 = vmatprep.subr.bf16.mxu0 0
      %3115 = vmatpush1.bf16.msra.mxu0 %v2751
      %3116 = vmatprep.subr.bf16.mxu0 0
      %3117 = vmatpush1.bf16.msra.mxu0 %v2752
      %3118 = vmatprep.subr.bf16.mxu0 0
      %3119 = vmatpush1.bf16.msra.mxu0 %v2753
      %3120 = vmatprep.subr.bf16.mxu0 0
      %3121 = vmatpush1.bf16.msra.mxu0 %v2754
      %3122 = vmatprep.subr.bf16.mxu0 0
      %3123 = vmatpush1.bf16.msra.mxu0 %v2755
      %3124 = vmatprep.subr.bf16.mxu0 0
      %3125 = vmatpush1.bf16.msra.mxu0 %v2756
      %3126 = vmatprep.mubr.bf16.mxu0 %v1036
      %3127 = vmatmul.mubr.bf16.gmra.mrb[0].mxu0 %v1019
      %v3128 = vpop.f32.mrb[0].mxu0
      %v3129 = vadd.f32 %v2904, %v3128
      %v3130 = vpop.f32.mrb[0].mxu0
      %v3131 = vpop.f32.mrb[0].mxu0
      %v3132 = vadd.f32 %v2907, %v3131
      %v3133 = vpop.f32.mrb[0].mxu0
      %3134 = vmatprep.mubr.bf16.mxu0 %v1142
      %3135 = vmatmul.mubr.bf16.gmra.mrb[0].mxu0 %v1133
      %v3136 = vpop.f32.mrb[0].mxu0
      %v3137 = vadd.f32 %v2912, %v3136
      %v3138 = vpop.f32.mrb[0].mxu0
      %v3139 = vpop.f32.mrb[0].mxu0
      %v3140 = vadd.f32 %v2915, %v3139
      %v3141 = vpop.f32.mrb[0].mxu0
      %3142 = vmatprep.mubr.bf16.mxu0 %v1194
      %3143 = vmatmul.mubr.bf16.gmra.mrb[0].mxu0 %v1185
      %v3144 = vpop.f32.mrb[0].mxu0
      %v3145 = vadd.f32 %v2920, %v3144
      %v3146 = vpop.f32.mrb[0].mxu0
      %v3147 = vpop.f32.mrb[0].mxu0
      %v3148 = vadd.f32 %v2923, %v3147
      %v3149 = vpop.f32.mrb[0].mxu0
      %3150 = vmatprep.mubr.bf16.mxu0 %v1243
      %3151 = vmatmul.mubr.bf16.gmra.mrb[0].mxu0 %v1111
      %v3152 = vpop.f32.mrb[0].mxu0
      %v3153 = vadd.f32 %v2928, %v3152
      %v3154 = vpop.f32.mrb[0].mxu0
      %v3155 = vpop.f32.mrb[0].mxu0
      %v3156 = vadd.f32 %v2931, %v3155
      %v3157 = vpop.f32.mrb[0].mxu0
      %3158 = vmatprep.mubr.bf16.mxu0 %v1292
      %3159 = vmatmul.mubr.bf16.gmra.mrb[0].mxu0 %v1182
      %v3160 = vpop.f32.mrb[0].mxu0
      %v3161 = vadd.f32 %v2936, %v3160
      %v3162 = vpop.f32.mrb[0].mxu0
      %v3163 = vpop.f32.mrb[0].mxu0
      %v3164 = vadd.f32 %v2939, %v3163
      %v3165 = vpop.f32.mrb[0].mxu0
      %3166 = vmatprep.mubr.bf16.mxu0 %v1341
      %3167 = vmatmul.mubr.bf16.gmra.mrb[0].mxu0 %v1234
      %v3168 = vpop.f32.mrb[0].mxu0
      %v3169 = vadd.f32 %v2944, %v3168
      %v3170 = vpop.f32.mrb[0].mxu0
      %v3171 = vpop.f32.mrb[0].mxu0
      %v3172 = vadd.f32 %v2947, %v3171
      %v3173 = vpop.f32.mrb[0].mxu0
      %3174 = vmatprep.mubr.bf16.mxu0 %v1390
      %3175 = vmatmul.mubr.bf16.gmra.mrb[0].mxu0 %v1283
      %v3176 = vpop.f32.mrb[0].mxu0
      %v3177 = vadd.f32 %v2952, %v3176
      %v3178 = vpop.f32.mrb[0].mxu0
      %v3179 = vpop.f32.mrb[0].mxu0
      %v3180 = vadd.f32 %v2955, %v3179
      %v3181 = vpop.f32.mrb[0].mxu0
      %3182 = vmatprep.mubr.bf16.mxu0 %v1439
      %3183 = vmatmul.mubr.bf16.gmra.mrb[0].mxu0 %v1332
      %v3184 = vpop.f32.mrb[0].mxu0
      %v3185 = vadd.f32 %v2960, %v3184
      %v3186 = vpop.f32.mrb[0].mxu0
      %v3187 = vpop.f32.mrb[0].mxu0
      %v3188 = vadd.f32 %v2963, %v3187
      %v3189 = vpop.f32.mrb[0].mxu0
      %3190 = vmatprep.mubr.bf16.mxu0 %v1488
      %3191 = vmatmul.mubr.bf16.gmra.mrb[0].mxu0 %v1381
      %v3192 = vpop.f32.mrb[0].mxu0
      %v3193 = vadd.f32 %v2968, %v3192
      %v3194 = vpop.f32.mrb[0].mxu0
      %v3195 = vpop.f32.mrb[0].mxu0
      %v3196 = vadd.f32 %v2971, %v3195
      %v3197 = vpop.f32.mrb[0].mxu0
      %3198 = vmatprep.mubr.bf16.mxu0 %v1537
      %3199 = vmatmul.mubr.bf16.gmra.mrb[0].mxu0 %v1430
      %v3200 = vpop.f32.mrb[0].mxu0
      %v3201 = vadd.f32 %v2976, %v3200
      %v3202 = vpop.f32.mrb[0].mxu0
      %v3203 = vpop.f32.mrb[0].mxu0
      %v3204 = vadd.f32 %v2979, %v3203
      %v3205 = vpop.f32.mrb[0].mxu0
      %3206 = vmatprep.mubr.bf16.mxu0 %v1586
      %3207 = vmatmul.mubr.bf16.gmra.mrb[0].mxu0 %v1479
      %v3208 = vpop.f32.mrb[0].mxu0
      %v3209 = vadd.f32 %v2984, %v3208
      %v3210 = vpop.f32.mrb[0].mxu0
      %v3211 = vpop.f32.mrb[0].mxu0
      %v3212 = vadd.f32 %v2987, %v3211
      %v3213 = vpop.f32.mrb[0].mxu0
      %3214 = vmatprep.mubr.bf16.mxu0 %v1635
      %3215 = vmatmul.mubr.bf16.gmra.mrb[0].mxu0 %v1528
      %v3216 = vpop.f32.mrb[0].mxu0
      %v3217 = vadd.f32 %v2992, %v3216
      %v3218 = vpop.f32.mrb[0].mxu0
      %v3219 = vpop.f32.mrb[0].mxu0
      %v3220 = vadd.f32 %v2995, %v3219
      %v3221 = vpop.f32.mrb[0].mxu0
      %3222 = vmatprep.mubr.bf16.mxu0 %v1684
      %3223 = vmatmul.mubr.bf16.gmra.mrb[0].mxu0 %v1577
      %v3224 = vpop.f32.mrb[0].mxu0
      %v3225 = vadd.f32 %v3000, %v3224
      %v3226 = vpop.f32.mrb[0].mxu0
      %v3227 = vpop.f32.mrb[0].mxu0
      %v3228 = vadd.f32 %v3003, %v3227
      %v3229 = vpop.f32.mrb[0].mxu0
      %3230 = vmatprep.mubr.bf16.mxu0 %v1733
      %3231 = vmatmul.mubr.bf16.gmra.mrb[0].mxu0 %v1626
      %v3232 = vpop.f32.mrb[0].mxu0
      %v3233 = vadd.f32 %v3008, %v3232
      %v3234 = vpop.f32.mrb[0].mxu0
      %v3235 = vpop.f32.mrb[0].mxu0
      %v3236 = vadd.f32 %v3011, %v3235
      %v3237 = vpop.f32.mrb[0].mxu0
      %3238 = vmatprep.mubr.bf16.mxu0 %v1782
      %3239 = vmatmul.mubr.bf16.gmra.mrb[0].mxu0 %v1675
      %v3240 = vpop.f32.mrb[0].mxu0
      %v3241 = vadd.f32 %v3016, %v3240
      %v3242 = vpop.f32.mrb[0].mxu0
      %v3243 = vpop.f32.mrb[0].mxu0
      %v3244 = vadd.f32 %v3019, %v3243
      %v3245 = vpop.f32.mrb[0].mxu0
      %3246 = vmatprep.mubr.bf16.mxu0 %v1831
      %3247 = vmatmul.mubr.bf16.gmra.mrb[0].mxu0 %v1724
      %v3248 = vpop.f32.mrb[0].mxu0
      %v3249 = vadd.f32 %v3024, %v3248
      %v3250 = vpop.f32.mrb[0].mxu0
      %v3251 = vpop.f32.mrb[0].mxu0
      %v3252 = vadd.f32 %v3027, %v3251
      %v3253 = vpop.f32.mrb[0].mxu0
      %3254 = vmatprep.mubr.bf16.mxu0 %v1880
      %3255 = vmatmul.mubr.bf16.gmra.mrb[0].mxu0 %v1773
      %v3256 = vpop.f32.mrb[0].mxu0
      %v3257 = vadd.f32 %v3032, %v3256
      %v3258 = vpop.f32.mrb[0].mxu0
      %v3259 = vpop.f32.mrb[0].mxu0
      %v3260 = vadd.f32 %v3035, %v3259
      %v3261 = vpop.f32.mrb[0].mxu0
      %3262 = vmatprep.mubr.bf16.mxu0 %v1929
      %3263 = vmatmul.mubr.bf16.gmra.mrb[0].mxu0 %v1822
      %v3264 = vpop.f32.mrb[0].mxu0
      %v3265 = vadd.f32 %v3040, %v3264
      %v3266 = vpop.f32.mrb[0].mxu0
      %v3267 = vpop.f32.mrb[0].mxu0
      %v3268 = vadd.f32 %v3043, %v3267
      %v3269 = vpop.f32.mrb[0].mxu0
      %3270 = vmatprep.mubr.bf16.mxu0 %v1978
      %3271 = vmatmul.mubr.bf16.gmra.mrb[0].mxu0 %v1871
      %v3272 = vpop.f32.mrb[0].mxu0
      %v3273 = vadd.f32 %v3048, %v3272
      %v3274 = vpop.f32.mrb[0].mxu0
      %v3275 = vpop.f32.mrb[0].mxu0
      %v3276 = vadd.f32 %v3051, %v3275
      %v3277 = vpop.f32.mrb[0].mxu0
      %3278 = vmatprep.mubr.bf16.mxu0 %v2027
      %3279 = vmatmul.mubr.bf16.gmra.mrb[0].mxu0 %v1920
      %v3280 = vpop.f32.mrb[0].mxu0
      %v3281 = vadd.f32 %v3056, %v3280
      %v3282 = vpop.f32.mrb[0].mxu0
      %v3283 = vpop.f32.mrb[0].mxu0
      %v3284 = vadd.f32 %v3059, %v3283
      %v3285 = vpop.f32.mrb[0].mxu0
      %3286 = vmatprep.mubr.bf16.mxu0 %v2076
      %3287 = vmatmul.mubr.bf16.gmra.mrb[0].mxu0 %v1969
      %v3288 = vpop.f32.mrb[0].mxu0
      %v3289 = vadd.f32 %v3064, %v3288
      %v3290 = vpop.f32.mrb[0].mxu0
      %v3291 = vpop.f32.mrb[0].mxu0
      %v3292 = vadd.f32 %v3067, %v3291
      %v3293 = vpop.f32.mrb[0].mxu0
      %3294 = vmatprep.mubr.bf16.mxu0 %v2125
      %3295 = vmatmul.mubr.bf16.gmra.mrb[0].mxu0 %v2018
      %v3296 = vpop.f32.mrb[0].mxu0
      %v3297 = vadd.f32 %v3072, %v3296
      %v3298 = vpop.f32.mrb[0].mxu0
      %v3299 = vpop.f32.mrb[0].mxu0
      %v3300 = vadd.f32 %v3075, %v3299
      %v3301 = vpop.f32.mrb[0].mxu0
      %3302 = vmatprep.mubr.bf16.mxu0 %v2174
      %3303 = vmatmul.mubr.bf16.gmra.mrb[0].mxu0 %v2067
      %v3304 = vpop.f32.mrb[0].mxu0
      %v3305 = vadd.f32 %v3080, %v3304
      %v3306 = vpop.f32.mrb[0].mxu0
      %v3307 = vpop.f32.mrb[0].mxu0
      %v3308 = vadd.f32 %v3083, %v3307
      %v3309 = vpop.f32.mrb[0].mxu0
      %3310 = vmatprep.mubr.bf16.mxu0 %v2241
      %3311 = vmatmul.mubr.bf16.gmra.mrb[0].mxu0 %v2232
      %v3312 = vpop.f32.mrb[0].mxu0
      %v3313 = vadd.f32 %v3088, %v3312
      %v3314 = vpop.f32.mrb[0].mxu0
      %v3315 = vpop.f32.mrb[0].mxu0
      %v3316 = vadd.f32 %v3091, %v3315
      %v3317 = vpop.f32.mrb[0].mxu0
      %3318 = vdwg.mxu0
      %3319 = vmatprep.subr.bf16.mxu0 0
      %3320 = vmatpush1.bf16.msra.mxu0 %v2757
      %3321 = vmatprep.subr.bf16.mxu0 0
      %3322 = vmatpush1.bf16.msra.mxu0 %v2758
      %3323 = vmatprep.subr.bf16.mxu0 0
      %3324 = vmatpush1.bf16.msra.mxu0 %v2759
      %3325 = vmatprep.subr.bf16.mxu0 0
      %3326 = vmatpush1.bf16.msra.mxu0 %v2760
      %3327 = vmatprep.subr.bf16.mxu0 0
      %3328 = vmatpush1.bf16.msra.mxu0 %v2761
      %3329 = vmatprep.subr.bf16.mxu0 0
      %3330 = vmatpush1.bf16.msra.mxu0 %v2762
      %3331 = vmatprep.subr.bf16.mxu0 0
      %3332 = vmatpush1.bf16.msra.mxu0 %v2763
      %3333 = vmatprep.subr.bf16.mxu0 0
      %3334 = vmatpush1.bf16.msra.mxu0 %v2764
      %3335 = vmatprep.subr.bf16.mxu0 0
      %3336 = vmatpush1.bf16.msra.mxu0 %v2765
      %3337 = vmatprep.subr.bf16.mxu0 0
      %3338 = vmatpush1.bf16.msra.mxu0 %v2766
      %3339 = vmatprep.subr.bf16.mxu0 0
      %3340 = vmatpush1.bf16.msra.mxu0 %v2767
      %3341 = vmatprep.subr.bf16.mxu0 0
      %3342 = vmatpush1.bf16.msra.mxu0 %v2768
      %3343 = vmatprep.subr.bf16.mxu0 0
      %3344 = vmatpush1.bf16.msra.mxu0 %v2769
      %3345 = vmatprep.subr.bf16.mxu0 0
      %3346 = vmatpush1.bf16.msra.mxu0 %v2770
      %3347 = vmatprep.subr.bf16.mxu0 0
      %3348 = vmatpush1.bf16.msra.mxu0 %v2771
      %3349 = vmatprep.subr.bf16.mxu0 0
      %3350 = vmatpush1.bf16.msra.mxu0 %v2772
      %3351 = vmatprep.mubr.bf16.mxu0 %v1070
      %3352 = vmatmul.mubr.bf16.gmra.mrb[0].mxu0 %v1053
      %v3353 = vpop.f32.mrb[0].mxu0
      %v3354 = vadd.f32 %v3129, %v3353
      %v3355 = vpop.f32.mrb[0].mxu0
      %v3356 = vpop.f32.mrb[0].mxu0
      %v3357 = vadd.f32 %v3132, %v3356
      %v3358 = vpop.f32.mrb[0].mxu0
      %3359 = vmatprep.mubr.bf16.mxu0 %v1160
      %3360 = vmatmul.mubr.bf16.gmra.mrb[0].mxu0 %v1151
      %v3361 = vpop.f32.mrb[0].mxu0
      %v3362 = vadd.f32 %v3137, %v3361
      %v3363 = vpop.f32.mrb[0].mxu0
      %v3364 = vpop.f32.mrb[0].mxu0
      %v3365 = vadd.f32 %v3140, %v3364
      %v3366 = vpop.f32.mrb[0].mxu0
      %3367 = vmatprep.mubr.bf16.mxu0 %v1212
      %3368 = vmatmul.mubr.bf16.gmra.mrb[0].mxu0 %v1203
      %v3369 = vpop.f32.mrb[0].mxu0
      %v3370 = vadd.f32 %v3145, %v3369
      %v3371 = vpop.f32.mrb[0].mxu0
      %v3372 = vpop.f32.mrb[0].mxu0
      %v3373 = vadd.f32 %v3148, %v3372
      %v3374 = vpop.f32.mrb[0].mxu0
      %3375 = vmatprep.mubr.bf16.mxu0 %v1261
      %3376 = vmatmul.mubr.bf16.gmra.mrb[0].mxu0 %v1252
      %v3377 = vpop.f32.mrb[0].mxu0
      %v3378 = vadd.f32 %v3153, %v3377
      %v3379 = vpop.f32.mrb[0].mxu0
      %v3380 = vpop.f32.mrb[0].mxu0
      %v3381 = vadd.f32 %v3156, %v3380
      %v3382 = vpop.f32.mrb[0].mxu0
      %3383 = vmatprep.mubr.bf16.mxu0 %v1310
      %3384 = vmatmul.mubr.bf16.gmra.mrb[0].mxu0 %v1301
      %v3385 = vpop.f32.mrb[0].mxu0
      %v3386 = vadd.f32 %v3161, %v3385
      %v3387 = vpop.f32.mrb[0].mxu0
      %v3388 = vpop.f32.mrb[0].mxu0
      %v3389 = vadd.f32 %v3164, %v3388
      %v3390 = vpop.f32.mrb[0].mxu0
      %3391 = vmatprep.mubr.bf16.mxu0 %v1359
      %3392 = vmatmul.mubr.bf16.gmra.mrb[0].mxu0 %v1350
      %v3393 = vpop.f32.mrb[0].mxu0
      %v3394 = vadd.f32 %v3169, %v3393
      %v3395 = vpop.f32.mrb[0].mxu0
      %v3396 = vpop.f32.mrb[0].mxu0
      %v3397 = vadd.f32 %v3172, %v3396
      %v3398 = vpop.f32.mrb[0].mxu0
      %3399 = vmatprep.mubr.bf16.mxu0 %v1408
      %3400 = vmatmul.mubr.bf16.gmra.mrb[0].mxu0 %v1399
      %v3401 = vpop.f32.mrb[0].mxu0
      %v3402 = vadd.f32 %v3177, %v3401
      %v3403 = vpop.f32.mrb[0].mxu0
      %v3404 = vpop.f32.mrb[0].mxu0
      %v3405 = vadd.f32 %v3180, %v3404
      %v3406 = vpop.f32.mrb[0].mxu0
      %3407 = vmatprep.mubr.bf16.mxu0 %v1457
      %3408 = vmatmul.mubr.bf16.gmra.mrb[0].mxu0 %v1448
      %v3409 = vpop.f32.mrb[0].mxu0
      %v3410 = vadd.f32 %v3185, %v3409
      %v3411 = vpop.f32.mrb[0].mxu0
      %v3412 = vpop.f32.mrb[0].mxu0
      %v3413 = vadd.f32 %v3188, %v3412
      %v3414 = vpop.f32.mrb[0].mxu0
      %3415 = vmatprep.mubr.bf16.mxu0 %v1506
      %3416 = vmatmul.mubr.bf16.gmra.mrb[0].mxu0 %v1497
      %v3417 = vpop.f32.mrb[0].mxu0
      %v3418 = vadd.f32 %v3193, %v3417
      %v3419 = vpop.f32.mrb[0].mxu0
      %v3420 = vpop.f32.mrb[0].mxu0
      %v3421 = vadd.f32 %v3196, %v3420
      %v3422 = vpop.f32.mrb[0].mxu0
      %3423 = vmatprep.mubr.bf16.mxu0 %v1555
      %3424 = vmatmul.mubr.bf16.gmra.mrb[0].mxu0 %v1546
      %v3425 = vpop.f32.mrb[0].mxu0
      %v3426 = vadd.f32 %v3201, %v3425
      %v3427 = vpop.f32.mrb[0].mxu0
      %v3428 = vpop.f32.mrb[0].mxu0
      %v3429 = vadd.f32 %v3204, %v3428
      %v3430 = vpop.f32.mrb[0].mxu0
      %3431 = vmatprep.mubr.bf16.mxu0 %v1604
      %3432 = vmatmul.mubr.bf16.gmra.mrb[0].mxu0 %v1595
      %v3433 = vpop.f32.mrb[0].mxu0
      %v3434 = vadd.f32 %v3209, %v3433
      %v3435 = vpop.f32.mrb[0].mxu0
      %v3436 = vpop.f32.mrb[0].mxu0
      %v3437 = vadd.f32 %v3212, %v3436
      %v3438 = vpop.f32.mrb[0].mxu0
      %3439 = vmatprep.mubr.bf16.mxu0 %v1653
      %3440 = vmatmul.mubr.bf16.gmra.mrb[0].mxu0 %v1644
      %v3441 = vpop.f32.mrb[0].mxu0
      %v3442 = vadd.f32 %v3217, %v3441
      %v3443 = vpop.f32.mrb[0].mxu0
      %v3444 = vpop.f32.mrb[0].mxu0
      %v3445 = vadd.f32 %v3220, %v3444
      %v3446 = vpop.f32.mrb[0].mxu0
      %3447 = vmatprep.mubr.bf16.mxu0 %v1702
      %3448 = vmatmul.mubr.bf16.gmra.mrb[0].mxu0 %v1693
      %v3449 = vpop.f32.mrb[0].mxu0
      %v3450 = vadd.f32 %v3225, %v3449
      %v3451 = vpop.f32.mrb[0].mxu0
      %v3452 = vpop.f32.mrb[0].mxu0
      %v3453 = vadd.f32 %v3228, %v3452
      %v3454 = vpop.f32.mrb[0].mxu0
      %3455 = vmatprep.mubr.bf16.mxu0 %v1751
      %3456 = vmatmul.mubr.bf16.gmra.mrb[0].mxu0 %v1742
      %v3457 = vpop.f32.mrb[0].mxu0
      %v3458 = vadd.f32 %v3233, %v3457
      %v3459 = vpop.f32.mrb[0].mxu0
      %v3460 = vpop.f32.mrb[0].mxu0
      %v3461 = vadd.f32 %v3236, %v3460
      %v3462 = vpop.f32.mrb[0].mxu0
      %3463 = vmatprep.mubr.bf16.mxu0 %v1800
      %3464 = vmatmul.mubr.bf16.gmra.mrb[0].mxu0 %v1791
      %v3465 = vpop.f32.mrb[0].mxu0
      %v3466 = vadd.f32 %v3241, %v3465
      %v3467 = vpop.f32.mrb[0].mxu0
      %v3468 = vpop.f32.mrb[0].mxu0
      %v3469 = vadd.f32 %v3244, %v3468
      %v3470 = vpop.f32.mrb[0].mxu0
      %3471 = vmatprep.mubr.bf16.mxu0 %v1849
      %3472 = vmatmul.mubr.bf16.gmra.mrb[0].mxu0 %v1840
      %v3473 = vpop.f32.mrb[0].mxu0
      %v3474 = vadd.f32 %v3249, %v3473
      %v3475 = vpop.f32.mrb[0].mxu0
      %v3476 = vpop.f32.mrb[0].mxu0
      %v3477 = vadd.f32 %v3252, %v3476
      %v3478 = vpop.f32.mrb[0].mxu0
      %3479 = vmatprep.mubr.bf16.mxu0 %v1898
      %3480 = vmatmul.mubr.bf16.gmra.mrb[0].mxu0 %v1889
      %v3481 = vpop.f32.mrb[0].mxu0
      %v3482 = vadd.f32 %v3257, %v3481
      %v3483 = vpop.f32.mrb[0].mxu0
      %v3484 = vpop.f32.mrb[0].mxu0
      %v3485 = vadd.f32 %v3260, %v3484
      %v3486 = vpop.f32.mrb[0].mxu0
      %3487 = vmatprep.mubr.bf16.mxu0 %v1947
      %3488 = vmatmul.mubr.bf16.gmra.mrb[0].mxu0 %v1938
      %v3489 = vpop.f32.mrb[0].mxu0
      %v3490 = vadd.f32 %v3265, %v3489
      %v3491 = vpop.f32.mrb[0].mxu0
      %v3492 = vpop.f32.mrb[0].mxu0
      %v3493 = vadd.f32 %v3268, %v3492
      %v3494 = vpop.f32.mrb[0].mxu0
      %3495 = vmatprep.mubr.bf16.mxu0 %v1996
      %3496 = vmatmul.mubr.bf16.gmra.mrb[0].mxu0 %v1987
      %v3497 = vpop.f32.mrb[0].mxu0
      %v3498 = vadd.f32 %v3273, %v3497
      %v3499 = vpop.f32.mrb[0].mxu0
      %v3500 = vpop.f32.mrb[0].mxu0
      %v3501 = vadd.f32 %v3276, %v3500
      %v3502 = vpop.f32.mrb[0].mxu0
      %3503 = vmatprep.mubr.bf16.mxu0 %v2045
      %3504 = vmatmul.mubr.bf16.gmra.mrb[0].mxu0 %v2036
      %v3505 = vpop.f32.mrb[0].mxu0
      %v3506 = vadd.f32 %v3281, %v3505
      %v3507 = vpop.f32.mrb[0].mxu0
      %v3508 = vpop.f32.mrb[0].mxu0
      %v3509 = vadd.f32 %v3284, %v3508
      %v3510 = vpop.f32.mrb[0].mxu0
      %3511 = vmatprep.mubr.bf16.mxu0 %v2094
      %3512 = vmatmul.mubr.bf16.gmra.mrb[0].mxu0 %v2085
      %v3513 = vpop.f32.mrb[0].mxu0
      %v3514 = vadd.f32 %v3289, %v3513
      %v3515 = vpop.f32.mrb[0].mxu0
      %v3516 = vpop.f32.mrb[0].mxu0
      %v3517 = vadd.f32 %v3292, %v3516
      %v3518 = vpop.f32.mrb[0].mxu0
      %3519 = vmatprep.mubr.bf16.mxu0 %v2143
      %3520 = vmatmul.mubr.bf16.gmra.mrb[0].mxu0 %v2134
      %v3521 = vpop.f32.mrb[0].mxu0
      %v3522 = vadd.f32 %v3297, %v3521
      %v3523 = vpop.f32.mrb[0].mxu0
      %v3524 = vpop.f32.mrb[0].mxu0
      %v3525 = vadd.f32 %v3300, %v3524
      %v3526 = vpop.f32.mrb[0].mxu0
      %3527 = vmatprep.mubr.bf16.mxu0 %v2192
      %3528 = vmatmul.mubr.bf16.gmra.mrb[0].mxu0 %v2183
      %v3529 = vpop.f32.mrb[0].mxu0
      %v3530 = vadd.f32 %v3305, %v3529
      %v3531 = vpop.f32.mrb[0].mxu0
      %v3532 = vpop.f32.mrb[0].mxu0
      %v3533 = vadd.f32 %v3308, %v3532
      %v3534 = vpop.f32.mrb[0].mxu0
      %3535 = vmatprep.mubr.bf16.mxu0 %v2259
      %3536 = vmatmul.mubr.bf16.gmra.mrb[0].mxu0 %v2250
      %v3537 = vpop.f32.mrb[0].mxu0
      %v3538 = vadd.f32 %v3313, %v3537
      %v3539 = vpop.f32.mrb[0].mxu0
      %v3540 = vpop.f32.mrb[0].mxu0
      %v3541 = vadd.f32 %v3316, %v3540
      %v3542 = vpop.f32.mrb[0].mxu0
      %3543 = vdwg.mxu0
      %3544 = vmatprep.subr.bf16.mxu0 0
      %3545 = vmatpush1.bf16.msra.mxu0 %v2773
      %3546 = vmatprep.subr.bf16.mxu0 0
      %3547 = vmatpush1.bf16.msra.mxu0 %v2774
      %3548 = vmatprep.subr.bf16.mxu0 0
      %3549 = vmatpush1.bf16.msra.mxu0 %v2775
      %3550 = vmatprep.subr.bf16.mxu0 0
      %3551 = vmatpush1.bf16.msra.mxu0 %v2776
      %3552 = vmatprep.subr.bf16.mxu0 0
      %3553 = vmatpush1.bf16.msra.mxu0 %v2777
      %3554 = vmatprep.subr.bf16.mxu0 0
      %3555 = vmatpush1.bf16.msra.mxu0 %v2778
      %3556 = vmatprep.subr.bf16.mxu0 0
      %3557 = vmatpush1.bf16.msra.mxu0 %v2779
      %3558 = vmatprep.subr.bf16.mxu0 0
      %3559 = vmatpush1.bf16.msra.mxu0 %v2780
      %3560 = vmatprep.subr.bf16.mxu0 0
      %3561 = vmatpush1.bf16.msra.mxu0 %v2781
      %3562 = vmatprep.subr.bf16.mxu0 0
      %3563 = vmatpush1.bf16.msra.mxu0 %v2782
      %3564 = vmatprep.subr.bf16.mxu0 0
      %3565 = vmatpush1.bf16.msra.mxu0 %v2783
      %3566 = vmatprep.subr.bf16.mxu0 0
      %3567 = vmatpush1.bf16.msra.mxu0 %v2784
      %3568 = vmatprep.subr.bf16.mxu0 0
      %3569 = vmatpush1.bf16.msra.mxu0 %v2785
      %3570 = vmatprep.subr.bf16.mxu0 0
      %3571 = vmatpush1.bf16.msra.mxu0 %v2786
      %3572 = vmatprep.subr.bf16.mxu0 0
      %3573 = vmatpush1.bf16.msra.mxu0 %v2787
      %3574 = vmatprep.subr.bf16.mxu0 0
      %3575 = vmatpush1.bf16.msra.mxu0 %v2788
      %3576 = vmatprep.mubr.bf16.mxu0 %v1094
      %3577 = vmatmul.mubr.bf16.gmra.mrb[0].mxu0 %v1077
      %v3578 = vpop.f32.mrb[0].mxu0
      %v3579 = vadd.f32 %v3354, %v3578
      %v3580 = vpop.f32.mrb[0].mxu0
      %v3581 = vpop.f32.mrb[0].mxu0
      %v3582 = vadd.f32 %v3357, %v3581
      %v3583 = vpop.f32.mrb[0].mxu0
      %3584 = vmatprep.mubr.bf16.mxu0 %v1173
      %3585 = vmatmul.mubr.bf16.gmra.mrb[0].mxu0 %v1164
      %v3586 = vpop.f32.mrb[0].mxu0
      %v3587 = vadd.f32 %v3362, %v3586
      %v3588 = vpop.f32.mrb[0].mxu0
      %v3589 = vpop.f32.mrb[0].mxu0
      %v3590 = vadd.f32 %v3365, %v3589
      %v3591 = vpop.f32.mrb[0].mxu0
      %3592 = vmatprep.mubr.bf16.mxu0 %v1225
      %3593 = vmatmul.mubr.bf16.gmra.mrb[0].mxu0 %v1216
      %v3594 = vpop.f32.mrb[0].mxu0
      %v3595 = vadd.f32 %v3370, %v3594
      %v3596 = vpop.f32.mrb[0].mxu0
      %v3597 = vpop.f32.mrb[0].mxu0
      %v3598 = vadd.f32 %v3373, %v3597
      %v3599 = vpop.f32.mrb[0].mxu0
      %3600 = vmatprep.mubr.bf16.mxu0 %v1274
      %3601 = vmatmul.mubr.bf16.gmra.mrb[0].mxu0 %v1265
      %v3602 = vpop.f32.mrb[0].mxu0
      %v3603 = vadd.f32 %v3378, %v3602
      %v3604 = vpop.f32.mrb[0].mxu0
      %v3605 = vpop.f32.mrb[0].mxu0
      %v3606 = vadd.f32 %v3381, %v3605
      %v3607 = vpop.f32.mrb[0].mxu0
      %3608 = vmatprep.mubr.bf16.mxu0 %v1323
      %3609 = vmatmul.mubr.bf16.gmra.mrb[0].mxu0 %v1314
      %v3610 = vpop.f32.mrb[0].mxu0
      %v3611 = vadd.f32 %v3386, %v3610
      %v3612 = vpop.f32.mrb[0].mxu0
      %v3613 = vpop.f32.mrb[0].mxu0
      %v3614 = vadd.f32 %v3389, %v3613
      %v3615 = vpop.f32.mrb[0].mxu0
      %3616 = vmatprep.mubr.bf16.mxu0 %v1372
      %3617 = vmatmul.mubr.bf16.gmra.mrb[0].mxu0 %v1363
      %v3618 = vpop.f32.mrb[0].mxu0
      %v3619 = vadd.f32 %v3394, %v3618
      %v3620 = vpop.f32.mrb[0].mxu0
      %v3621 = vpop.f32.mrb[0].mxu0
      %v3622 = vadd.f32 %v3397, %v3621
      %v3623 = vpop.f32.mrb[0].mxu0
      %3624 = vmatprep.mubr.bf16.mxu0 %v1421
      %3625 = vmatmul.mubr.bf16.gmra.mrb[0].mxu0 %v1412
      %v3626 = vpop.f32.mrb[0].mxu0
      %v3627 = vadd.f32 %v3402, %v3626
      %v3628 = vpop.f32.mrb[0].mxu0
      %v3629 = vpop.f32.mrb[0].mxu0
      %v3630 = vadd.f32 %v3405, %v3629
      %v3631 = vpop.f32.mrb[0].mxu0
      %3632 = vmatprep.mubr.bf16.mxu0 %v1470
      %3633 = vmatmul.mubr.bf16.gmra.mrb[0].mxu0 %v1461
      %v3634 = vpop.f32.mrb[0].mxu0
      %v3635 = vadd.f32 %v3410, %v3634
      %v3636 = vpop.f32.mrb[0].mxu0
      %v3637 = vpop.f32.mrb[0].mxu0
      %v3638 = vadd.f32 %v3413, %v3637
      %v3639 = vpop.f32.mrb[0].mxu0
      %3640 = vmatprep.mubr.bf16.mxu0 %v1519
      %3641 = vmatmul.mubr.bf16.gmra.mrb[0].mxu0 %v1510
      %v3642 = vpop.f32.mrb[0].mxu0
      %v3643 = vadd.f32 %v3418, %v3642
      %v3644 = vpop.f32.mrb[0].mxu0
      %v3645 = vpop.f32.mrb[0].mxu0
      %v3646 = vadd.f32 %v3421, %v3645
      %v3647 = vpop.f32.mrb[0].mxu0
      %3648 = vmatprep.mubr.bf16.mxu0 %v1568
      %3649 = vmatmul.mubr.bf16.gmra.mrb[0].mxu0 %v1559
      %v3650 = vpop.f32.mrb[0].mxu0
      %v3651 = vadd.f32 %v3426, %v3650
      %v3652 = vpop.f32.mrb[0].mxu0
      %v3653 = vpop.f32.mrb[0].mxu0
      %v3654 = vadd.f32 %v3429, %v3653
      %v3655 = vpop.f32.mrb[0].mxu0
      %3656 = vmatprep.mubr.bf16.mxu0 %v1617
      %3657 = vmatmul.mubr.bf16.gmra.mrb[0].mxu0 %v1608
      %v3658 = vpop.f32.mrb[0].mxu0
      %v3659 = vadd.f32 %v3434, %v3658
      %v3660 = vpop.f32.mrb[0].mxu0
      %v3661 = vpop.f32.mrb[0].mxu0
      %v3662 = vadd.f32 %v3437, %v3661
      %v3663 = vpop.f32.mrb[0].mxu0
      %3664 = vmatprep.mubr.bf16.mxu0 %v1666
      %3665 = vmatmul.mubr.bf16.gmra.mrb[0].mxu0 %v1657
      %v3666 = vpop.f32.mrb[0].mxu0
      %v3667 = vadd.f32 %v3442, %v3666
      %v3668 = vpop.f32.mrb[0].mxu0
      %v3669 = vpop.f32.mrb[0].mxu0
      %v3670 = vadd.f32 %v3445, %v3669
      %v3671 = vpop.f32.mrb[0].mxu0
      %3672 = vmatprep.mubr.bf16.mxu0 %v1715
      %3673 = vmatmul.mubr.bf16.gmra.mrb[0].mxu0 %v1706
      %v3674 = vpop.f32.mrb[0].mxu0
      %v3675 = vadd.f32 %v3450, %v3674
      %v3676 = vpop.f32.mrb[0].mxu0
      %v3677 = vpop.f32.mrb[0].mxu0
      %v3678 = vadd.f32 %v3453, %v3677
      %v3679 = vpop.f32.mrb[0].mxu0
      %3680 = vmatprep.mubr.bf16.mxu0 %v1764
      %3681 = vmatmul.mubr.bf16.gmra.mrb[0].mxu0 %v1755
      %v3682 = vpop.f32.mrb[0].mxu0
      %v3683 = vadd.f32 %v3458, %v3682
      %v3684 = vpop.f32.mrb[0].mxu0
      %v3685 = vpop.f32.mrb[0].mxu0
      %v3686 = vadd.f32 %v3461, %v3685
      %v3687 = vpop.f32.mrb[0].mxu0
      %3688 = vmatprep.mubr.bf16.mxu0 %v1813
      %3689 = vmatmul.mubr.bf16.gmra.mrb[0].mxu0 %v1804
      %v3690 = vpop.f32.mrb[0].mxu0
      %v3691 = vadd.f32 %v3466, %v3690
      %v3692 = vpop.f32.mrb[0].mxu0
      %v3693 = vpop.f32.mrb[0].mxu0
      %v3694 = vadd.f32 %v3469, %v3693
      %v3695 = vpop.f32.mrb[0].mxu0
      %3696 = vmatprep.mubr.bf16.mxu0 %v1862
      %3697 = vmatmul.mubr.bf16.gmra.mrb[0].mxu0 %v1853
      %v3698 = vpop.f32.mrb[0].mxu0
      %v3699 = vadd.f32 %v3474, %v3698
      %v3700 = vpop.f32.mrb[0].mxu0
      %v3701 = vpop.f32.mrb[0].mxu0
      %v3702 = vadd.f32 %v3477, %v3701
      %v3703 = vpop.f32.mrb[0].mxu0
      %3704 = vmatprep.mubr.bf16.mxu0 %v1911
      %3705 = vmatmul.mubr.bf16.gmra.mrb[0].mxu0 %v1902
      %v3706 = vpop.f32.mrb[0].mxu0
      %v3707 = vadd.f32 %v3482, %v3706
      %v3708 = vpop.f32.mrb[0].mxu0
      %v3709 = vpop.f32.mrb[0].mxu0
      %v3710 = vadd.f32 %v3485, %v3709
      %v3711 = vpop.f32.mrb[0].mxu0
      %3712 = vmatprep.mubr.bf16.mxu0 %v1960
      %3713 = vmatmul.mubr.bf16.gmra.mrb[0].mxu0 %v1951
      %v3714 = vpop.f32.mrb[0].mxu0
      %v3715 = vadd.f32 %v3490, %v3714
      %v3716 = vpop.f32.mrb[0].mxu0
      %v3717 = vpop.f32.mrb[0].mxu0
      %v3718 = vadd.f32 %v3493, %v3717
      %v3719 = vpop.f32.mrb[0].mxu0
      %3720 = vmatprep.mubr.bf16.mxu0 %v2009
      %3721 = vmatmul.mubr.bf16.gmra.mrb[0].mxu0 %v2000
      %v3722 = vpop.f32.mrb[0].mxu0
      %v3723 = vadd.f32 %v3498, %v3722
      %v3724 = vpop.f32.mrb[0].mxu0
      %v3725 = vpop.f32.mrb[0].mxu0
      %v3726 = vadd.f32 %v3501, %v3725
      %v3727 = vpop.f32.mrb[0].mxu0
      %3728 = vmatprep.mubr.bf16.mxu0 %v2058
      %3729 = vmatmul.mubr.bf16.gmra.mrb[0].mxu0 %v2049
      %v3730 = vpop.f32.mrb[0].mxu0
      %v3731 = vadd.f32 %v3506, %v3730
      %v3732 = vpop.f32.mrb[0].mxu0
      %v3733 = vpop.f32.mrb[0].mxu0
      %v3734 = vadd.f32 %v3509, %v3733
      %v3735 = vpop.f32.mrb[0].mxu0
      %3736 = vmatprep.mubr.bf16.mxu0 %v2107
      %3737 = vmatmul.mubr.bf16.gmra.mrb[0].mxu0 %v2098
      %v3738 = vpop.f32.mrb[0].mxu0
      %v3739 = vadd.f32 %v3514, %v3738
      %v3740 = vpop.f32.mrb[0].mxu0
      %v3741 = vpop.f32.mrb[0].mxu0
      %v3742 = vadd.f32 %v3517, %v3741
      %v3743 = vpop.f32.mrb[0].mxu0
      %3744 = vmatprep.mubr.bf16.mxu0 %v2156
      %3745 = vmatmul.mubr.bf16.gmra.mrb[0].mxu0 %v2147
      %v3746 = vpop.f32.mrb[0].mxu0
      %v3747 = vadd.f32 %v3522, %v3746
      %v3748 = vpop.f32.mrb[0].mxu0
      %v3749 = vpop.f32.mrb[0].mxu0
      %v3750 = vadd.f32 %v3525, %v3749
      %v3751 = vpop.f32.mrb[0].mxu0
      %3752 = vmatprep.mubr.bf16.mxu0 %v2205
      %3753 = vmatmul.mubr.bf16.gmra.mrb[0].mxu0 %v2196
      %v3754 = vpop.f32.mrb[0].mxu0
      %v3755 = vadd.f32 %v3530, %v3754
      %v3756 = vpop.f32.mrb[0].mxu0
      %v3757 = vpop.f32.mrb[0].mxu0
      %v3758 = vadd.f32 %v3533, %v3757
      %v3759 = vpop.f32.mrb[0].mxu0
      %3760 = vmatprep.mubr.bf16.mxu0 %v2272
      %3761 = vmatmul.mubr.bf16.gmra.mrb[0].mxu0 %v2263
      %v3762 = vpop.f32.mrb[0].mxu0
      %v3763 = vadd.f32 %v3538, %v3762
      %v3764 = vpop.f32.mrb[0].mxu0
      %v3765 = vpop.f32.mrb[0].mxu0
      %v3766 = vadd.f32 %v3541, %v3765
      %v3767 = vpop.f32.mrb[0].mxu0
      %3768 = vdwg.mxu0
      %3769 = vmatprep.subr.bf16.mxu0 0
      %3770 = vmatpush1.bf16.msra.mxu0 %v2789
      %3771 = vmatprep.subr.bf16.mxu0 0
      %3772 = vmatpush1.bf16.msra.mxu0 %v2790
      %3773 = vmatprep.subr.bf16.mxu0 0
      %3774 = vmatpush1.bf16.msra.mxu0 %v2791
      %3775 = vmatprep.subr.bf16.mxu0 0
      %3776 = vmatpush1.bf16.msra.mxu0 %v2792
      %3777 = vmatprep.subr.bf16.mxu0 0
      %3778 = vmatpush1.bf16.msra.mxu0 %v2793
      %3779 = vmatprep.subr.bf16.mxu0 0
      %3780 = vmatpush1.bf16.msra.mxu0 %v2794
      %3781 = vmatprep.subr.bf16.mxu0 0
      %3782 = vmatpush1.bf16.msra.mxu0 %v2795
      %3783 = vmatprep.subr.bf16.mxu0 0
      %3784 = vmatpush1.bf16.msra.mxu0 %v2796
      %3785 = vmatprep.subr.bf16.mxu0 0
      %3786 = vmatpush1.bf16.msra.mxu0 0
      %3787 = vmatprep.subr.bf16.mxu0 0
      %3788 = vmatpush1.bf16.msra.mxu0 0
      %3789 = vmatprep.subr.bf16.mxu0 0
      %3790 = vmatpush1.bf16.msra.mxu0 0
      %3791 = vmatprep.subr.bf16.mxu0 0
      %3792 = vmatpush1.bf16.msra.mxu0 0
      %3793 = vmatprep.subr.bf16.mxu0 0
      %3794 = vmatpush1.bf16.msra.mxu0 0
      %3795 = vmatprep.subr.bf16.mxu0 0
      %3796 = vmatpush1.bf16.msra.mxu0 0
      %3797 = vmatprep.subr.bf16.mxu0 0
      %3798 = vmatpush1.bf16.msra.mxu0 0
      %3799 = vmatprep.subr.bf16.mxu0 0
      %3800 = vmatpush1.bf16.msra.mxu0 0
      %3801 = vmatprep.mubr.bf16.mxu0 0
      %3802 = vmatmul.mubr.bf16.gmra.mrb[0].mxu0 %v1111
      %v3803 = vpop.f32.mrb[0].mxu0
      %v3804 = vadd.f32 %v3579, %v3803
      %v3805 = vpop.f32.mrb[0].mxu0
      %v3806 = vpop.f32.mrb[0].mxu0
      %v3807 = vadd.f32 %v3582, %v3806
      %v3808 = vpop.f32.mrb[0].mxu0
      %3809 = vmatprep.mubr.bf16.mxu0 0
      %3810 = vmatmul.mubr.bf16.gmra.mrb[0].mxu0 %v1182
      %v3811 = vpop.f32.mrb[0].mxu0
      %v3812 = vadd.f32 %v3587, %v3811
      %v3813 = vpop.f32.mrb[0].mxu0
      %v3814 = vpop.f32.mrb[0].mxu0
      %v3815 = vadd.f32 %v3590, %v3814
      %v3816 = vpop.f32.mrb[0].mxu0
      %3817 = vmatprep.mubr.bf16.mxu0 0
      %3818 = vmatmul.mubr.bf16.gmra.mrb[0].mxu0 %v1234
      %v3819 = vpop.f32.mrb[0].mxu0
      %v3820 = vadd.f32 %v3595, %v3819
      %v3821 = vpop.f32.mrb[0].mxu0
      %v3822 = vpop.f32.mrb[0].mxu0
      %v3823 = vadd.f32 %v3598, %v3822
      %v3824 = vpop.f32.mrb[0].mxu0
      %3825 = vmatprep.mubr.bf16.mxu0 0
      %3826 = vmatmul.mubr.bf16.gmra.mrb[0].mxu0 %v1283
      %v3827 = vpop.f32.mrb[0].mxu0
      %v3828 = vadd.f32 %v3603, %v3827
      %v3829 = vpop.f32.mrb[0].mxu0
      %v3830 = vpop.f32.mrb[0].mxu0
      %v3831 = vadd.f32 %v3606, %v3830
      %v3832 = vpop.f32.mrb[0].mxu0
      %3833 = vmatprep.mubr.bf16.mxu0 0
      %3834 = vmatmul.mubr.bf16.gmra.mrb[0].mxu0 %v1332
      %v3835 = vpop.f32.mrb[0].mxu0
      %v3836 = vadd.f32 %v3611, %v3835
      %v3837 = vpop.f32.mrb[0].mxu0
      %v3838 = vpop.f32.mrb[0].mxu0
      %v3839 = vadd.f32 %v3614, %v3838
      %v3840 = vpop.f32.mrb[0].mxu0
      %3841 = vmatprep.mubr.bf16.mxu0 0
      %3842 = vmatmul.mubr.bf16.gmra.mrb[0].mxu0 %v1381
      %v3843 = vpop.f32.mrb[0].mxu0
      %v3844 = vadd.f32 %v3619, %v3843
      %v3845 = vpop.f32.mrb[0].mxu0
      %v3846 = vpop.f32.mrb[0].mxu0
      %v3847 = vadd.f32 %v3622, %v3846
      %v3848 = vpop.f32.mrb[0].mxu0
      %3849 = vmatprep.mubr.bf16.mxu0 0
      %3850 = vmatmul.mubr.bf16.gmra.mrb[0].mxu0 %v1430
      %v3851 = vpop.f32.mrb[0].mxu0
      %v3852 = vadd.f32 %v3627, %v3851
      %v3853 = vpop.f32.mrb[0].mxu0
      %v3854 = vpop.f32.mrb[0].mxu0
      %v3855 = vadd.f32 %v3630, %v3854
      %v3856 = vpop.f32.mrb[0].mxu0
      %3857 = vmatprep.mubr.bf16.mxu0 0
      %3858 = vmatmul.mubr.bf16.gmra.mrb[0].mxu0 %v1479
      %v3859 = vpop.f32.mrb[0].mxu0
      %v3860 = vadd.f32 %v3635, %v3859
      %v3861 = vpop.f32.mrb[0].mxu0
      %v3862 = vpop.f32.mrb[0].mxu0
      %v3863 = vadd.f32 %v3638, %v3862
      %v3864 = vpop.f32.mrb[0].mxu0
      %3865 = vmatprep.mubr.bf16.mxu0 0
      %3866 = vmatmul.mubr.bf16.gmra.mrb[0].mxu0 %v1528
      %v3867 = vpop.f32.mrb[0].mxu0
      %v3868 = vadd.f32 %v3643, %v3867
      %v3869 = vpop.f32.mrb[0].mxu0
      %v3870 = vpop.f32.mrb[0].mxu0
      %v3871 = vadd.f32 %v3646, %v3870
      %v3872 = vpop.f32.mrb[0].mxu0
      %3873 = vmatprep.mubr.bf16.mxu0 0
      %3874 = vmatmul.mubr.bf16.gmra.mrb[0].mxu0 %v1577
      %v3875 = vpop.f32.mrb[0].mxu0
      %v3876 = vadd.f32 %v3651, %v3875
      %v3877 = vpop.f32.mrb[0].mxu0
      %v3878 = vpop.f32.mrb[0].mxu0
      %v3879 = vadd.f32 %v3654, %v3878
      %v3880 = vpop.f32.mrb[0].mxu0
      %3881 = vmatprep.mubr.bf16.mxu0 0
      %3882 = vmatmul.mubr.bf16.gmra.mrb[0].mxu0 %v1626
      %v3883 = vpop.f32.mrb[0].mxu0
      %v3884 = vadd.f32 %v3659, %v3883
      %v3885 = vpop.f32.mrb[0].mxu0
      %v3886 = vpop.f32.mrb[0].mxu0
      %v3887 = vadd.f32 %v3662, %v3886
      %v3888 = vpop.f32.mrb[0].mxu0
      %3889 = vmatprep.mubr.bf16.mxu0 0
      %3890 = vmatmul.mubr.bf16.gmra.mrb[0].mxu0 %v1675
      %v3891 = vpop.f32.mrb[0].mxu0
      %v3892 = vadd.f32 %v3667, %v3891
      %v3893 = vpop.f32.mrb[0].mxu0
      %v3894 = vpop.f32.mrb[0].mxu0
      %v3895 = vadd.f32 %v3670, %v3894
      %v3896 = vpop.f32.mrb[0].mxu0
      %3897 = vmatprep.mubr.bf16.mxu0 0
      %3898 = vmatmul.mubr.bf16.gmra.mrb[0].mxu0 %v1724
      %v3899 = vpop.f32.mrb[0].mxu0
      %v3900 = vadd.f32 %v3675, %v3899
      %v3901 = vpop.f32.mrb[0].mxu0
      %v3902 = vpop.f32.mrb[0].mxu0
      %v3903 = vadd.f32 %v3678, %v3902
      %v3904 = vpop.f32.mrb[0].mxu0
      %3905 = vmatprep.mubr.bf16.mxu0 0
      %3906 = vmatmul.mubr.bf16.gmra.mrb[0].mxu0 %v1773
      %v3907 = vpop.f32.mrb[0].mxu0
      %v3908 = vadd.f32 %v3683, %v3907
      %v3909 = vpop.f32.mrb[0].mxu0
      %v3910 = vpop.f32.mrb[0].mxu0
      %v3911 = vadd.f32 %v3686, %v3910
      %v3912 = vpop.f32.mrb[0].mxu0
      %3913 = vmatprep.mubr.bf16.mxu0 0
      %3914 = vmatmul.mubr.bf16.gmra.mrb[0].mxu0 %v1822
      %v3915 = vpop.f32.mrb[0].mxu0
      %v3916 = vadd.f32 %v3691, %v3915
      %v3917 = vpop.f32.mrb[0].mxu0
      %v3918 = vpop.f32.mrb[0].mxu0
      %v3919 = vadd.f32 %v3694, %v3918
      %v3920 = vpop.f32.mrb[0].mxu0
      %3921 = vmatprep.mubr.bf16.mxu0 0
      %3922 = vmatmul.mubr.bf16.gmra.mrb[0].mxu0 %v1871
      %v3923 = vpop.f32.mrb[0].mxu0
      %v3924 = vadd.f32 %v3699, %v3923
      %v3925 = vpop.f32.mrb[0].mxu0
      %v3926 = vpop.f32.mrb[0].mxu0
      %v3927 = vadd.f32 %v3702, %v3926
      %v3928 = vpop.f32.mrb[0].mxu0
      %3929 = vmatprep.mubr.bf16.mxu0 0
      %3930 = vmatmul.mubr.bf16.gmra.mrb[0].mxu0 %v1920
      %v3931 = vpop.f32.mrb[0].mxu0
      %v3932 = vadd.f32 %v3707, %v3931
      %v3933 = vpop.f32.mrb[0].mxu0
      %v3934 = vpop.f32.mrb[0].mxu0
      %v3935 = vadd.f32 %v3710, %v3934
      %v3936 = vpop.f32.mrb[0].mxu0
      %3937 = vmatprep.mubr.bf16.mxu0 0
      %3938 = vmatmul.mubr.bf16.gmra.mrb[0].mxu0 %v1969
      %v3939 = vpop.f32.mrb[0].mxu0
      %v3940 = vadd.f32 %v3715, %v3939
      %v3941 = vpop.f32.mrb[0].mxu0
      %v3942 = vpop.f32.mrb[0].mxu0
      %v3943 = vadd.f32 %v3718, %v3942
      %v3944 = vpop.f32.mrb[0].mxu0
      %3945 = vmatprep.mubr.bf16.mxu0 0
      %3946 = vmatmul.mubr.bf16.gmra.mrb[0].mxu0 %v2018
      %v3947 = vpop.f32.mrb[0].mxu0
      %v3948 = vadd.f32 %v3723, %v3947
      %v3949 = vpop.f32.mrb[0].mxu0
      %v3950 = vpop.f32.mrb[0].mxu0
      %v3951 = vadd.f32 %v3726, %v3950
      %v3952 = vpop.f32.mrb[0].mxu0
      %3953 = vmatprep.mubr.bf16.mxu0 0
      %3954 = vmatmul.mubr.bf16.gmra.mrb[0].mxu0 %v2067
      %v3955 = vpop.f32.mrb[0].mxu0
      %v3956 = vadd.f32 %v3731, %v3955
      %v3957 = vpop.f32.mrb[0].mxu0
      %v3958 = vpop.f32.mrb[0].mxu0
      %v3959 = vadd.f32 %v3734, %v3958
      %v3960 = vpop.f32.mrb[0].mxu0
      %3961 = vmatprep.mubr.bf16.mxu0 0
      %3962 = vmatmul.mubr.bf16.gmra.mrb[0].mxu0 %v2116
      %v3963 = vpop.f32.mrb[0].mxu0
      %v3964 = vadd.f32 %v3739, %v3963
      %v3965 = vpop.f32.mrb[0].mxu0
      %v3966 = vpop.f32.mrb[0].mxu0
      %v3967 = vadd.f32 %v3742, %v3966
      %v3968 = vpop.f32.mrb[0].mxu0
      %3969 = vmatprep.mubr.bf16.mxu0 0
      %3970 = vmatmul.mubr.bf16.gmra.mrb[0].mxu0 %v2165
      %v3971 = vpop.f32.mrb[0].mxu0
      %v3972 = vadd.f32 %v3747, %v3971
      %v3973 = vpop.f32.mrb[0].mxu0
      %v3974 = vpop.f32.mrb[0].mxu0
      %v3975 = vadd.f32 %v3750, %v3974
      %v3976 = vpop.f32.mrb[0].mxu0
      %3977 = vmatprep.mubr.bf16.mxu0 0
      %3978 = vmatmul.mubr.bf16.gmra.mrb[0].mxu0 %v2214
      %v3979 = vpop.f32.mrb[0].mxu0
      %v3980 = vadd.f32 %v3755, %v3979
      %v3981 = vpop.f32.mrb[0].mxu0
      %v3982 = vpop.f32.mrb[0].mxu0
      %v3983 = vadd.f32 %v3758, %v3982
      %v3984 = vpop.f32.mrb[0].mxu0
      %3985 = vmatprep.mubr.bf16.mxu0 0
      %3986 = vmatmul.mubr.bf16.gmra.mrb[0].mxu0 %v2281
      %v3987 = vpop.f32.mrb[0].mxu0
      %v3988 = vadd.f32 %v3763, %v3987
      %v3989 = vpop.f32.mrb[0].mxu0
      %v3990 = vpop.f32.mrb[0].mxu0
      %v3991 = vadd.f32 %v3766, %v3990
      %v3992 = vpop.f32.mrb[0].mxu0
      %3993 = vdwg.mxu0
      %v3994 = vmax.f32 %v3804, 0.0
      %v3995 = vmax.f32 %v3807, 0.0
      %v3996 = vmax.f32 %v3812, 0.0
      %v3997 = vmax.f32 %v3815, 0.0
      %v3998 = vmax.f32 %v3820, 0.0
      %v3999 = vmax.f32 %v3823, 0.0
      %v4000 = vmax.f32 %v3828, 0.0
      %v4001 = vmax.f32 %v3831, 0.0
      %v4002 = vmax.f32 %v3836, 0.0
      %v4003 = vmax.f32 %v3839, 0.0
      %v4004 = vmax.f32 %v3844, 0.0
      %v4005 = vmax.f32 %v3847, 0.0
      %v4006 = vmax.f32 %v3852, 0.0
      %v4007 = vmax.f32 %v3855, 0.0
      %v4008 = vmax.f32 %v3860, 0.0
      %v4009 = vmax.f32 %v3863, 0.0
      %v4010 = vmax.f32 %v3868, 0.0
      %v4011 = vmax.f32 %v3871, 0.0
      %v4012 = vmax.f32 %v3876, 0.0
      %v4013 = vmax.f32 %v3879, 0.0
      %v4014 = vmax.f32 %v3884, 0.0
      %v4015 = vmax.f32 %v3887, 0.0
      %v4016 = vmax.f32 %v3892, 0.0
      %v4017 = vmax.f32 %v3895, 0.0
      %v4018 = vmax.f32 %v3900, 0.0
      %v4019 = vmax.f32 %v3903, 0.0
      %v4020 = vmax.f32 %v3908, 0.0
      %v4021 = vmax.f32 %v3911, 0.0
      %v4022 = vmax.f32 %v3916, 0.0
      %v4023 = vmax.f32 %v3919, 0.0
      %v4024 = vmax.f32 %v3924, 0.0
      %v4025 = vmax.f32 %v3927, 0.0
      %v4026 = vmax.f32 %v3932, 0.0
      %v4027 = vmax.f32 %v3935, 0.0
      %v4028 = vmax.f32 %v3940, 0.0
      %v4029 = vmax.f32 %v3943, 0.0
      %v4030 = vmax.f32 %v3948, 0.0
      %v4031 = vmax.f32 %v3951, 0.0
      %v4032 = vmax.f32 %v3956, 0.0
      %v4033 = vmax.f32 %v3959, 0.0
      %v4034 = vmax.f32 %v3964, 0.0
      %v4035 = vmax.f32 %v3967, 0.0
      %v4036 = vmax.f32 %v3972, 0.0
      %v4037 = vmax.f32 %v3975, 0.0
      %v4038 = vmax.f32 %v3980, 0.0
      %v4039 = vmax.f32 %v3983, 0.0
      %v4040 = vmax.f32 %v3988, 0.0
      %v4041 = vmax.f32 %v3991, 0.0
      %v4042 = vsel %vm320, %v3994, 0.0
      %v4043 = vsel %vm321, %v3995, 0.0
      %v4044 = vsel %vm322, %v3996, 0.0
      %v4045 = vsel %vm320, %v3997, 0.0
      %v4046 = vsel %vm321, %v3998, 0.0
      %v4047 = vsel %vm322, %v3999, 0.0
      %v4048 = vsel %vm320, %v4000, 0.0
      %v4049 = vsel %vm321, %v4001, 0.0
      %v4050 = vsel %vm322, %v4002, 0.0
      %v4051 = vsel %vm320, %v4003, 0.0
      %v4052 = vsel %vm321, %v4004, 0.0
      %v4053 = vsel %vm322, %v4005, 0.0
      %v4054 = vsel %vm320, %v4006, 0.0
      %v4055 = vsel %vm321, %v4007, 0.0
      %v4056 = vsel %vm322, %v4008, 0.0
      %v4057 = vsel %vm320, %v4009, 0.0
      %v4058 = vsel %vm321, %v4010, 0.0
      %v4059 = vsel %vm322, %v4011, 0.0
      %v4060 = vsel %vm320, %v4012, 0.0
      %v4061 = vsel %vm321, %v4013, 0.0
      %v4062 = vsel %vm322, %v4014, 0.0
      %v4063 = vsel %vm320, %v4015, 0.0
      %v4064 = vsel %vm321, %v4016, 0.0
      %v4065 = vsel %vm322, %v4017, 0.0
      %v4066 = vsel %vm320, %v4018, 0.0
      %v4067 = vsel %vm321, %v4019, 0.0
      %v4068 = vsel %vm322, %v4020, 0.0
      %v4069 = vsel %vm320, %v4021, 0.0
      %v4070 = vsel %vm321, %v4022, 0.0
      %v4071 = vsel %vm322, %v4023, 0.0
      %v4072 = vsel %vm320, %v4024, 0.0
      %v4073 = vsel %vm321, %v4025, 0.0
      %v4074 = vsel %vm322, %v4026, 0.0
      %v4075 = vsel %vm320, %v4027, 0.0
      %v4076 = vsel %vm321, %v4028, 0.0
      %v4077 = vsel %vm322, %v4029, 0.0
      %v4078 = vsel %vm320, %v4030, 0.0
      %v4079 = vsel %vm321, %v4031, 0.0
      %v4080 = vsel %vm322, %v4032, 0.0
      %v4081 = vsel %vm320, %v4033, 0.0
      %v4082 = vsel %vm321, %v4034, 0.0
      %v4083 = vsel %vm322, %v4035, 0.0
      %v4084 = vsel %vm320, %v4036, 0.0
      %v4085 = vsel %vm321, %v4037, 0.0
      %v4086 = vsel %vm322, %v4038, 0.0
      %v4087 = vsel %vm320, %v4039, 0.0
      %v4088 = vsel %vm321, %v4040, 0.0
      %v4089 = vsel %vm322, %v4041, 0.0
      %v4090 = vpack.c.bf16 %v4043, %v4042
      %v4091 = vpack.c.bf16 %v4045, %v4044
      %v4092 = vpack.c.bf16 %v4047, %v4046
      %v4093 = vpack.c.bf16 %v4049, %v4048
      %v4094 = vpack.c.bf16 %v4051, %v4050
      %v4095 = vpack.c.bf16 %v4053, %v4052
      %v4096 = vpack.c.bf16 %v4055, %v4054
      %v4097 = vpack.c.bf16 %v4057, %v4056
      %v4098 = vpack.c.bf16 %v4059, %v4058
      %v4099 = vpack.c.bf16 %v4061, %v4060
      %v4100 = vpack.c.bf16 %v4063, %v4062
      %v4101 = vpack.c.bf16 %v4065, %v4064
      %v4102 = vpack.c.bf16 %v4067, %v4066
      %v4103 = vpack.c.bf16 %v4069, %v4068
      %v4104 = vpack.c.bf16 %v4071, %v4070
      %v4105 = vpack.c.bf16 %v4073, %v4072
      %v4106 = vpack.c.bf16 %v4075, %v4074
      %v4107 = vpack.c.bf16 %v4077, %v4076
      %v4108 = vpack.c.bf16 %v4079, %v4078
      %v4109 = vpack.c.bf16 %v4081, %v4080
      %v4110 = vpack.c.bf16 %v4083, %v4082
      %v4111 = vpack.c.bf16 %v4085, %v4084
      %v4112 = vpack.c.bf16 %v4087, %v4086
      %v4113 = vpack.c.bf16 %v4089, %v4088
      %v4115 = vshrl.u32 0, 16
      %v4117 = vshll.u32 0, 16
      %v4119 = vrot.slane %v4117, 1
      %v4120 = vor.u32 %v4115, %v4119
      %v4121 = vsel %vm323, %v4120, %v4119
      %v4123 = vshll.u32 %v4090, 16
      %v4125 = vrot.slane %v4123, 1
      %v4126 = vsel %vm323, %v4120, %v4125
      %v4127 = vshrl.u32 %v4090, 16
      %v4129 = vor.u32 %v4127, %v4125
      %v4131 = vshll.u32 %v4091, 16
      %v4133 = vrot.slane %v4131, 1
      %v4134 = vsel %vm323, %v4129, %v4133
      %v4135 = vshrl.u32 %v4091, 16
      %v4137 = vor.u32 %v4135, %v4133
      %v4139 = vshll.u32 %v4092, 16
      %v4141 = vrot.slane %v4139, 1
      %v4142 = vsel %vm323, %v4137, %v4141
      %v4143 = vshrl.u32 %v4092, 16
      %v4145 = vor.u32 %v4143, %v4141
      %v4147 = vshll.u32 %v4093, 16
      %v4149 = vrot.slane %v4147, 1
      %v4150 = vsel %vm323, %v4145, %v4149
      %v4151 = vshrl.u32 %v4093, 16
      %v4153 = vor.u32 %v4151, %v4149
      %v4155 = vshll.u32 %v4094, 16
      %v4157 = vrot.slane %v4155, 1
      %v4158 = vsel %vm323, %v4153, %v4157
      %v4159 = vshrl.u32 %v4094, 16
      %v4161 = vor.u32 %v4159, %v4157
      %v4163 = vshll.u32 %v4095, 16
      %v4165 = vrot.slane %v4163, 1
      %v4166 = vsel %vm323, %v4161, %v4165
      %v4167 = vshrl.u32 %v4095, 16
      %v4169 = vor.u32 %v4167, %v4165
      %v4171 = vshll.u32 %v4096, 16
      %v4173 = vrot.slane %v4171, 1
      %v4174 = vsel %vm323, %v4169, %v4173
      %v4175 = vshrl.u32 %v4096, 16
      %v4177 = vor.u32 %v4175, %v4173
      %v4179 = vshll.u32 %v4097, 16
      %v4181 = vrot.slane %v4179, 1
      %v4182 = vsel %vm323, %v4177, %v4181
      %v4183 = vshrl.u32 %v4097, 16
      %v4185 = vor.u32 %v4183, %v4181
      %v4187 = vshll.u32 %v4098, 16
      %v4189 = vrot.slane %v4187, 1
      %v4190 = vsel %vm323, %v4185, %v4189
      %v4191 = vshrl.u32 %v4098, 16
      %v4193 = vor.u32 %v4191, %v4189
      %v4195 = vshll.u32 %v4099, 16
      %v4197 = vrot.slane %v4195, 1
      %v4198 = vsel %vm323, %v4193, %v4197
      %v4199 = vshrl.u32 %v4099, 16
      %v4201 = vor.u32 %v4199, %v4197
      %v4203 = vshll.u32 %v4100, 16
      %v4205 = vrot.slane %v4203, 1
      %v4206 = vsel %vm323, %v4201, %v4205
      %v4207 = vshrl.u32 %v4100, 16
      %v4209 = vor.u32 %v4207, %v4205
      %v4211 = vshll.u32 %v4101, 16
      %v4213 = vrot.slane %v4211, 1
      %v4214 = vsel %vm323, %v4209, %v4213
      %v4215 = vshrl.u32 %v4101, 16
      %v4217 = vor.u32 %v4215, %v4213
      %v4219 = vshll.u32 %v4102, 16
      %v4221 = vrot.slane %v4219, 1
      %v4222 = vsel %vm323, %v4217, %v4221
      %v4223 = vshrl.u32 %v4102, 16
      %v4225 = vor.u32 %v4223, %v4221
      %v4227 = vshll.u32 %v4103, 16
      %v4229 = vrot.slane %v4227, 1
      %v4230 = vsel %vm323, %v4225, %v4229
      %v4231 = vshrl.u32 %v4103, 16
      %v4233 = vor.u32 %v4231, %v4229
      %v4235 = vshll.u32 %v4104, 16
      %v4237 = vrot.slane %v4235, 1
      %v4238 = vsel %vm323, %v4233, %v4237
      %v4239 = vshrl.u32 %v4104, 16
      %v4241 = vor.u32 %v4239, %v4237
      %v4243 = vshll.u32 %v4105, 16
      %v4245 = vrot.slane %v4243, 1
      %v4246 = vsel %vm323, %v4241, %v4245
      %v4247 = vshrl.u32 %v4105, 16
      %v4249 = vor.u32 %v4247, %v4245
      %v4251 = vshll.u32 %v4106, 16
      %v4253 = vrot.slane %v4251, 1
      %v4254 = vsel %vm323, %v4249, %v4253
      %v4255 = vshrl.u32 %v4106, 16
      %v4257 = vor.u32 %v4255, %v4253
      %v4259 = vshll.u32 %v4107, 16
      %v4261 = vrot.slane %v4259, 1
      %v4262 = vsel %vm323, %v4257, %v4261
      %v4263 = vshrl.u32 %v4107, 16
      %v4265 = vor.u32 %v4263, %v4261
      %v4267 = vshll.u32 %v4108, 16
      %v4269 = vrot.slane %v4267, 1
      %v4270 = vsel %vm323, %v4265, %v4269
      %v4271 = vshrl.u32 %v4108, 16
      %v4273 = vor.u32 %v4271, %v4269
      %v4275 = vshll.u32 %v4109, 16
      %v4277 = vrot.slane %v4275, 1
      %v4278 = vsel %vm323, %v4273, %v4277
      %v4279 = vshrl.u32 %v4109, 16
      %v4281 = vor.u32 %v4279, %v4277
      %v4283 = vshll.u32 %v4110, 16
      %v4285 = vrot.slane %v4283, 1
      %v4286 = vsel %vm323, %v4281, %v4285
      %v4287 = vshrl.u32 %v4110, 16
      %v4289 = vor.u32 %v4287, %v4285
      %v4291 = vshll.u32 %v4111, 16
      %v4293 = vrot.slane %v4291, 1
      %v4294 = vsel %vm323, %v4289, %v4293
      %v4295 = vshrl.u32 %v4111, 16
      %v4297 = vor.u32 %v4295, %v4293
      %v4299 = vshll.u32 %v4112, 16
      %v4301 = vrot.slane %v4299, 1
      %v4302 = vsel %vm323, %v4297, %v4301
      %v4303 = vshrl.u32 %v4112, 16
      %v4305 = vor.u32 %v4303, %v4301
      %v4330 = vrot.slane 0, 1
      %v4331 = vsel %vm548, %v4330, %v4330
      %v4332 = vrot.slane %v4090, 1
      %v4333 = vsel %vm548, %v4330, %v4332
      %v4334 = vrot.slane %v4091, 1
      %v4335 = vsel %vm548, %v4332, %v4334
      %v4336 = vrot.slane %v4092, 1
      %v4337 = vsel %vm548, %v4334, %v4336
      %v4338 = vrot.slane %v4093, 1
      %v4339 = vsel %vm548, %v4336, %v4338
      %v4340 = vrot.slane %v4094, 1
      %v4341 = vsel %vm548, %v4338, %v4340
      %v4342 = vrot.slane %v4095, 1
      %v4343 = vsel %vm548, %v4340, %v4342
      %v4344 = vrot.slane %v4096, 1
      %v4345 = vsel %vm548, %v4342, %v4344
      %v4346 = vrot.slane %v4097, 1
      %v4347 = vsel %vm548, %v4344, %v4346
      %v4348 = vrot.slane %v4098, 1
      %v4349 = vsel %vm548, %v4346, %v4348
      %v4350 = vrot.slane %v4099, 1
      %v4351 = vsel %vm548, %v4348, %v4350
      %v4352 = vrot.slane %v4100, 1
      %v4353 = vsel %vm548, %v4350, %v4352
      %v4354 = vrot.slane %v4101, 1
      %v4355 = vsel %vm548, %v4352, %v4354
      %v4356 = vrot.slane %v4102, 1
      %v4357 = vsel %vm548, %v4354, %v4356
      %v4358 = vrot.slane %v4103, 1
      %v4359 = vsel %vm548, %v4356, %v4358
      %v4360 = vrot.slane %v4104, 1
      %v4361 = vsel %vm548, %v4358, %v4360
      %v4362 = vrot.slane %v4105, 1
      %v4363 = vsel %vm548, %v4360, %v4362
      %v4364 = vrot.slane %v4106, 1
      %v4365 = vsel %vm548, %v4362, %v4364
      %v4366 = vrot.slane %v4107, 1
      %v4367 = vsel %vm548, %v4364, %v4366
      %v4368 = vrot.slane %v4108, 1
      %v4369 = vsel %vm548, %v4366, %v4368
      %v4370 = vrot.slane %v4109, 1
      %v4371 = vsel %vm548, %v4368, %v4370
      %v4372 = vrot.slane %v4110, 1
      %v4373 = vsel %vm548, %v4370, %v4372
      %v4374 = vrot.slane %v4111, 1
      %v4375 = vsel %vm548, %v4372, %v4374
      %v4376 = vrot.slane %v4112, 1
      %v4377 = vsel %vm548, %v4374, %v4376
      %v4379 = vrot.slane 0, 4
      %v4380 = vrot.slane %v4090, 4
      %v4381 = vsel %vm599, %v4379, %v4380
      %v4382 = vrot.slane %v4091, 4
      %v4383 = vsel %vm599, %v4380, %v4382
      %v4384 = vrot.slane %v4092, 4
      %v4385 = vsel %vm599, %v4382, %v4384
      %v4386 = vrot.slane %v4093, 4
      %v4387 = vsel %vm599, %v4384, %v4386
      %v4388 = vrot.slane %v4094, 4
      %v4389 = vsel %vm599, %v4386, %v4388
      %v4390 = vrot.slane %v4095, 4
      %v4391 = vsel %vm599, %v4388, %v4390
      %v4392 = vrot.slane %v4096, 4
      %v4393 = vsel %vm599, %v4390, %v4392
      %v4394 = vrot.slane %v4097, 4
      %v4395 = vsel %vm599, %v4392, %v4394
      %v4396 = vrot.slane %v4098, 4
      %v4397 = vsel %vm599, %v4394, %v4396
      %v4398 = vrot.slane %v4099, 4
      %v4399 = vsel %vm599, %v4396, %v4398
      %v4400 = vrot.slane %v4100, 4
      %v4401 = vsel %vm599, %v4398, %v4400
      %v4402 = vrot.slane %v4101, 4
      %v4403 = vsel %vm599, %v4400, %v4402
      %v4404 = vrot.slane %v4102, 4
      %v4405 = vsel %vm599, %v4402, %v4404
      %v4406 = vrot.slane %v4103, 4
      %v4407 = vsel %vm599, %v4404, %v4406
      %v4408 = vrot.slane %v4104, 4
      %v4409 = vsel %vm599, %v4406, %v4408
      %v4410 = vrot.slane %v4105, 4
      %v4411 = vsel %vm599, %v4408, %v4410
      %v4412 = vrot.slane %v4106, 4
      %v4413 = vsel %vm599, %v4410, %v4412
      %v4414 = vrot.slane %v4107, 4
      %v4415 = vsel %vm599, %v4412, %v4414
      %v4416 = vrot.slane %v4108, 4
      %v4417 = vsel %vm599, %v4414, %v4416
      %v4418 = vrot.slane %v4109, 4
      %v4419 = vsel %vm599, %v4416, %v4418
      %v4420 = vrot.slane %v4110, 4
      %v4421 = vsel %vm599, %v4418, %v4420
      %v4422 = vrot.slane %v4111, 4
      %v4423 = vsel %vm599, %v4420, %v4422
      %v4424 = vrot.slane %v4112, 4
      %v4425 = vsel %vm599, %v4422, %v4424
      %v4426 = vrot.slane %v4113, 4
      %v4427 = vsel %vm599, %v4424, %v4426
      %v4428 = vrot.slane %v4127, 4
      %v4429 = vrot.slane %v4123, 5
      %v4430 = vor.u32 %v4428, %v4429
      %v4431 = vrot.slane %v4135, 4
      %v4432 = vrot.slane %v4131, 5
      %v4433 = vor.u32 %v4431, %v4432
      %v4434 = vsel %vm649, %v4430, %v4433
      %v4435 = vrot.slane %v4143, 4
      %v4436 = vrot.slane %v4139, 5
      %v4437 = vor.u32 %v4435, %v4436
      %v4438 = vsel %vm649, %v4433, %v4437
      %v4439 = vrot.slane %v4151, 4
      %v4440 = vrot.slane %v4147, 5
      %v4441 = vor.u32 %v4439, %v4440
      %v4442 = vsel %vm649, %v4437, %v4441
      %v4443 = vrot.slane %v4159, 4
      %v4444 = vrot.slane %v4155, 5
      %v4445 = vor.u32 %v4443, %v4444
      %v4446 = vsel %vm649, %v4441, %v4445
      %v4447 = vrot.slane %v4167, 4
      %v4448 = vrot.slane %v4163, 5
      %v4449 = vor.u32 %v4447, %v4448
      %v4450 = vsel %vm649, %v4445, %v4449
      %v4451 = vrot.slane %v4175, 4
      %v4452 = vrot.slane %v4171, 5
      %v4453 = vor.u32 %v4451, %v4452
      %v4454 = vsel %vm649, %v4449, %v4453
      %v4455 = vrot.slane %v4183, 4
      %v4456 = vrot.slane %v4179, 5
      %v4457 = vor.u32 %v4455, %v4456
      %v4458 = vsel %vm649, %v4453, %v4457
      %v4459 = vrot.slane %v4191, 4
      %v4460 = vrot.slane %v4187, 5
      %v4461 = vor.u32 %v4459, %v4460
      %v4462 = vsel %vm649, %v4457, %v4461
      %v4463 = vrot.slane %v4199, 4
      %v4464 = vrot.slane %v4195, 5
      %v4465 = vor.u32 %v4463, %v4464
      %v4466 = vsel %vm649, %v4461, %v4465
      %v4467 = vrot.slane %v4207, 4
      %v4468 = vrot.slane %v4203, 5
      %v4469 = vor.u32 %v4467, %v4468
      %v4470 = vsel %vm649, %v4465, %v4469
      %v4471 = vrot.slane %v4215, 4
      %v4472 = vrot.slane %v4211, 5
      %v4473 = vor.u32 %v4471, %v4472
      %v4474 = vsel %vm649, %v4469, %v4473
      %v4475 = vrot.slane %v4223, 4
      %v4476 = vrot.slane %v4219, 5
      %v4477 = vor.u32 %v4475, %v4476
      %v4478 = vsel %vm649, %v4473, %v4477
      %v4479 = vrot.slane %v4231, 4
      %v4480 = vrot.slane %v4227, 5
      %v4481 = vor.u32 %v4479, %v4480
      %v4482 = vsel %vm649, %v4477, %v4481
      %v4483 = vrot.slane %v4239, 4
      %v4484 = vrot.slane %v4235, 5
      %v4485 = vor.u32 %v4483, %v4484
      %v4486 = vsel %vm649, %v4481, %v4485
      %v4487 = vrot.slane %v4247, 4
      %v4488 = vrot.slane %v4243, 5
      %v4489 = vor.u32 %v4487, %v4488
      %v4490 = vsel %vm649, %v4485, %v4489
      %v4491 = vrot.slane %v4255, 4
      %v4492 = vrot.slane %v4251, 5
      %v4493 = vor.u32 %v4491, %v4492
      %v4494 = vsel %vm649, %v4489, %v4493
      %v4495 = vrot.slane %v4263, 4
      %v4496 = vrot.slane %v4259, 5
      %v4497 = vor.u32 %v4495, %v4496
      %v4498 = vsel %vm649, %v4493, %v4497
      %v4499 = vrot.slane %v4271, 4
      %v4500 = vrot.slane %v4267, 5
      %v4501 = vor.u32 %v4499, %v4500
      %v4502 = vsel %vm649, %v4497, %v4501
      %v4503 = vrot.slane %v4279, 4
      %v4504 = vrot.slane %v4275, 5
      %v4505 = vor.u32 %v4503, %v4504
      %v4506 = vsel %vm649, %v4501, %v4505
      %v4507 = vrot.slane %v4287, 4
      %v4508 = vrot.slane %v4283, 5
      %v4509 = vor.u32 %v4507, %v4508
      %v4510 = vsel %vm649, %v4505, %v4509
      %v4511 = vrot.slane %v4295, 4
      %v4512 = vrot.slane %v4291, 5
      %v4513 = vor.u32 %v4511, %v4512
      %v4514 = vsel %vm649, %v4509, %v4513
      %v4515 = vrot.slane %v4303, 4
      %v4516 = vrot.slane %v4299, 5
      %v4517 = vor.u32 %v4515, %v4516
      %v4518 = vsel %vm649, %v4513, %v4517
      %v4520 = vshrl.u32 %v4113, 16
      %v4522 = vrot.slane %v4520, 4
      %v4523 = vshll.u32 %v4113, 16
      %v4525 = vrot.slane %v4523, 5
      %v4526 = vor.u32 %v4522, %v4525
      %v4527 = vsel %vm649, %v4517, %v4526
      %v4528 = vrot.slane %v4090, 5
      %v4529 = vrot.slane %v4091, 5
      %v4530 = vsel %vm751, %v4528, %v4529
      %v4531 = vrot.slane %v4092, 5
      %v4532 = vsel %vm751, %v4529, %v4531
      %v4533 = vrot.slane %v4093, 5
      %v4534 = vsel %vm751, %v4531, %v4533
      %v4535 = vrot.slane %v4094, 5
      %v4536 = vsel %vm751, %v4533, %v4535
      %v4537 = vrot.slane %v4095, 5
      %v4538 = vsel %vm751, %v4535, %v4537
      %v4539 = vrot.slane %v4096, 5
      %v4540 = vsel %vm751, %v4537, %v4539
      %v4541 = vrot.slane %v4097, 5
      %v4542 = vsel %vm751, %v4539, %v4541
      %v4543 = vrot.slane %v4098, 5
      %v4544 = vsel %vm751, %v4541, %v4543
      %v4545 = vrot.slane %v4099, 5
      %v4546 = vsel %vm751, %v4543, %v4545
      %v4547 = vrot.slane %v4100, 5
      %v4548 = vsel %vm751, %v4545, %v4547
      %v4549 = vrot.slane %v4101, 5
      %v4550 = vsel %vm751, %v4547, %v4549
      %v4551 = vrot.slane %v4102, 5
      %v4552 = vsel %vm751, %v4549, %v4551
      %v4553 = vrot.slane %v4103, 5
      %v4554 = vsel %vm751, %v4551, %v4553
      %v4555 = vrot.slane %v4104, 5
      %v4556 = vsel %vm751, %v4553, %v4555
      %v4557 = vrot.slane %v4105, 5
      %v4558 = vsel %vm751, %v4555, %v4557
      %v4559 = vrot.slane %v4106, 5
      %v4560 = vsel %vm751, %v4557, %v4559
      %v4561 = vrot.slane %v4107, 5
      %v4562 = vsel %vm751, %v4559, %v4561
      %v4563 = vrot.slane %v4108, 5
      %v4564 = vsel %vm751, %v4561, %v4563
      %v4565 = vrot.slane %v4109, 5
      %v4566 = vsel %vm751, %v4563, %v4565
      %v4567 = vrot.slane %v4110, 5
      %v4568 = vsel %vm751, %v4565, %v4567
      %v4569 = vrot.slane %v4111, 5
      %v4570 = vsel %vm751, %v4567, %v4569
      %v4571 = vrot.slane %v4112, 5
      %v4572 = vsel %vm751, %v4569, %v4571
      %v4573 = vrot.slane %v4113, 5
      %v4574 = vsel %vm751, %v4571, %v4573
      %v4575 = vrot.slane 0, 5
      %v4576 = vsel %vm751, %v4573, %v4575
      %v4577 = vrot.slane %v4523, 1
      %v4578 = vsel %vm323, %v4305, %v4577
      %v4579 = vor.u32 %v4520, %v4577
      %v4580 = vsel %vm323, %v4579, %v4119
      %v4581 = vrot.slane %v4113, 1
      %v4582 = vsel %vm548, %v4376, %v4581
      %v4583 = vsel %vm548, %v4581, %v4330
      %v4584 = vld [vmem:[%s3] sm:$0xf]
      %v4585 = vld [vmem:[%s3 + $0x4] sm:$0xf]
      %v4586 = vld [vmem:[%s3 + $0x8] sm:$0xf]
      %v4587 = vld [vmem:[%s3 + $0xc] sm:$0xf]
      %v4588 = vld [vmem:[%s3 + $0x10] sm:$0xf]
      %v4589 = vld [vmem:[%s3 + $0x14] sm:$0xf]
      %v4590 = vld [vmem:[%s3 + $0x18] sm:$0xf]
      %v4591 = vld [vmem:[%s3 + $0x1c] sm:$0xf]
      %v4592 = vld [vmem:[%s3 + $0x20] sm:$0xf]
      %v4593 = vld [vmem:[%s3 + $0x24] sm:$0xf]
      %v4594 = vld [vmem:[%s3 + $0x28] sm:$0xf]
      %v4595 = vld [vmem:[%s3 + $0x2c] sm:$0xf]
      %v4596 = vld [vmem:[%s3 + $0x30] sm:$0xf]
      %v4597 = vld [vmem:[%s3 + $0x34] sm:$0xf]
      %v4598 = vld [vmem:[%s3 + $0x38] sm:$0xf]
      %v4599 = vld [vmem:[%s3 + $0x3c] sm:$0xf]
      %v4600 = vld [vmem:[%s3 + $0x40] sm:$0xf]
      %v4601 = vld [vmem:[%s3 + $0x44] sm:$0xf]
      %v4602 = vld [vmem:[%s3 + $0x48] sm:$0xf]
      %v4603 = vld [vmem:[%s3 + $0x4c] sm:$0xf]
      %v4604 = vld [vmem:[%s3 + $0x50] sm:$0xf]
      %v4605 = vld [vmem:[%s3 + $0x54] sm:$0xf]
      %v4606 = vld [vmem:[%s3 + $0x58] sm:$0xf]
      %v4607 = vld [vmem:[%s3 + $0x5c] sm:$0xf]
      %v4608 = vld [vmem:[%s3 + $0x60] sm:$0xf]
      %v4609 = vld [vmem:[%s3 + $0x64] sm:$0xf]
      %v4610 = vld [vmem:[%s3 + $0x68] sm:$0xf]
      %v4611 = vld [vmem:[%s3 + $0x6c] sm:$0xf]
      %v4612 = vld [vmem:[%s3 + $0x70] sm:$0xf]
      %v4613 = vld [vmem:[%s3 + $0x74] sm:$0xf]
      %v4614 = vld [vmem:[%s3 + $0x78] sm:$0xf]
      %v4615 = vld [vmem:[%s3 + $0x7c] sm:$0xf]
      %v4616 = vld [vmem:[%s3 + $0x80] sm:$0xf]
      %v4617 = vld [vmem:[%s3 + $0x84] sm:$0xf]
      %v4618 = vld [vmem:[%s3 + $0x88] sm:$0xf]
      %v4619 = vld [vmem:[%s3 + $0x8c] sm:$0xf]
      %v4620 = vld [vmem:[%s3 + $0x90] sm:$0xf]
      %v4621 = vld [vmem:[%s3 + $0x94] sm:$0xf]
      %v4622 = vld [vmem:[%s3 + $0x98] sm:$0xf]
      %v4623 = vld [vmem:[%s3 + $0x9c] sm:$0xf]
      %v4624 = vld [vmem:[%s3 + $0xa0] sm:$0xf]
      %v4625 = vld [vmem:[%s3 + $0xa4] sm:$0xf]
      %v4626 = vld [vmem:[%s3 + $0xa8] sm:$0xf]
      %v4627 = vld [vmem:[%s3 + $0xac] sm:$0xf]
      %v4628 = vld [vmem:[%s3 + $0xb0] sm:$0xf]
      %v4629 = vld [vmem:[%s3 + $0xb4] sm:$0xf]
      %v4630 = vld [vmem:[%s3 + $0xb8] sm:$0xf]
      %v4631 = vld [vmem:[%s3 + $0xbc] sm:$0xf]
      %v4632 = vld [vmem:[%s3 + $0xc0] sm:$0xf]
      %v4633 = vld [vmem:[%s3 + $0xc4] sm:$0xf]
      %v4634 = vld [vmem:[%s3 + $0xc8] sm:$0xf]
      %v4635 = vld [vmem:[%s3 + $0xcc] sm:$0xf]
      %v4636 = vld [vmem:[%s3 + $0xd0] sm:$0xf]
      %v4637 = vld [vmem:[%s3 + $0xd4] sm:$0xf]
      %v4638 = vld [vmem:[%s3 + $0xd8] sm:$0xf]
      %v4639 = vld [vmem:[%s3 + $0xdc] sm:$0xf]
      %v4640 = vld [vmem:[%s3 + $0xe0] sm:$0xf]
      %v4641 = vld [vmem:[%s3 + $0xe4] sm:$0xf]
      %v4642 = vld [vmem:[%s3 + $0xe8] sm:$0xf]
      %v4643 = vld [vmem:[%s3 + $0xec] sm:$0xf]
      %v4644 = vld [vmem:[%s3 + $0xf0] sm:$0xf]
      %v4645 = vld [vmem:[%s3 + $0xf4] sm:$0xf]
      %v4646 = vld [vmem:[%s3 + $0xf8] sm:$0xf]
      %v4647 = vld [vmem:[%s3 + $0xfc] sm:$0xf]
      %v4648 = vld [vmem:[%s3 + $0x100] sm:$0xf]
      %v4649 = vld [vmem:[%s3 + $0x104] sm:$0xf]
      %v4650 = vld [vmem:[%s3 + $0x108] sm:$0xf]
      %v4651 = vld [vmem:[%s3 + $0x10c] sm:$0xf]
      %v4652 = vld [vmem:[%s3 + $0x110] sm:$0xf]
      %v4653 = vld [vmem:[%s3 + $0x114] sm:$0xf]
      %v4654 = vld [vmem:[%s3 + $0x118] sm:$0xf]
      %v4655 = vld [vmem:[%s3 + $0x11c] sm:$0xf]
      %v4656 = vld [vmem:[%s3 + $0x120] sm:$0xf]
      %v4657 = vld [vmem:[%s3 + $0x124] sm:$0xf]
      %v4658 = vld [vmem:[%s3 + $0x128] sm:$0xf]
      %v4659 = vld [vmem:[%s3 + $0x12c] sm:$0xf]
      %v4660 = vld [vmem:[%s3 + $0x130] sm:$0xf]
      %v4661 = vld [vmem:[%s3 + $0x134] sm:$0xf]
      %v4662 = vld [vmem:[%s3 + $0x138] sm:$0xf]
      %v4663 = vld [vmem:[%s3 + $0x13c] sm:$0xf]
      %v4664 = vld [vmem:[%s3 + $0x140] sm:$0xf]
      %v4665 = vld [vmem:[%s3 + $0x144] sm:$0xf]
      %v4666 = vld [vmem:[%s3 + $0x148] sm:$0xf]
      %v4667 = vld [vmem:[%s3 + $0x14c] sm:$0xf]
      %v4668 = vld [vmem:[%s3 + $0x150] sm:$0xf]
      %v4669 = vld [vmem:[%s3 + $0x154] sm:$0xf]
      %v4670 = vld [vmem:[%s3 + $0x158] sm:$0xf]
      %v4671 = vld [vmem:[%s3 + $0x15c] sm:$0xf]
      %v4672 = vld [vmem:[%s3 + $0x160] sm:$0xf]
      %v4673 = vld [vmem:[%s3 + $0x164] sm:$0xf]
      %v4674 = vld [vmem:[%s3 + $0x168] sm:$0xf]
      %v4675 = vld [vmem:[%s3 + $0x16c] sm:$0xf]
      %v4676 = vld [vmem:[%s3 + $0x170] sm:$0xf]
      %v4677 = vld [vmem:[%s3 + $0x174] sm:$0xf]
      %v4678 = vld [vmem:[%s3 + $0x178] sm:$0xf]
      %v4679 = vld [vmem:[%s3 + $0x17c] sm:$0xf]
      %v4680 = vld [vmem:[%s3 + $0x180] sm:$0xf]
      %v4681 = vld [vmem:[%s3 + $0x184] sm:$0xf]
      %v4682 = vld [vmem:[%s3 + $0x188] sm:$0xf]
      %v4683 = vld [vmem:[%s3 + $0x18c] sm:$0xf]
      %v4684 = vld [vmem:[%s3 + $0x190] sm:$0xf]
      %v4685 = vld [vmem:[%s3 + $0x194] sm:$0xf]
      %v4686 = vld [vmem:[%s3 + $0x198] sm:$0xf]
      %v4687 = vld [vmem:[%s3 + $0x19c] sm:$0xf]
      %v4688 = vld [vmem:[%s3 + $0x1a0] sm:$0xf]
      %v4689 = vld [vmem:[%s3 + $0x1a4] sm:$0xf]
      %v4690 = vld [vmem:[%s3 + $0x1a8] sm:$0xf]
      %v4691 = vld [vmem:[%s3 + $0x1ac] sm:$0xf]
      %v4692 = vld [vmem:[%s3 + $0x1b0] sm:$0xf]
      %v4693 = vld [vmem:[%s3 + $0x1b4] sm:$0xf]
      %v4694 = vld [vmem:[%s3 + $0x1b8] sm:$0xf]
      %v4695 = vld [vmem:[%s3 + $0x1bc] sm:$0xf]
      %v4696 = vld [vmem:[%s3 + $0x1c0] sm:$0xf]
      %v4697 = vld [vmem:[%s3 + $0x1c4] sm:$0xf]
      %v4698 = vld [vmem:[%s3 + $0x1c8] sm:$0xf]
      %v4699 = vld [vmem:[%s3 + $0x1cc] sm:$0xf]
      %v4700 = vld [vmem:[%s3 + $0x1d0] sm:$0xf]
      %v4701 = vld [vmem:[%s3 + $0x1d4] sm:$0xf]
      %v4702 = vld [vmem:[%s3 + $0x1d8] sm:$0xf]
      %v4703 = vld [vmem:[%s3 + $0x1dc] sm:$0xf]
      %v4704 = vld [vmem:[%s3 + $0x1e0] sm:$0xf]
      %v4705 = vld [vmem:[%s3 + $0x1e4] sm:$0xf]
      %v4706 = vld [vmem:[%s3 + $0x1e8] sm:$0xf]
      %v4707 = vld [vmem:[%s3 + $0x1ec] sm:$0xf]
      %v4708 = vld [vmem:[%s3 + $0x1f0] sm:$0xf]
      %v4709 = vld [vmem:[%s3 + $0x1f4] sm:$0xf]
      %v4710 = vld [vmem:[%s3 + $0x1f8] sm:$0xf]
      %v4711 = vld [vmem:[%s3 + $0x1fc] sm:$0xf]
      %v4712 = vld [vmem:[%s3 + $0x200] sm:$0xf]
      %v4713 = vld [vmem:[%s3 + $0x204] sm:$0xf]
      %v4714 = vld [vmem:[%s3 + $0x208] sm:$0xf]
      %v4715 = vld [vmem:[%s3 + $0x20c] sm:$0xf]
      %v4716 = vld [vmem:[%s3 + $0x210] sm:$0xf]
      %v4717 = vld [vmem:[%s3 + $0x214] sm:$0xf]
      %v4718 = vld [vmem:[%s3 + $0x218] sm:$0xf]
      %v4719 = vld [vmem:[%s3 + $0x21c] sm:$0xf]
      %v4720 = vld [vmem:[%s3 + $0x220] sm:$0xf]
      %v4721 = vld [vmem:[%s3 + $0x224] sm:$0xf]
      %v4722 = vld [vmem:[%s3 + $0x228] sm:$0xf]
      %v4723 = vld [vmem:[%s3 + $0x22c] sm:$0xf]
      %v4724 = vld [vmem:[%s3 + $0x230] sm:$0xf]
      %v4725 = vld [vmem:[%s3 + $0x234] sm:$0xf]
      %v4726 = vld [vmem:[%s3 + $0x238] sm:$0xf]
      %v4727 = vld [vmem:[%s3 + $0x23c] sm:$0xf]
      %v4728 = vld [vmem:[%s4] sm:$0x1]
      %v4730 = vlaneseq
      %v4731 = vshrl.u32 %v4730, 7
      %v4732 = vsub.s32 0, %v4731
      %v4733 = vrot.slane %v4728, %v4732
      %v4735 = vrot.slane %v4115, 3
      %v4736 = vrot.slane %v4117, 4
      %v4737 = vor.u32 %v4735, %v4736
      %v4738 = vsel %vm978, %v4737, %v4737
      %v4740 = vshrl.u32 %v4121, 16
      %v4742 = vrot.slane %v4740, 3
      %v4743 = vshll.u32 %v4121, 16
      %v4745 = vrot.slane %v4743, 4
      %v4746 = vor.u32 %v4742, %v4745
      %v4748 = vshrl.u32 %v4126, 16
      %v4750 = vrot.slane %v4748, 3
      %v4751 = vshll.u32 %v4126, 16
      %v4753 = vrot.slane %v4751, 4
      %v4754 = vor.u32 %v4750, %v4753
      %v4755 = vsel %vm978, %v4746, %v4754
      %v4757 = vshrl.u32 %v4331, 16
      %v4759 = vrot.slane %v4757, 3
      %v4760 = vshll.u32 %v4331, 16
      %v4762 = vrot.slane %v4760, 4
      %v4763 = vor.u32 %v4759, %v4762
      %v4765 = vshrl.u32 %v4333, 16
      %v4767 = vrot.slane %v4765, 3
      %v4768 = vshll.u32 %v4333, 16
      %v4770 = vrot.slane %v4768, 4
      %v4771 = vor.u32 %v4767, %v4770
      %v4772 = vsel %vm978, %v4763, %v4771
      %v4774 = vshrl.u32 %v4381, 16
      %v4776 = vrot.slane %v4774, 3
      %v4777 = vshll.u32 %v4381, 16
      %v4779 = vrot.slane %v4777, 4
      %v4780 = vor.u32 %v4776, %v4779
      %v4782 = vshrl.u32 %v4383, 16
      %v4784 = vrot.slane %v4782, 3
      %v4785 = vshll.u32 %v4383, 16
      %v4787 = vrot.slane %v4785, 4
      %v4788 = vor.u32 %v4784, %v4787
      %v4789 = vsel %vm978, %v4780, %v4788
      %v4791 = vshrl.u32 %v4430, 16
      %v4793 = vrot.slane %v4791, 3
      %v4794 = vshll.u32 %v4430, 16
      %v4796 = vrot.slane %v4794, 4
      %v4797 = vor.u32 %v4793, %v4796
      %v4799 = vshrl.u32 %v4434, 16
      %v4801 = vrot.slane %v4799, 3
      %v4802 = vshll.u32 %v4434, 16
      %v4804 = vrot.slane %v4802, 4
      %v4805 = vor.u32 %v4801, %v4804
      %v4806 = vsel %vm978, %v4797, %v4805
      %v4808 = vshrl.u32 %v4528, 16
      %v4810 = vrot.slane %v4808, 3
      %v4811 = vshll.u32 %v4528, 16
      %v4813 = vrot.slane %v4811, 4
      %v4814 = vor.u32 %v4810, %v4813
      %v4816 = vshrl.u32 %v4530, 16
      %v4818 = vrot.slane %v4816, 3
      %v4819 = vshll.u32 %v4530, 16
      %v4821 = vrot.slane %v4819, 4
      %v4822 = vor.u32 %v4818, %v4821
      %v4823 = vsel %vm978, %v4814, %v4822
      %v4824 = vrot.slane %v4135, 3
      %v4825 = vrot.slane %v4131, 4
      %v4826 = vor.u32 %v4824, %v4825
      %v4827 = vrot.slane %v4143, 3
      %v4828 = vrot.slane %v4139, 4
      %v4829 = vor.u32 %v4827, %v4828
      %v4830 = vsel %vm978, %v4826, %v4829
      %v4832 = vshrl.u32 %v4142, 16
      %v4834 = vrot.slane %v4832, 3
      %v4835 = vshll.u32 %v4142, 16
      %v4837 = vrot.slane %v4835, 4
      %v4838 = vor.u32 %v4834, %v4837
      %v4840 = vshrl.u32 %v4150, 16
      %v4842 = vrot.slane %v4840, 3
      %v4843 = vshll.u32 %v4150, 16
      %v4845 = vrot.slane %v4843, 4
      %v4846 = vor.u32 %v4842, %v4845
      %v4847 = vsel %vm978, %v4838, %v4846
      %v4849 = vshrl.u32 %v4337, 16
      %v4851 = vrot.slane %v4849, 3
      %v4852 = vshll.u32 %v4337, 16
      %v4854 = vrot.slane %v4852, 4
      %v4855 = vor.u32 %v4851, %v4854
      %v4857 = vshrl.u32 %v4339, 16
      %v4859 = vrot.slane %v4857, 3
      %v4860 = vshll.u32 %v4339, 16
      %v4862 = vrot.slane %v4860, 4
      %v4863 = vor.u32 %v4859, %v4862
      %v4864 = vsel %vm978, %v4855, %v4863
      %v4865 = vrot.slane %v4127, 3
      %v4866 = vrot.slane %v4123, 4
      %v4867 = vor.u32 %v4865, %v4866
      %v4868 = vsel %vm978, %v4737, %v4867
      %v4870 = vshrl.u32 %v4134, 16
      %v4872 = vrot.slane %v4870, 3
      %v4873 = vshll.u32 %v4134, 16
      %v4875 = vrot.slane %v4873, 4
      %v4876 = vor.u32 %v4872, %v4875
      %v4877 = vsel %vm978, %v4754, %v4876
      %v4879 = vshrl.u32 %v4335, 16
      %v4881 = vrot.slane %v4879, 3
      %v4882 = vshll.u32 %v4335, 16
      %v4884 = vrot.slane %v4882, 4
      %v4885 = vor.u32 %v4881, %v4884
      %v4886 = vsel %vm978, %v4771, %v4885
      %v4888 = vshrl.u32 %v4385, 16
      %v4890 = vrot.slane %v4888, 3
      %v4891 = vshll.u32 %v4385, 16
      %v4893 = vrot.slane %v4891, 4
      %v4894 = vor.u32 %v4890, %v4893
      %v4895 = vsel %vm978, %v4788, %v4894
      %v4897 = vshrl.u32 %v4438, 16
      %v4899 = vrot.slane %v4897, 3
      %v4900 = vshll.u32 %v4438, 16
      %v4902 = vrot.slane %v4900, 4
      %v4903 = vor.u32 %v4899, %v4902
      %v4904 = vsel %vm978, %v4805, %v4903
      %v4906 = vshrl.u32 %v4532, 16
      %v4908 = vrot.slane %v4906, 3
      %v4909 = vshll.u32 %v4532, 16
      %v4911 = vrot.slane %v4909, 4
      %v4912 = vor.u32 %v4908, %v4911
      %v4913 = vsel %vm978, %v4822, %v4912
      %v4914 = vrot.slane %v4151, 3
      %v4915 = vrot.slane %v4147, 4
      %v4916 = vor.u32 %v4914, %v4915
      %v4917 = vsel %vm978, %v4829, %v4916
      %v4919 = vshrl.u32 %v4158, 16
      %v4921 = vrot.slane %v4919, 3
      %v4922 = vshll.u32 %v4158, 16
      %v4924 = vrot.slane %v4922, 4
      %v4925 = vor.u32 %v4921, %v4924
      %v4926 = vsel %vm978, %v4846, %v4925
      %v4928 = vshrl.u32 %v4341, 16
      %v4930 = vrot.slane %v4928, 3
      %v4931 = vshll.u32 %v4341, 16
      %v4933 = vrot.slane %v4931, 4
      %v4934 = vor.u32 %v4930, %v4933
      %v4935 = vsel %vm978, %v4863, %v4934
      %v4936 = vsel %vm978, %v4867, %v4826
      %v4937 = vsel %vm978, %v4876, %v4838
      %v4938 = vsel %vm978, %v4885, %v4855
      %v4940 = vshrl.u32 %v4387, 16
      %v4942 = vrot.slane %v4940, 3
      %v4943 = vshll.u32 %v4387, 16
      %v4945 = vrot.slane %v4943, 4
      %v4946 = vor.u32 %v4942, %v4945
      %v4947 = vsel %vm978, %v4894, %v4946
      %v4949 = vshrl.u32 %v4442, 16
      %v4951 = vrot.slane %v4949, 3
      %v4952 = vshll.u32 %v4442, 16
      %v4954 = vrot.slane %v4952, 4
      %v4955 = vor.u32 %v4951, %v4954
      %v4956 = vsel %vm978, %v4903, %v4955
      %v4958 = vshrl.u32 %v4534, 16
      %v4960 = vrot.slane %v4958, 3
      %v4961 = vshll.u32 %v4534, 16
      %v4963 = vrot.slane %v4961, 4
      %v4964 = vor.u32 %v4960, %v4963
      %v4965 = vsel %vm978, %v4912, %v4964
      %v4966 = vrot.slane %v4159, 3
      %v4967 = vrot.slane %v4155, 4
      %v4968 = vor.u32 %v4966, %v4967
      %v4969 = vsel %vm978, %v4916, %v4968
      %v4971 = vshrl.u32 %v4166, 16
      %v4973 = vrot.slane %v4971, 3
      %v4974 = vshll.u32 %v4166, 16
      %v4976 = vrot.slane %v4974, 4
      %v4977 = vor.u32 %v4973, %v4976
      %v4978 = vsel %vm978, %v4925, %v4977
      %v4980 = vshrl.u32 %v4343, 16
      %v4982 = vrot.slane %v4980, 3
      %v4983 = vshll.u32 %v4343, 16
      %v4985 = vrot.slane %v4983, 4
      %v4986 = vor.u32 %v4982, %v4985
      %v4987 = vsel %vm978, %v4934, %v4986
      %v4989 = vshrl.u32 %v4389, 16
      %v4991 = vrot.slane %v4989, 3
      %v4992 = vshll.u32 %v4389, 16
      %v4994 = vrot.slane %v4992, 4
      %v4995 = vor.u32 %v4991, %v4994
      %v4996 = vsel %vm978, %v4946, %v4995
      %v4998 = vshrl.u32 %v4446, 16
      %v5000 = vrot.slane %v4998, 3
      %v5001 = vshll.u32 %v4446, 16
      %v5003 = vrot.slane %v5001, 4
      %v5004 = vor.u32 %v5000, %v5003
      %v5005 = vsel %vm978, %v4955, %v5004
      %v5007 = vshrl.u32 %v4536, 16
      %v5009 = vrot.slane %v5007, 3
      %v5010 = vshll.u32 %v4536, 16
      %v5012 = vrot.slane %v5010, 4
      %v5013 = vor.u32 %v5009, %v5012
      %v5014 = vsel %vm978, %v4964, %v5013
      %v5015 = vrot.slane %v4167, 3
      %v5016 = vrot.slane %v4163, 4
      %v5017 = vor.u32 %v5015, %v5016
      %v5018 = vsel %vm978, %v4968, %v5017
      %v5020 = vshrl.u32 %v4174, 16
      %v5022 = vrot.slane %v5020, 3
      %v5023 = vshll.u32 %v4174, 16
      %v5025 = vrot.slane %v5023, 4
      %v5026 = vor.u32 %v5022, %v5025
      %v5027 = vsel %vm978, %v4977, %v5026
      %v5029 = vshrl.u32 %v4345, 16
      %v5031 = vrot.slane %v5029, 3
      %v5032 = vshll.u32 %v4345, 16
      %v5034 = vrot.slane %v5032, 4
      %v5035 = vor.u32 %v5031, %v5034
      %v5036 = vsel %vm978, %v4986, %v5035
      %v5038 = vshrl.u32 %v4391, 16
      %v5040 = vrot.slane %v5038, 3
      %v5041 = vshll.u32 %v4391, 16
      %v5043 = vrot.slane %v5041, 4
      %v5044 = vor.u32 %v5040, %v5043
      %v5045 = vsel %vm978, %v4995, %v5044
      %v5047 = vshrl.u32 %v4450, 16
      %v5049 = vrot.slane %v5047, 3
      %v5050 = vshll.u32 %v4450, 16
      %v5052 = vrot.slane %v5050, 4
      %v5053 = vor.u32 %v5049, %v5052
      %v5054 = vsel %vm978, %v5004, %v5053
      %v5056 = vshrl.u32 %v4538, 16
      %v5058 = vrot.slane %v5056, 3
      %v5059 = vshll.u32 %v4538, 16
      %v5061 = vrot.slane %v5059, 4
      %v5062 = vor.u32 %v5058, %v5061
      %v5063 = vsel %vm978, %v5013, %v5062
      %v5064 = vrot.slane %v4175, 3
      %v5065 = vrot.slane %v4171, 4
      %v5066 = vor.u32 %v5064, %v5065
      %v5067 = vsel %vm978, %v5017, %v5066
      %v5069 = vshrl.u32 %v4182, 16
      %v5071 = vrot.slane %v5069, 3
      %v5072 = vshll.u32 %v4182, 16
      %v5074 = vrot.slane %v5072, 4
      %v5075 = vor.u32 %v5071, %v5074
      %v5076 = vsel %vm978, %v5026, %v5075
      %v5078 = vshrl.u32 %v4347, 16
      %v5080 = vrot.slane %v5078, 3
      %v5081 = vshll.u32 %v4347, 16
      %v5083 = vrot.slane %v5081, 4
      %v5084 = vor.u32 %v5080, %v5083
      %v5085 = vsel %vm978, %v5035, %v5084
      %v5087 = vshrl.u32 %v4393, 16
      %v5089 = vrot.slane %v5087, 3
      %v5090 = vshll.u32 %v4393, 16
      %v5092 = vrot.slane %v5090, 4
      %v5093 = vor.u32 %v5089, %v5092
      %v5094 = vsel %vm978, %v5044, %v5093
      %v5096 = vshrl.u32 %v4454, 16
      %v5098 = vrot.slane %v5096, 3
      %v5099 = vshll.u32 %v4454, 16
      %v5101 = vrot.slane %v5099, 4
      %v5102 = vor.u32 %v5098, %v5101
      %v5103 = vsel %vm978, %v5053, %v5102
      %v5105 = vshrl.u32 %v4540, 16
      %v5107 = vrot.slane %v5105, 3
      %v5108 = vshll.u32 %v4540, 16
      %v5110 = vrot.slane %v5108, 4
      %v5111 = vor.u32 %v5107, %v5110
      %v5112 = vsel %vm978, %v5062, %v5111
      %v5113 = vrot.slane %v4183, 3
      %v5114 = vrot.slane %v4179, 4
      %v5115 = vor.u32 %v5113, %v5114
      %v5116 = vsel %vm978, %v5066, %v5115
      %v5118 = vshrl.u32 %v4190, 16
      %v5120 = vrot.slane %v5118, 3
      %v5121 = vshll.u32 %v4190, 16
      %v5123 = vrot.slane %v5121, 4
      %v5124 = vor.u32 %v5120, %v5123
      %v5125 = vsel %vm978, %v5075, %v5124
      %v5127 = vshrl.u32 %v4349, 16
      %v5129 = vrot.slane %v5127, 3
      %v5130 = vshll.u32 %v4349, 16
      %v5132 = vrot.slane %v5130, 4
      %v5133 = vor.u32 %v5129, %v5132
      %v5134 = vsel %vm978, %v5084, %v5133
      %v5136 = vshrl.u32 %v4395, 16
      %v5138 = vrot.slane %v5136, 3
      %v5139 = vshll.u32 %v4395, 16
      %v5141 = vrot.slane %v5139, 4
      %v5142 = vor.u32 %v5138, %v5141
      %v5143 = vsel %vm978, %v5093, %v5142
      %v5145 = vshrl.u32 %v4458, 16
      %v5147 = vrot.slane %v5145, 3
      %v5148 = vshll.u32 %v4458, 16
      %v5150 = vrot.slane %v5148, 4
      %v5151 = vor.u32 %v5147, %v5150
      %v5152 = vsel %vm978, %v5102, %v5151
      %v5154 = vshrl.u32 %v4542, 16
      %v5156 = vrot.slane %v5154, 3
      %v5157 = vshll.u32 %v4542, 16
      %v5159 = vrot.slane %v5157, 4
      %v5160 = vor.u32 %v5156, %v5159
      %v5161 = vsel %vm978, %v5111, %v5160
      %v5162 = vrot.slane %v4191, 3
      %v5163 = vrot.slane %v4187, 4
      %v5164 = vor.u32 %v5162, %v5163
      %v5165 = vsel %vm978, %v5115, %v5164
      %v5167 = vshrl.u32 %v4198, 16
      %v5169 = vrot.slane %v5167, 3
      %v5170 = vshll.u32 %v4198, 16
      %v5172 = vrot.slane %v5170, 4
      %v5173 = vor.u32 %v5169, %v5172
      %v5174 = vsel %vm978, %v5124, %v5173
      %v5176 = vshrl.u32 %v4351, 16
      %v5178 = vrot.slane %v5176, 3
      %v5179 = vshll.u32 %v4351, 16
      %v5181 = vrot.slane %v5179, 4
      %v5182 = vor.u32 %v5178, %v5181
      %v5183 = vsel %vm978, %v5133, %v5182
      %v5185 = vshrl.u32 %v4397, 16
      %v5187 = vrot.slane %v5185, 3
      %v5188 = vshll.u32 %v4397, 16
      %v5190 = vrot.slane %v5188, 4
      %v5191 = vor.u32 %v5187, %v5190
      %v5192 = vsel %vm978, %v5142, %v5191
      %v5194 = vshrl.u32 %v4462, 16
      %v5196 = vrot.slane %v5194, 3
      %v5197 = vshll.u32 %v4462, 16
      %v5199 = vrot.slane %v5197, 4
      %v5200 = vor.u32 %v5196, %v5199
      %v5201 = vsel %vm978, %v5151, %v5200
      %v5203 = vshrl.u32 %v4544, 16
      %v5205 = vrot.slane %v5203, 3
      %v5206 = vshll.u32 %v4544, 16
      %v5208 = vrot.slane %v5206, 4
      %v5209 = vor.u32 %v5205, %v5208
      %v5210 = vsel %vm978, %v5160, %v5209
      %v5211 = vrot.slane %v4199, 3
      %v5212 = vrot.slane %v4195, 4
      %v5213 = vor.u32 %v5211, %v5212
      %v5214 = vsel %vm978, %v5164, %v5213
      %v5216 = vshrl.u32 %v4206, 16
      %v5218 = vrot.slane %v5216, 3
      %v5219 = vshll.u32 %v4206, 16
      %v5221 = vrot.slane %v5219, 4
      %v5222 = vor.u32 %v5218, %v5221
      %v5223 = vsel %vm978, %v5173, %v5222
      %v5225 = vshrl.u32 %v4353, 16
      %v5227 = vrot.slane %v5225, 3
      %v5228 = vshll.u32 %v4353, 16
      %v5230 = vrot.slane %v5228, 4
      %v5231 = vor.u32 %v5227, %v5230
      %v5232 = vsel %vm978, %v5182, %v5231
      %v5234 = vshrl.u32 %v4399, 16
      %v5236 = vrot.slane %v5234, 3
      %v5237 = vshll.u32 %v4399, 16
      %v5239 = vrot.slane %v5237, 4
      %v5240 = vor.u32 %v5236, %v5239
      %v5241 = vsel %vm978, %v5191, %v5240
      %v5243 = vshrl.u32 %v4466, 16
      %v5245 = vrot.slane %v5243, 3
      %v5246 = vshll.u32 %v4466, 16
      %v5248 = vrot.slane %v5246, 4
      %v5249 = vor.u32 %v5245, %v5248
      %v5250 = vsel %vm978, %v5200, %v5249
      %v5252 = vshrl.u32 %v4546, 16
      %v5254 = vrot.slane %v5252, 3
      %v5255 = vshll.u32 %v4546, 16
      %v5257 = vrot.slane %v5255, 4
      %v5258 = vor.u32 %v5254, %v5257
      %v5259 = vsel %vm978, %v5209, %v5258
      %v5260 = vrot.slane %v4207, 3
      %v5261 = vrot.slane %v4203, 4
      %v5262 = vor.u32 %v5260, %v5261
      %v5263 = vsel %vm978, %v5213, %v5262
      %v5265 = vshrl.u32 %v4214, 16
      %v5267 = vrot.slane %v5265, 3
      %v5268 = vshll.u32 %v4214, 16
      %v5270 = vrot.slane %v5268, 4
      %v5271 = vor.u32 %v5267, %v5270
      %v5272 = vsel %vm978, %v5222, %v5271
      %v5274 = vshrl.u32 %v4355, 16
      %v5276 = vrot.slane %v5274, 3
      %v5277 = vshll.u32 %v4355, 16
      %v5279 = vrot.slane %v5277, 4
      %v5280 = vor.u32 %v5276, %v5279
      %v5281 = vsel %vm978, %v5231, %v5280
      %v5283 = vshrl.u32 %v4401, 16
      %v5285 = vrot.slane %v5283, 3
      %v5286 = vshll.u32 %v4401, 16
      %v5288 = vrot.slane %v5286, 4
      %v5289 = vor.u32 %v5285, %v5288
      %v5290 = vsel %vm978, %v5240, %v5289
      %v5292 = vshrl.u32 %v4470, 16
      %v5294 = vrot.slane %v5292, 3
      %v5295 = vshll.u32 %v4470, 16
      %v5297 = vrot.slane %v5295, 4
      %v5298 = vor.u32 %v5294, %v5297
      %v5299 = vsel %vm978, %v5249, %v5298
      %v5301 = vshrl.u32 %v4548, 16
      %v5303 = vrot.slane %v5301, 3
      %v5304 = vshll.u32 %v4548, 16
      %v5306 = vrot.slane %v5304, 4
      %v5307 = vor.u32 %v5303, %v5306
      %v5308 = vsel %vm978, %v5258, %v5307
      %v5309 = vrot.slane %v4215, 3
      %v5310 = vrot.slane %v4211, 4
      %v5311 = vor.u32 %v5309, %v5310
      %v5312 = vsel %vm978, %v5262, %v5311
      %v5314 = vshrl.u32 %v4222, 16
      %v5316 = vrot.slane %v5314, 3
      %v5317 = vshll.u32 %v4222, 16
      %v5319 = vrot.slane %v5317, 4
      %v5320 = vor.u32 %v5316, %v5319
      %v5321 = vsel %vm978, %v5271, %v5320
      %v5323 = vshrl.u32 %v4357, 16
      %v5325 = vrot.slane %v5323, 3
      %v5326 = vshll.u32 %v4357, 16
      %v5328 = vrot.slane %v5326, 4
      %v5329 = vor.u32 %v5325, %v5328
      %v5330 = vsel %vm978, %v5280, %v5329
      %v5332 = vshrl.u32 %v4403, 16
      %v5334 = vrot.slane %v5332, 3
      %v5335 = vshll.u32 %v4403, 16
      %v5337 = vrot.slane %v5335, 4
      %v5338 = vor.u32 %v5334, %v5337
      %v5339 = vsel %vm978, %v5289, %v5338
      %v5341 = vshrl.u32 %v4474, 16
      %v5343 = vrot.slane %v5341, 3
      %v5344 = vshll.u32 %v4474, 16
      %v5346 = vrot.slane %v5344, 4
      %v5347 = vor.u32 %v5343, %v5346
      %v5348 = vsel %vm978, %v5298, %v5347
      %v5350 = vshrl.u32 %v4550, 16
      %v5352 = vrot.slane %v5350, 3
      %v5353 = vshll.u32 %v4550, 16
      %v5355 = vrot.slane %v5353, 4
      %v5356 = vor.u32 %v5352, %v5355
      %v5357 = vsel %vm978, %v5307, %v5356
      %v5358 = vrot.slane %v4223, 3
      %v5359 = vrot.slane %v4219, 4
      %v5360 = vor.u32 %v5358, %v5359
      %v5361 = vsel %vm978, %v5311, %v5360
      %v5363 = vshrl.u32 %v4230, 16
      %v5365 = vrot.slane %v5363, 3
      %v5366 = vshll.u32 %v4230, 16
      %v5368 = vrot.slane %v5366, 4
      %v5369 = vor.u32 %v5365, %v5368
      %v5370 = vsel %vm978, %v5320, %v5369
      %v5372 = vshrl.u32 %v4359, 16
      %v5374 = vrot.slane %v5372, 3
      %v5375 = vshll.u32 %v4359, 16
      %v5377 = vrot.slane %v5375, 4
      %v5378 = vor.u32 %v5374, %v5377
      %v5379 = vsel %vm978, %v5329, %v5378
      %v5381 = vshrl.u32 %v4405, 16
      %v5383 = vrot.slane %v5381, 3
      %v5384 = vshll.u32 %v4405, 16
      %v5386 = vrot.slane %v5384, 4
      %v5387 = vor.u32 %v5383, %v5386
      %v5388 = vsel %vm978, %v5338, %v5387
      %v5390 = vshrl.u32 %v4478, 16
      %v5392 = vrot.slane %v5390, 3
      %v5393 = vshll.u32 %v4478, 16
      %v5395 = vrot.slane %v5393, 4
      %v5396 = vor.u32 %v5392, %v5395
      %v5397 = vsel %vm978, %v5347, %v5396
      %v5399 = vshrl.u32 %v4552, 16
      %v5401 = vrot.slane %v5399, 3
      %v5402 = vshll.u32 %v4552, 16
      %v5404 = vrot.slane %v5402, 4
      %v5405 = vor.u32 %v5401, %v5404
      %v5406 = vsel %vm978, %v5356, %v5405
      %v5407 = vrot.slane %v4231, 3
      %v5408 = vrot.slane %v4227, 4
      %v5409 = vor.u32 %v5407, %v5408
      %v5410 = vsel %vm978, %v5360, %v5409
      %v5412 = vshrl.u32 %v4238, 16
      %v5414 = vrot.slane %v5412, 3
      %v5415 = vshll.u32 %v4238, 16
      %v5417 = vrot.slane %v5415, 4
      %v5418 = vor.u32 %v5414, %v5417
      %v5419 = vsel %vm978, %v5369, %v5418
      %v5421 = vshrl.u32 %v4361, 16
      %v5423 = vrot.slane %v5421, 3
      %v5424 = vshll.u32 %v4361, 16
      %v5426 = vrot.slane %v5424, 4
      %v5427 = vor.u32 %v5423, %v5426
      %v5428 = vsel %vm978, %v5378, %v5427
      %v5430 = vshrl.u32 %v4407, 16
      %v5432 = vrot.slane %v5430, 3
      %v5433 = vshll.u32 %v4407, 16
      %v5435 = vrot.slane %v5433, 4
      %v5436 = vor.u32 %v5432, %v5435
      %v5437 = vsel %vm978, %v5387, %v5436
      %v5439 = vshrl.u32 %v4482, 16
      %v5441 = vrot.slane %v5439, 3
      %v5442 = vshll.u32 %v4482, 16
      %v5444 = vrot.slane %v5442, 4
      %v5445 = vor.u32 %v5441, %v5444
      %v5446 = vsel %vm978, %v5396, %v5445
      %v5448 = vshrl.u32 %v4554, 16
      %v5450 = vrot.slane %v5448, 3
      %v5451 = vshll.u32 %v4554, 16
      %v5453 = vrot.slane %v5451, 4
      %v5454 = vor.u32 %v5450, %v5453
      %v5455 = vsel %vm978, %v5405, %v5454
      %v5456 = vrot.slane %v4239, 3
      %v5457 = vrot.slane %v4235, 4
      %v5458 = vor.u32 %v5456, %v5457
      %v5459 = vsel %vm978, %v5409, %v5458
      %v5461 = vshrl.u32 %v4246, 16
      %v5463 = vrot.slane %v5461, 3
      %v5464 = vshll.u32 %v4246, 16
      %v5466 = vrot.slane %v5464, 4
      %v5467 = vor.u32 %v5463, %v5466
      %v5468 = vsel %vm978, %v5418, %v5467
      %v5470 = vshrl.u32 %v4363, 16
      %v5472 = vrot.slane %v5470, 3
      %v5473 = vshll.u32 %v4363, 16
      %v5475 = vrot.slane %v5473, 4
      %v5476 = vor.u32 %v5472, %v5475
      %v5477 = vsel %vm978, %v5427, %v5476
      %v5479 = vshrl.u32 %v4409, 16
      %v5481 = vrot.slane %v5479, 3
      %v5482 = vshll.u32 %v4409, 16
      %v5484 = vrot.slane %v5482, 4
      %v5485 = vor.u32 %v5481, %v5484
      %v5486 = vsel %vm978, %v5436, %v5485
      %v5488 = vshrl.u32 %v4486, 16
      %v5490 = vrot.slane %v5488, 3
      %v5491 = vshll.u32 %v4486, 16
      %v5493 = vrot.slane %v5491, 4
      %v5494 = vor.u32 %v5490, %v5493
      %v5495 = vsel %vm978, %v5445, %v5494
      %v5497 = vshrl.u32 %v4556, 16
      %v5499 = vrot.slane %v5497, 3
      %v5500 = vshll.u32 %v4556, 16
      %v5502 = vrot.slane %v5500, 4
      %v5503 = vor.u32 %v5499, %v5502
      %v5504 = vsel %vm978, %v5454, %v5503
      %v5505 = vrot.slane %v4247, 3
      %v5506 = vrot.slane %v4243, 4
      %v5507 = vor.u32 %v5505, %v5506
      %v5508 = vsel %vm978, %v5458, %v5507
      %v5510 = vshrl.u32 %v4254, 16
      %v5512 = vrot.slane %v5510, 3
      %v5513 = vshll.u32 %v4254, 16
      %v5515 = vrot.slane %v5513, 4
      %v5516 = vor.u32 %v5512, %v5515
      %v5517 = vsel %vm978, %v5467, %v5516
      %v5519 = vshrl.u32 %v4365, 16
      %v5521 = vrot.slane %v5519, 3
      %v5522 = vshll.u32 %v4365, 16
      %v5524 = vrot.slane %v5522, 4
      %v5525 = vor.u32 %v5521, %v5524
      %v5526 = vsel %vm978, %v5476, %v5525
      %v5528 = vshrl.u32 %v4411, 16
      %v5530 = vrot.slane %v5528, 3
      %v5531 = vshll.u32 %v4411, 16
      %v5533 = vrot.slane %v5531, 4
      %v5534 = vor.u32 %v5530, %v5533
      %v5535 = vsel %vm978, %v5485, %v5534
      %v5537 = vshrl.u32 %v4490, 16
      %v5539 = vrot.slane %v5537, 3
      %v5540 = vshll.u32 %v4490, 16
      %v5542 = vrot.slane %v5540, 4
      %v5543 = vor.u32 %v5539, %v5542
      %v5544 = vsel %vm978, %v5494, %v5543
      %v5546 = vshrl.u32 %v4558, 16
      %v5548 = vrot.slane %v5546, 3
      %v5549 = vshll.u32 %v4558, 16
      %v5551 = vrot.slane %v5549, 4
      %v5552 = vor.u32 %v5548, %v5551
      %v5553 = vsel %vm978, %v5503, %v5552
      %v5554 = vrot.slane %v4255, 3
      %v5555 = vrot.slane %v4251, 4
      %v5556 = vor.u32 %v5554, %v5555
      %v5557 = vsel %vm978, %v5507, %v5556
      %v5559 = vshrl.u32 %v4262, 16
      %v5561 = vrot.slane %v5559, 3
      %v5562 = vshll.u32 %v4262, 16
      %v5564 = vrot.slane %v5562, 4
      %v5565 = vor.u32 %v5561, %v5564
      %v5566 = vsel %vm978, %v5516, %v5565
      %v5568 = vshrl.u32 %v4367, 16
      %v5570 = vrot.slane %v5568, 3
      %v5571 = vshll.u32 %v4367, 16
      %v5573 = vrot.slane %v5571, 4
      %v5574 = vor.u32 %v5570, %v5573
      %v5575 = vsel %vm978, %v5525, %v5574
      %v5577 = vshrl.u32 %v4413, 16
      %v5579 = vrot.slane %v5577, 3
      %v5580 = vshll.u32 %v4413, 16
      %v5582 = vrot.slane %v5580, 4
      %v5583 = vor.u32 %v5579, %v5582
      %v5584 = vsel %vm978, %v5534, %v5583
      %v5586 = vshrl.u32 %v4494, 16
      %v5588 = vrot.slane %v5586, 3
      %v5589 = vshll.u32 %v4494, 16
      %v5591 = vrot.slane %v5589, 4
      %v5592 = vor.u32 %v5588, %v5591
      %v5593 = vsel %vm978, %v5543, %v5592
      %v5595 = vshrl.u32 %v4560, 16
      %v5597 = vrot.slane %v5595, 3
      %v5598 = vshll.u32 %v4560, 16
      %v5600 = vrot.slane %v5598, 4
      %v5601 = vor.u32 %v5597, %v5600
      %v5602 = vsel %vm978, %v5552, %v5601
      %v5603 = vrot.slane %v4263, 3
      %v5604 = vrot.slane %v4259, 4
      %v5605 = vor.u32 %v5603, %v5604
      %v5606 = vsel %vm978, %v5556, %v5605
      %v5608 = vshrl.u32 %v4270, 16
      %v5610 = vrot.slane %v5608, 3
      %v5611 = vshll.u32 %v4270, 16
      %v5613 = vrot.slane %v5611, 4
      %v5614 = vor.u32 %v5610, %v5613
      %v5615 = vsel %vm978, %v5565, %v5614
      %v5617 = vshrl.u32 %v4369, 16
      %v5619 = vrot.slane %v5617, 3
      %v5620 = vshll.u32 %v4369, 16
      %v5622 = vrot.slane %v5620, 4
      %v5623 = vor.u32 %v5619, %v5622
      %v5624 = vsel %vm978, %v5574, %v5623
      %v5626 = vshrl.u32 %v4415, 16
      %v5628 = vrot.slane %v5626, 3
      %v5629 = vshll.u32 %v4415, 16
      %v5631 = vrot.slane %v5629, 4
      %v5632 = vor.u32 %v5628, %v5631
      %v5633 = vsel %vm978, %v5583, %v5632
      %v5635 = vshrl.u32 %v4498, 16
      %v5637 = vrot.slane %v5635, 3
      %v5638 = vshll.u32 %v4498, 16
      %v5640 = vrot.slane %v5638, 4
      %v5641 = vor.u32 %v5637, %v5640
      %v5642 = vsel %vm978, %v5592, %v5641
      %v5644 = vshrl.u32 %v4562, 16
      %v5646 = vrot.slane %v5644, 3
      %v5647 = vshll.u32 %v4562, 16
      %v5649 = vrot.slane %v5647, 4
      %v5650 = vor.u32 %v5646, %v5649
      %v5651 = vsel %vm978, %v5601, %v5650
      %v5652 = vrot.slane %v4271, 3
      %v5653 = vrot.slane %v4267, 4
      %v5654 = vor.u32 %v5652, %v5653
      %v5655 = vsel %vm978, %v5605, %v5654
      %v5657 = vshrl.u32 %v4278, 16
      %v5659 = vrot.slane %v5657, 3
      %v5660 = vshll.u32 %v4278, 16
      %v5662 = vrot.slane %v5660, 4
      %v5663 = vor.u32 %v5659, %v5662
      %v5664 = vsel %vm978, %v5614, %v5663
      %v5666 = vshrl.u32 %v4371, 16
      %v5668 = vrot.slane %v5666, 3
      %v5669 = vshll.u32 %v4371, 16
      %v5671 = vrot.slane %v5669, 4
      %v5672 = vor.u32 %v5668, %v5671
      %v5673 = vsel %vm978, %v5623, %v5672
      %v5675 = vshrl.u32 %v4417, 16
      %v5677 = vrot.slane %v5675, 3
      %v5678 = vshll.u32 %v4417, 16
      %v5680 = vrot.slane %v5678, 4
      %v5681 = vor.u32 %v5677, %v5680
      %v5682 = vsel %vm978, %v5632, %v5681
      %v5684 = vshrl.u32 %v4502, 16
      %v5686 = vrot.slane %v5684, 3
      %v5687 = vshll.u32 %v4502, 16
      %v5689 = vrot.slane %v5687, 4
      %v5690 = vor.u32 %v5686, %v5689
      %v5691 = vsel %vm978, %v5641, %v5690
      %v5693 = vshrl.u32 %v4564, 16
      %v5695 = vrot.slane %v5693, 3
      %v5696 = vshll.u32 %v4564, 16
      %v5698 = vrot.slane %v5696, 4
      %v5699 = vor.u32 %v5695, %v5698
      %v5700 = vsel %vm978, %v5650, %v5699
      %v5701 = vrot.slane %v4279, 3
      %v5702 = vrot.slane %v4275, 4
      %v5703 = vor.u32 %v5701, %v5702
      %v5704 = vsel %vm978, %v5654, %v5703
      %v5706 = vshrl.u32 %v4286, 16
      %v5708 = vrot.slane %v5706, 3
      %v5709 = vshll.u32 %v4286, 16
      %v5711 = vrot.slane %v5709, 4
      %v5712 = vor.u32 %v5708, %v5711
      %v5713 = vsel %vm978, %v5663, %v5712
      %v5715 = vshrl.u32 %v4373, 16
      %v5717 = vrot.slane %v5715, 3
      %v5718 = vshll.u32 %v4373, 16
      %v5720 = vrot.slane %v5718, 4
      %v5721 = vor.u32 %v5717, %v5720
      %v5722 = vsel %vm978, %v5672, %v5721
      %v5724 = vshrl.u32 %v4419, 16
      %v5726 = vrot.slane %v5724, 3
      %v5727 = vshll.u32 %v4419, 16
      %v5729 = vrot.slane %v5727, 4
      %v5730 = vor.u32 %v5726, %v5729
      %v5731 = vsel %vm978, %v5681, %v5730
      %v5733 = vshrl.u32 %v4506, 16
      %v5735 = vrot.slane %v5733, 3
      %v5736 = vshll.u32 %v4506, 16
      %v5738 = vrot.slane %v5736, 4
      %v5739 = vor.u32 %v5735, %v5738
      %v5740 = vsel %vm978, %v5690, %v5739
      %v5742 = vshrl.u32 %v4566, 16
      %v5744 = vrot.slane %v5742, 3
      %v5745 = vshll.u32 %v4566, 16
      %v5747 = vrot.slane %v5745, 4
      %v5748 = vor.u32 %v5744, %v5747
      %v5749 = vsel %vm978, %v5699, %v5748
      %v5750 = vrot.slane %v4287, 3
      %v5751 = vrot.slane %v4283, 4
      %v5752 = vor.u32 %v5750, %v5751
      %v5753 = vsel %vm978, %v5703, %v5752
      %v5755 = vshrl.u32 %v4294, 16
      %v5757 = vrot.slane %v5755, 3
      %v5758 = vshll.u32 %v4294, 16
      %v5760 = vrot.slane %v5758, 4
      %v5761 = vor.u32 %v5757, %v5760
      %v5762 = vsel %vm978, %v5712, %v5761
      %v5764 = vshrl.u32 %v4375, 16
      %v5766 = vrot.slane %v5764, 3
      %v5767 = vshll.u32 %v4375, 16
      %v5769 = vrot.slane %v5767, 4
      %v5770 = vor.u32 %v5766, %v5769
      %v5771 = vsel %vm978, %v5721, %v5770
      %v5773 = vshrl.u32 %v4421, 16
      %v5775 = vrot.slane %v5773, 3
      %v5776 = vshll.u32 %v4421, 16
      %v5778 = vrot.slane %v5776, 4
      %v5779 = vor.u32 %v5775, %v5778
      %v5780 = vsel %vm978, %v5730, %v5779
      %v5782 = vshrl.u32 %v4510, 16
      %v5784 = vrot.slane %v5782, 3
      %v5785 = vshll.u32 %v4510, 16
      %v5787 = vrot.slane %v5785, 4
      %v5788 = vor.u32 %v5784, %v5787
      %v5789 = vsel %vm978, %v5739, %v5788
      %v5791 = vshrl.u32 %v4568, 16
      %v5793 = vrot.slane %v5791, 3
      %v5794 = vshll.u32 %v4568, 16
      %v5796 = vrot.slane %v5794, 4
      %v5797 = vor.u32 %v5793, %v5796
      %v5798 = vsel %vm978, %v5748, %v5797
      %v5799 = vrot.slane %v4295, 3
      %v5800 = vrot.slane %v4291, 4
      %v5801 = vor.u32 %v5799, %v5800
      %v5802 = vsel %vm978, %v5752, %v5801
      %v5804 = vshrl.u32 %v4302, 16
      %v5806 = vrot.slane %v5804, 3
      %v5807 = vshll.u32 %v4302, 16
      %v5809 = vrot.slane %v5807, 4
      %v5810 = vor.u32 %v5806, %v5809
      %v5811 = vsel %vm978, %v5761, %v5810
      %v5813 = vshrl.u32 %v4377, 16
      %v5815 = vrot.slane %v5813, 3
      %v5816 = vshll.u32 %v4377, 16
      %v5818 = vrot.slane %v5816, 4
      %v5819 = vor.u32 %v5815, %v5818
      %v5820 = vsel %vm978, %v5770, %v5819
      %v5822 = vshrl.u32 %v4423, 16
      %v5824 = vrot.slane %v5822, 3
      %v5825 = vshll.u32 %v4423, 16
      %v5827 = vrot.slane %v5825, 4
      %v5828 = vor.u32 %v5824, %v5827
      %v5829 = vsel %vm978, %v5779, %v5828
      %v5831 = vshrl.u32 %v4514, 16
      %v5833 = vrot.slane %v5831, 3
      %v5834 = vshll.u32 %v4514, 16
      %v5836 = vrot.slane %v5834, 4
      %v5837 = vor.u32 %v5833, %v5836
      %v5838 = vsel %vm978, %v5788, %v5837
      %v5840 = vshrl.u32 %v4570, 16
      %v5842 = vrot.slane %v5840, 3
      %v5843 = vshll.u32 %v4570, 16
      %v5845 = vrot.slane %v5843, 4
      %v5846 = vor.u32 %v5842, %v5845
      %v5847 = vsel %vm978, %v5797, %v5846
      %v5848 = vrot.slane %v4303, 3
      %v5849 = vrot.slane %v4299, 4
      %v5850 = vor.u32 %v5848, %v5849
      %v5851 = vsel %vm978, %v5801, %v5850
      %v5853 = vshrl.u32 %v4578, 16
      %v5855 = vrot.slane %v5853, 3
      %v5856 = vshll.u32 %v4578, 16
      %v5858 = vrot.slane %v5856, 4
      %v5859 = vor.u32 %v5855, %v5858
      %v5860 = vsel %vm978, %v5810, %v5859
      %v5862 = vshrl.u32 %v4582, 16
      %v5864 = vrot.slane %v5862, 3
      %v5865 = vshll.u32 %v4582, 16
      %v5867 = vrot.slane %v5865, 4
      %v5868 = vor.u32 %v5864, %v5867
      %v5869 = vsel %vm978, %v5819, %v5868
      %v5871 = vshrl.u32 %v4425, 16
      %v5873 = vrot.slane %v5871, 3
      %v5874 = vshll.u32 %v4425, 16
      %v5876 = vrot.slane %v5874, 4
      %v5877 = vor.u32 %v5873, %v5876
      %v5878 = vsel %vm978, %v5828, %v5877
      %v5880 = vshrl.u32 %v4518, 16
      %v5882 = vrot.slane %v5880, 3
      %v5883 = vshll.u32 %v4518, 16
      %v5885 = vrot.slane %v5883, 4
      %v5886 = vor.u32 %v5882, %v5885
      %v5887 = vsel %vm978, %v5837, %v5886
      %v5889 = vshrl.u32 %v4572, 16
      %v5891 = vrot.slane %v5889, 3
      %v5892 = vshll.u32 %v4572, 16
      %v5894 = vrot.slane %v5892, 4
      %v5895 = vor.u32 %v5891, %v5894
      %v5896 = vsel %vm978, %v5846, %v5895
      %v5897 = vrot.slane %v4520, 3
      %v5898 = vrot.slane %v4523, 4
      %v5899 = vor.u32 %v5897, %v5898
      %v5900 = vsel %vm978, %v5850, %v5899
      %v5902 = vshrl.u32 %v4580, 16
      %v5904 = vrot.slane %v5902, 3
      %v5905 = vshll.u32 %v4580, 16
      %v5907 = vrot.slane %v5905, 4
      %v5908 = vor.u32 %v5904, %v5907
      %v5909 = vsel %vm978, %v5859, %v5908
      %v5911 = vshrl.u32 %v4583, 16
      %v5913 = vrot.slane %v5911, 3
      %v5914 = vshll.u32 %v4583, 16
      %v5916 = vrot.slane %v5914, 4
      %v5917 = vor.u32 %v5913, %v5916
      %v5918 = vsel %vm978, %v5868, %v5917
      %v5920 = vshrl.u32 %v4427, 16
      %v5922 = vrot.slane %v5920, 3
      %v5923 = vshll.u32 %v4427, 16
      %v5925 = vrot.slane %v5923, 4
      %v5926 = vor.u32 %v5922, %v5925
      %v5927 = vsel %vm978, %v5877, %v5926
      %v5929 = vshrl.u32 %v4527, 16
      %v5931 = vrot.slane %v5929, 3
      %v5932 = vshll.u32 %v4527, 16
      %v5934 = vrot.slane %v5932, 4
      %v5935 = vor.u32 %v5931, %v5934
      %v5936 = vsel %vm978, %v5886, %v5935
      %v5938 = vshrl.u32 %v4574, 16
      %v5940 = vrot.slane %v5938, 3
      %v5941 = vshll.u32 %v4574, 16
      %v5943 = vrot.slane %v5941, 4
      %v5944 = vor.u32 %v5940, %v5943
      %v5945 = vsel %vm978, %v5895, %v5944
      %v5946 = vsel %vm978, %v5899, %v4737
      %v5947 = vsel %vm978, %v5908, %v4746
      %v5948 = vsel %vm978, %v5917, %v4763
      %v5950 = vshrl.u32 %v4305, 16
      %v5952 = vrot.slane %v5950, 3
      %v5953 = vshll.u32 %v4305, 16
      %v5955 = vrot.slane %v5953, 4
      %v5956 = vor.u32 %v5952, %v5955
      %v5957 = vsel %vm978, %v5810, %v5956
      %v5959 = vshrl.u32 %v4376, 16
      %v5961 = vrot.slane %v5959, 3
      %v5962 = vshll.u32 %v4376, 16
      %v5964 = vrot.slane %v5962, 4
      %v5965 = vor.u32 %v5961, %v5964
      %v5966 = vsel %vm978, %v5819, %v5965
      %v5968 = vshrl.u32 %v4426, 16
      %v5970 = vrot.slane %v5968, 3
      %v5971 = vshll.u32 %v4426, 16
      %v5973 = vrot.slane %v5971, 4
      %v5974 = vor.u32 %v5970, %v5973
      %v5975 = vsel %vm978, %v5926, %v5974
      %v5977 = vshrl.u32 %v4526, 16
      %v5979 = vrot.slane %v5977, 3
      %v5980 = vshll.u32 %v4526, 16
      %v5982 = vrot.slane %v5980, 4
      %v5983 = vor.u32 %v5979, %v5982
      %v5984 = vsel %vm978, %v5935, %v5983
      %v5986 = vshrl.u32 %v4576, 16
      %v5988 = vrot.slane %v5986, 3
      %v5989 = vshll.u32 %v4576, 16
      %v5991 = vrot.slane %v5989, 4
      %v5992 = vor.u32 %v5988, %v5991
      %v5993 = vsel %vm978, %v5944, %v5992
      %v5995 = vshrl.u32 %v4120, 16
      %v5997 = vrot.slane %v5995, 3
      %v5998 = vshll.u32 %v4120, 16
      %v6000 = vrot.slane %v5998, 4
      %v6001 = vor.u32 %v5997, %v6000
      %v6002 = vsel %vm978, %v4746, %v6001
      %v6004 = vshrl.u32 %v4330, 16
      %v6006 = vrot.slane %v6004, 3
      %v6007 = vshll.u32 %v4330, 16
      %v6009 = vrot.slane %v6007, 4
      %v6010 = vor.u32 %v6006, %v6009
      %v6011 = vsel %vm978, %v4763, %v6010
      %v6310 = vunpack.c.l.b16 %v4584
      %v6311 = vunpack.c.l.b16 %v4585
      %v6312 = vunpack.c.l.b16 %v4586
      %v6313 = vunpack.c.l.b16 %v4587
      %v6314 = vunpack.c.l.b16 %v4588
      %v6315 = vunpack.c.l.b16 %v4589
      %v6316 = vunpack.c.l.b16 %v4590
      %v6317 = vunpack.c.l.b16 %v4591
      %v6318 = vunpack.c.l.b16 %v4592
      %v6319 = vunpack.c.l.b16 %v4593
      %v6320 = vunpack.c.l.b16 %v4594
      %v6321 = vunpack.c.l.b16 %v4595
      %v6322 = vunpack.c.l.b16 %v4596
      %v6323 = vunpack.c.l.b16 %v4597
      %v6324 = vunpack.c.l.b16 %v4598
      %v6325 = vunpack.c.l.b16 %v4599
      %v6326 = vunpack.c.l.b16 %v4600
      %v6327 = vunpack.c.l.b16 %v4601
      %v6328 = vunpack.c.l.b16 %v4602
      %v6329 = vunpack.c.l.b16 %v4603
      %v6330 = vunpack.c.l.b16 %v4604
      %v6331 = vunpack.c.l.b16 %v4605
      %v6332 = vunpack.c.l.b16 %v4606
      %v6333 = vunpack.c.l.b16 %v4607
      %v6334 = vunpack.c.l.b16 %v4608
      %v6335 = vunpack.c.l.b16 %v4609
      %v6336 = vunpack.c.l.b16 %v4610
      %v6337 = vunpack.c.l.b16 %v4611
      %v6338 = vunpack.c.l.b16 %v4612
      %v6339 = vunpack.c.l.b16 %v4613
      %v6340 = vunpack.c.l.b16 %v4614
      %v6341 = vunpack.c.l.b16 %v4615
      %v6342 = vunpack.c.l.b16 %v4616
      %v6343 = vunpack.c.l.b16 %v4617
      %v6344 = vunpack.c.l.b16 %v4618
      %v6345 = vunpack.c.l.b16 %v4619
      %v6346 = vunpack.c.l.b16 %v4620
      %v6347 = vunpack.c.l.b16 %v4621
      %v6348 = vunpack.c.l.b16 %v4622
      %v6349 = vunpack.c.l.b16 %v4623
      %v6350 = vunpack.c.l.b16 %v4624
      %v6351 = vunpack.c.l.b16 %v4625
      %v6352 = vunpack.c.l.b16 %v4626
      %v6353 = vunpack.c.l.b16 %v4627
      %v6354 = vunpack.c.l.b16 %v4628
      %v6355 = vunpack.c.l.b16 %v4629
      %v6356 = vunpack.c.l.b16 %v4630
      %v6357 = vunpack.c.l.b16 %v4631
      %v6358 = vunpack.c.l.b16 %v4632
      %v6359 = vunpack.c.l.b16 %v4633
      %v6360 = vunpack.c.l.b16 %v4634
      %v6361 = vunpack.c.l.b16 %v4635
      %v6362 = vunpack.c.l.b16 %v4636
      %v6363 = vunpack.c.l.b16 %v4637
      %v6364 = vunpack.c.l.b16 %v4638
      %v6365 = vunpack.c.l.b16 %v4639
      %v6366 = vunpack.c.l.b16 %v4640
      %v6367 = vunpack.c.l.b16 %v4641
      %v6368 = vunpack.c.l.b16 %v4642
      %v6369 = vunpack.c.l.b16 %v4643
      %v6370 = vunpack.c.l.b16 %v4644
      %v6371 = vunpack.c.l.b16 %v4645
      %v6372 = vunpack.c.l.b16 %v4646
      %v6373 = vunpack.c.l.b16 %v4647
      %v6374 = vunpack.c.l.b16 %v4648
      %v6375 = vunpack.c.l.b16 %v4649
      %v6376 = vunpack.c.l.b16 %v4650
      %v6377 = vunpack.c.l.b16 %v4651
      %v6378 = vunpack.c.l.b16 %v4652
      %v6379 = vunpack.c.l.b16 %v4653
      %v6380 = vunpack.c.l.b16 %v4654
      %v6381 = vunpack.c.l.b16 %v4655
      %v6382 = vunpack.c.l.b16 %v4656
      %v6383 = vunpack.c.l.b16 %v4657
      %v6384 = vunpack.c.l.b16 %v4658
      %v6385 = vunpack.c.l.b16 %v4659
      %v6386 = vunpack.c.l.b16 %v4660
      %v6387 = vunpack.c.l.b16 %v4661
      %v6388 = vunpack.c.l.b16 %v4662
      %v6389 = vunpack.c.l.b16 %v4663
      %v6390 = vunpack.c.l.b16 %v4664
      %v6391 = vunpack.c.l.b16 %v4665
      %v6392 = vunpack.c.l.b16 %v4666
      %v6393 = vunpack.c.l.b16 %v4667
      %v6394 = vunpack.c.l.b16 %v4668
      %v6395 = vunpack.c.l.b16 %v4669
      %v6396 = vunpack.c.l.b16 %v4670
      %v6397 = vunpack.c.l.b16 %v4671
      %v6398 = vunpack.c.l.b16 %v4672
      %v6399 = vunpack.c.l.b16 %v4673
      %v6400 = vunpack.c.l.b16 %v4674
      %v6401 = vunpack.c.l.b16 %v4675
      %v6402 = vunpack.c.l.b16 %v4676
      %v6403 = vunpack.c.l.b16 %v4677
      %v6404 = vunpack.c.l.b16 %v4678
      %v6405 = vunpack.c.l.b16 %v4679
      %v6406 = vunpack.c.l.b16 %v4680
      %v6407 = vunpack.c.l.b16 %v4681
      %v6408 = vunpack.c.l.b16 %v4682
      %v6409 = vunpack.c.l.b16 %v4683
      %v6410 = vunpack.c.l.b16 %v4684
      %v6411 = vunpack.c.l.b16 %v4685
      %v6412 = vunpack.c.l.b16 %v4686
      %v6413 = vunpack.c.l.b16 %v4687
      %v6414 = vunpack.c.l.b16 %v4688
      %v6415 = vunpack.c.l.b16 %v4689
      %v6416 = vunpack.c.l.b16 %v4690
      %v6417 = vunpack.c.l.b16 %v4691
      %v6418 = vunpack.c.l.b16 %v4692
      %v6419 = vunpack.c.l.b16 %v4693
      %v6420 = vunpack.c.l.b16 %v4694
      %v6421 = vunpack.c.l.b16 %v4695
      %v6422 = vunpack.c.l.b16 %v4696
      %v6423 = vunpack.c.l.b16 %v4697
      %v6424 = vunpack.c.l.b16 %v4698
      %v6425 = vunpack.c.l.b16 %v4699
      %v6426 = vunpack.c.l.b16 %v4700
      %v6427 = vunpack.c.l.b16 %v4701
      %v6428 = vunpack.c.l.b16 %v4702
      %v6429 = vunpack.c.l.b16 %v4703
      %v6430 = vunpack.c.l.b16 %v4704
      %v6431 = vunpack.c.l.b16 %v4705
      %v6432 = vunpack.c.l.b16 %v4706
      %v6433 = vunpack.c.l.b16 %v4707
      %v6434 = vunpack.c.l.b16 %v4708
      %v6435 = vunpack.c.l.b16 %v4709
      %v6436 = vunpack.c.l.b16 %v4710
      %v6437 = vunpack.c.l.b16 %v4711
      %v6438 = vunpack.c.l.b16 %v4712
      %v6439 = vunpack.c.l.b16 %v4713
      %v6440 = vunpack.c.l.b16 %v4714
      %v6441 = vunpack.c.l.b16 %v4715
      %v6442 = vunpack.c.l.b16 %v4716
      %v6443 = vunpack.c.l.b16 %v4717
      %v6444 = vunpack.c.l.b16 %v4718
      %v6445 = vunpack.c.l.b16 %v4719
      %v6446 = vunpack.c.l.b16 %v4720
      %v6447 = vunpack.c.l.b16 %v4721
      %v6448 = vunpack.c.l.b16 %v4722
      %v6449 = vunpack.c.l.b16 %v4723
      %v6450 = vunpack.c.l.b16 %v4724
      %v6451 = vunpack.c.l.b16 %v4725
      %v6452 = vunpack.c.l.b16 %v4726
      %v6453 = vunpack.c.l.b16 %v4727
      %v6454 = vpack.c.b16 %v6311, %v6310
      %v6455 = vpack.c.b16 %v6313, %v6312
      %v6456 = vpack.c.b16 %v6315, %v6314
      %v6457 = vpack.c.b16 %v6317, %v6316
      %v6458 = vpack.c.b16 %v6319, %v6318
      %v6459 = vpack.c.b16 %v6321, %v6320
      %v6460 = vpack.c.b16 %v6323, %v6322
      %v6461 = vpack.c.b16 %v6325, %v6324
      %v6462 = vpack.c.b16 %v6327, %v6326
      %v6463 = vpack.c.b16 %v6329, %v6328
      %v6464 = vpack.c.b16 %v6331, %v6330
      %v6465 = vpack.c.b16 %v6333, %v6332
      %v6466 = vpack.c.b16 %v6335, %v6334
      %v6467 = vpack.c.b16 %v6337, %v6336
      %v6468 = vpack.c.b16 %v6339, %v6338
      %v6469 = vpack.c.b16 %v6341, %v6340
      %v6470 = vpack.c.b16 %v6343, %v6342
      %v6471 = vpack.c.b16 %v6345, %v6344
      %v6472 = vpack.c.b16 %v6347, %v6346
      %v6473 = vpack.c.b16 %v6349, %v6348
      %v6474 = vpack.c.b16 %v6351, %v6350
      %v6475 = vpack.c.b16 %v6353, %v6352
      %v6476 = vpack.c.b16 %v6355, %v6354
      %v6477 = vpack.c.b16 %v6357, %v6356
      %v6478 = vpack.c.b16 %v6359, %v6358
      %v6479 = vpack.c.b16 %v6361, %v6360
      %v6480 = vpack.c.b16 %v6363, %v6362
      %v6481 = vpack.c.b16 %v6365, %v6364
      %v6482 = vpack.c.b16 %v6367, %v6366
      %v6483 = vpack.c.b16 %v6369, %v6368
      %v6484 = vpack.c.b16 %v6371, %v6370
      %v6485 = vpack.c.b16 %v6373, %v6372
      %v6486 = vpack.c.b16 %v6375, %v6374
      %v6487 = vpack.c.b16 %v6377, %v6376
      %v6488 = vpack.c.b16 %v6379, %v6378
      %v6489 = vpack.c.b16 %v6381, %v6380
      %v6490 = vpack.c.b16 %v6383, %v6382
      %v6491 = vpack.c.b16 %v6385, %v6384
      %v6492 = vpack.c.b16 %v6387, %v6386
      %v6493 = vpack.c.b16 %v6389, %v6388
      %v6494 = vpack.c.b16 %v6391, %v6390
      %v6495 = vpack.c.b16 %v6393, %v6392
      %v6496 = vpack.c.b16 %v6395, %v6394
      %v6497 = vpack.c.b16 %v6397, %v6396
      %v6498 = vpack.c.b16 %v6399, %v6398
      %v6499 = vpack.c.b16 %v6401, %v6400
      %v6500 = vpack.c.b16 %v6403, %v6402
      %v6501 = vpack.c.b16 %v6405, %v6404
      %v6502 = vpack.c.b16 %v6407, %v6406
      %v6503 = vpack.c.b16 %v6409, %v6408
      %v6504 = vpack.c.b16 %v6411, %v6410
      %v6505 = vpack.c.b16 %v6413, %v6412
      %v6506 = vpack.c.b16 %v6415, %v6414
      %v6507 = vpack.c.b16 %v6417, %v6416
      %v6508 = vpack.c.b16 %v6419, %v6418
      %v6509 = vpack.c.b16 %v6421, %v6420
      %v6510 = vpack.c.b16 %v6423, %v6422
      %v6511 = vpack.c.b16 %v6425, %v6424
      %v6512 = vpack.c.b16 %v6427, %v6426
      %v6513 = vpack.c.b16 %v6429, %v6428
      %v6514 = vpack.c.b16 %v6431, %v6430
      %v6515 = vpack.c.b16 %v6433, %v6432
      %v6516 = vpack.c.b16 %v6435, %v6434
      %v6517 = vpack.c.b16 %v6437, %v6436
      %v6518 = vpack.c.b16 %v6439, %v6438
      %v6519 = vpack.c.b16 %v6441, %v6440
      %v6520 = vpack.c.b16 %v6443, %v6442
      %v6521 = vpack.c.b16 %v6445, %v6444
      %v6522 = vpack.c.b16 %v6447, %v6446
      %v6523 = vpack.c.b16 %v6449, %v6448
      %v6524 = vpack.c.b16 %v6451, %v6450
      %v6525 = vpack.c.b16 %v6453, %v6452
      %6598 = vmatprep.subr.bf16.mxu0 0
      %6599 = vmatpush1.bf16.msra.mxu0 %v6454
      %6600 = vmatprep.subr.bf16.mxu0 0
      %6601 = vmatpush1.bf16.msra.mxu0 %v6455
      %6602 = vmatprep.subr.bf16.mxu0 0
      %6603 = vmatpush1.bf16.msra.mxu0 %v6456
      %6604 = vmatprep.subr.bf16.mxu0 0
      %6605 = vmatpush1.bf16.msra.mxu0 %v6457
      %6606 = vmatprep.subr.bf16.mxu0 0
      %6607 = vmatpush1.bf16.msra.mxu0 %v6458
      %6608 = vmatprep.subr.bf16.mxu0 0
      %6609 = vmatpush1.bf16.msra.mxu0 %v6459
      %6610 = vmatprep.subr.bf16.mxu0 0
      %6611 = vmatpush1.bf16.msra.mxu0 %v6460
      %6612 = vmatprep.subr.bf16.mxu0 0
      %6613 = vmatpush1.bf16.msra.mxu0 %v6461
      %6614 = vmatprep.subr.bf16.mxu0 0
      %6615 = vmatpush1.bf16.msra.mxu0 %v6462
      %6616 = vmatprep.subr.bf16.mxu0 0
      %6617 = vmatpush1.bf16.msra.mxu0 %v6463
      %6618 = vmatprep.subr.bf16.mxu0 0
      %6619 = vmatpush1.bf16.msra.mxu0 %v6464
      %6620 = vmatprep.subr.bf16.mxu0 0
      %6621 = vmatpush1.bf16.msra.mxu0 %v6465
      %6622 = vmatprep.subr.bf16.mxu0 0
      %6623 = vmatpush1.bf16.msra.mxu0 %v6466
      %6624 = vmatprep.subr.bf16.mxu0 0
      %6625 = vmatpush1.bf16.msra.mxu0 %v6467
      %6626 = vmatprep.subr.bf16.mxu0 0
      %6627 = vmatpush1.bf16.msra.mxu0 %v6468
      %6628 = vmatprep.subr.bf16.mxu0 0
      %6629 = vmatpush1.bf16.msra.mxu0 %v6469
      %6630 = vmatprep.mubr.bf16.mxu0 %v4755
      %6631 = vmatmul.mubr.bf16.gmra.mrb[0].mxu0 %v4738
      %v6632 = vpop.f32.mrb[0].mxu0
      %v6633 = vadd.f32 %v4733, %v6632
      %v6634 = vpop.f32.mrb[0].mxu0
      %v6635 = vpop.f32.mrb[0].mxu0
      %v6636 = vadd.f32 %v4733, %v6635
      %v6637 = vpop.f32.mrb[0].mxu0
      %6638 = vmatprep.mubr.bf16.mxu0 %v4877
      %6639 = vmatmul.mubr.bf16.gmra.mrb[0].mxu0 %v4868
      %v6640 = vpop.f32.mrb[0].mxu0
      %v6641 = vadd.f32 %v4733, %v6640
      %v6642 = vpop.f32.mrb[0].mxu0
      %v6643 = vpop.f32.mrb[0].mxu0
      %v6644 = vadd.f32 %v4733, %v6643
      %v6645 = vpop.f32.mrb[0].mxu0
      %6646 = vmatprep.mubr.bf16.mxu0 %v4937
      %6647 = vmatmul.mubr.bf16.gmra.mrb[0].mxu0 %v4936
      %v6648 = vpop.f32.mrb[0].mxu0
      %v6649 = vadd.f32 %v4733, %v6648
      %v6650 = vpop.f32.mrb[0].mxu0
      %v6651 = vpop.f32.mrb[0].mxu0
      %v6652 = vadd.f32 %v4733, %v6651
      %v6653 = vpop.f32.mrb[0].mxu0
      %6654 = vmatprep.mubr.bf16.mxu0 %v4847
      %6655 = vmatmul.mubr.bf16.gmra.mrb[0].mxu0 %v4830
      %v6656 = vpop.f32.mrb[0].mxu0
      %v6657 = vadd.f32 %v4733, %v6656
      %v6658 = vpop.f32.mrb[0].mxu0
      %v6659 = vpop.f32.mrb[0].mxu0
      %v6660 = vadd.f32 %v4733, %v6659
      %v6661 = vpop.f32.mrb[0].mxu0
      %6662 = vmatprep.mubr.bf16.mxu0 %v4926
      %6663 = vmatmul.mubr.bf16.gmra.mrb[0].mxu0 %v4917
      %v6664 = vpop.f32.mrb[0].mxu0
      %v6665 = vadd.f32 %v4733, %v6664
      %v6666 = vpop.f32.mrb[0].mxu0
      %v6667 = vpop.f32.mrb[0].mxu0
      %v6668 = vadd.f32 %v4733, %v6667
      %v6669 = vpop.f32.mrb[0].mxu0
      %6670 = vmatprep.mubr.bf16.mxu0 %v4978
      %6671 = vmatmul.mubr.bf16.gmra.mrb[0].mxu0 %v4969
      %v6672 = vpop.f32.mrb[0].mxu0
      %v6673 = vadd.f32 %v4733, %v6672
      %v6674 = vpop.f32.mrb[0].mxu0
      %v6675 = vpop.f32.mrb[0].mxu0
      %v6676 = vadd.f32 %v4733, %v6675
      %v6677 = vpop.f32.mrb[0].mxu0
      %6678 = vmatprep.mubr.bf16.mxu0 %v5027
      %6679 = vmatmul.mubr.bf16.gmra.mrb[0].mxu0 %v5018
      %v6680 = vpop.f32.mrb[0].mxu0
      %v6681 = vadd.f32 %v4733, %v6680
      %v6682 = vpop.f32.mrb[0].mxu0
      %v6683 = vpop.f32.mrb[0].mxu0
      %v6684 = vadd.f32 %v4733, %v6683
      %v6685 = vpop.f32.mrb[0].mxu0
      %6686 = vmatprep.mubr.bf16.mxu0 %v5076
      %6687 = vmatmul.mubr.bf16.gmra.mrb[0].mxu0 %v5067
      %v6688 = vpop.f32.mrb[0].mxu0
      %v6689 = vadd.f32 %v4733, %v6688
      %v6690 = vpop.f32.mrb[0].mxu0
      %v6691 = vpop.f32.mrb[0].mxu0
      %v6692 = vadd.f32 %v4733, %v6691
      %v6693 = vpop.f32.mrb[0].mxu0
      %6694 = vmatprep.mubr.bf16.mxu0 %v5125
      %6695 = vmatmul.mubr.bf16.gmra.mrb[0].mxu0 %v5116
      %v6696 = vpop.f32.mrb[0].mxu0
      %v6697 = vadd.f32 %v4733, %v6696
      %v6698 = vpop.f32.mrb[0].mxu0
      %v6699 = vpop.f32.mrb[0].mxu0
      %v6700 = vadd.f32 %v4733, %v6699
      %v6701 = vpop.f32.mrb[0].mxu0
      %6702 = vmatprep.mubr.bf16.mxu0 %v5174
      %6703 = vmatmul.mubr.bf16.gmra.mrb[0].mxu0 %v5165
      %v6704 = vpop.f32.mrb[0].mxu0
      %v6705 = vadd.f32 %v4733, %v6704
      %v6706 = vpop.f32.mrb[0].mxu0
      %v6707 = vpop.f32.mrb[0].mxu0
      %v6708 = vadd.f32 %v4733, %v6707
      %v6709 = vpop.f32.mrb[0].mxu0
      %6710 = vmatprep.mubr.bf16.mxu0 %v5223
      %6711 = vmatmul.mubr.bf16.gmra.mrb[0].mxu0 %v5214
      %v6712 = vpop.f32.mrb[0].mxu0
      %v6713 = vadd.f32 %v4733, %v6712
      %v6714 = vpop.f32.mrb[0].mxu0
      %v6715 = vpop.f32.mrb[0].mxu0
      %v6716 = vadd.f32 %v4733, %v6715
      %v6717 = vpop.f32.mrb[0].mxu0
      %6718 = vmatprep.mubr.bf16.mxu0 %v5272
      %6719 = vmatmul.mubr.bf16.gmra.mrb[0].mxu0 %v5263
      %v6720 = vpop.f32.mrb[0].mxu0
      %v6721 = vadd.f32 %v4733, %v6720
      %v6722 = vpop.f32.mrb[0].mxu0
      %v6723 = vpop.f32.mrb[0].mxu0
      %v6724 = vadd.f32 %v4733, %v6723
      %v6725 = vpop.f32.mrb[0].mxu0
      %6726 = vmatprep.mubr.bf16.mxu0 %v5321
      %6727 = vmatmul.mubr.bf16.gmra.mrb[0].mxu0 %v5312
      %v6728 = vpop.f32.mrb[0].mxu0
      %v6729 = vadd.f32 %v4733, %v6728
      %v6730 = vpop.f32.mrb[0].mxu0
      %v6731 = vpop.f32.mrb[0].mxu0
      %v6732 = vadd.f32 %v4733, %v6731
      %v6733 = vpop.f32.mrb[0].mxu0
      %6734 = vmatprep.mubr.bf16.mxu0 %v5370
      %6735 = vmatmul.mubr.bf16.gmra.mrb[0].mxu0 %v5361
      %v6736 = vpop.f32.mrb[0].mxu0
      %v6737 = vadd.f32 %v4733, %v6736
      %v6738 = vpop.f32.mrb[0].mxu0
      %v6739 = vpop.f32.mrb[0].mxu0
      %v6740 = vadd.f32 %v4733, %v6739
      %v6741 = vpop.f32.mrb[0].mxu0
      %6742 = vmatprep.mubr.bf16.mxu0 %v5419
      %6743 = vmatmul.mubr.bf16.gmra.mrb[0].mxu0 %v5410
      %v6744 = vpop.f32.mrb[0].mxu0
      %v6745 = vadd.f32 %v4733, %v6744
      %v6746 = vpop.f32.mrb[0].mxu0
      %v6747 = vpop.f32.mrb[0].mxu0
      %v6748 = vadd.f32 %v4733, %v6747
      %v6749 = vpop.f32.mrb[0].mxu0
      %6750 = vmatprep.mubr.bf16.mxu0 %v5468
      %6751 = vmatmul.mubr.bf16.gmra.mrb[0].mxu0 %v5459
      %v6752 = vpop.f32.mrb[0].mxu0
      %v6753 = vadd.f32 %v4733, %v6752
      %v6754 = vpop.f32.mrb[0].mxu0
      %v6755 = vpop.f32.mrb[0].mxu0
      %v6756 = vadd.f32 %v4733, %v6755
      %v6757 = vpop.f32.mrb[0].mxu0
      %6758 = vmatprep.mubr.bf16.mxu0 %v5517
      %6759 = vmatmul.mubr.bf16.gmra.mrb[0].mxu0 %v5508
      %v6760 = vpop.f32.mrb[0].mxu0
      %v6761 = vadd.f32 %v4733, %v6760
      %v6762 = vpop.f32.mrb[0].mxu0
      %v6763 = vpop.f32.mrb[0].mxu0
      %v6764 = vadd.f32 %v4733, %v6763
      %v6765 = vpop.f32.mrb[0].mxu0
      %6766 = vmatprep.mubr.bf16.mxu0 %v5566
      %6767 = vmatmul.mubr.bf16.gmra.mrb[0].mxu0 %v5557
      %v6768 = vpop.f32.mrb[0].mxu0
      %v6769 = vadd.f32 %v4733, %v6768
      %v6770 = vpop.f32.mrb[0].mxu0
      %v6771 = vpop.f32.mrb[0].mxu0
      %v6772 = vadd.f32 %v4733, %v6771
      %v6773 = vpop.f32.mrb[0].mxu0
      %6774 = vmatprep.mubr.bf16.mxu0 %v5615
      %6775 = vmatmul.mubr.bf16.gmra.mrb[0].mxu0 %v5606
      %v6776 = vpop.f32.mrb[0].mxu0
      %v6777 = vadd.f32 %v4733, %v6776
      %v6778 = vpop.f32.mrb[0].mxu0
      %v6779 = vpop.f32.mrb[0].mxu0
      %v6780 = vadd.f32 %v4733, %v6779
      %v6781 = vpop.f32.mrb[0].mxu0
      %6782 = vmatprep.mubr.bf16.mxu0 %v5664
      %6783 = vmatmul.mubr.bf16.gmra.mrb[0].mxu0 %v5655
      %v6784 = vpop.f32.mrb[0].mxu0
      %v6785 = vadd.f32 %v4733, %v6784
      %v6786 = vpop.f32.mrb[0].mxu0
      %v6787 = vpop.f32.mrb[0].mxu0
      %v6788 = vadd.f32 %v4733, %v6787
      %v6789 = vpop.f32.mrb[0].mxu0
      %6790 = vmatprep.mubr.bf16.mxu0 %v5713
      %6791 = vmatmul.mubr.bf16.gmra.mrb[0].mxu0 %v5704
      %v6792 = vpop.f32.mrb[0].mxu0
      %v6793 = vadd.f32 %v4733, %v6792
      %v6794 = vpop.f32.mrb[0].mxu0
      %v6795 = vpop.f32.mrb[0].mxu0
      %v6796 = vadd.f32 %v4733, %v6795
      %v6797 = vpop.f32.mrb[0].mxu0
      %6798 = vmatprep.mubr.bf16.mxu0 %v5762
      %6799 = vmatmul.mubr.bf16.gmra.mrb[0].mxu0 %v5753
      %v6800 = vpop.f32.mrb[0].mxu0
      %v6801 = vadd.f32 %v4733, %v6800
      %v6802 = vpop.f32.mrb[0].mxu0
      %v6803 = vpop.f32.mrb[0].mxu0
      %v6804 = vadd.f32 %v4733, %v6803
      %v6805 = vpop.f32.mrb[0].mxu0
      %6806 = vmatprep.mubr.bf16.mxu0 %v5811
      %6807 = vmatmul.mubr.bf16.gmra.mrb[0].mxu0 %v5802
      %v6808 = vpop.f32.mrb[0].mxu0
      %v6809 = vadd.f32 %v4733, %v6808
      %v6810 = vpop.f32.mrb[0].mxu0
      %v6811 = vpop.f32.mrb[0].mxu0
      %v6812 = vadd.f32 %v4733, %v6811
      %v6813 = vpop.f32.mrb[0].mxu0
      %6814 = vmatprep.mubr.bf16.mxu0 %v5957
      %6815 = vmatmul.mubr.bf16.gmra.mrb[0].mxu0 %v5851
      %v6816 = vpop.f32.mrb[0].mxu0
      %v6817 = vadd.f32 %v4733, %v6816
      %v6818 = vpop.f32.mrb[0].mxu0
      %v6819 = vpop.f32.mrb[0].mxu0
      %v6820 = vadd.f32 %v4733, %v6819
      %v6821 = vpop.f32.mrb[0].mxu0
      %6822 = vdwg.mxu0
      %6823 = vmatprep.subr.bf16.mxu0 0
      %6824 = vmatpush1.bf16.msra.mxu0 %v6470
      %6825 = vmatprep.subr.bf16.mxu0 0
      %6826 = vmatpush1.bf16.msra.mxu0 %v6471
      %6827 = vmatprep.subr.bf16.mxu0 0
      %6828 = vmatpush1.bf16.msra.mxu0 %v6472
      %6829 = vmatprep.subr.bf16.mxu0 0
      %6830 = vmatpush1.bf16.msra.mxu0 %v6473
      %6831 = vmatprep.subr.bf16.mxu0 0
      %6832 = vmatpush1.bf16.msra.mxu0 %v6474
      %6833 = vmatprep.subr.bf16.mxu0 0
      %6834 = vmatpush1.bf16.msra.mxu0 %v6475
      %6835 = vmatprep.subr.bf16.mxu0 0
      %6836 = vmatpush1.bf16.msra.mxu0 %v6476
      %6837 = vmatprep.subr.bf16.mxu0 0
      %6838 = vmatpush1.bf16.msra.mxu0 %v6477
      %6839 = vmatprep.subr.bf16.mxu0 0
      %6840 = vmatpush1.bf16.msra.mxu0 %v6478
      %6841 = vmatprep.subr.bf16.mxu0 0
      %6842 = vmatpush1.bf16.msra.mxu0 %v6479
      %6843 = vmatprep.subr.bf16.mxu0 0
      %6844 = vmatpush1.bf16.msra.mxu0 %v6480
      %6845 = vmatprep.subr.bf16.mxu0 0
      %6846 = vmatpush1.bf16.msra.mxu0 %v6481
      %6847 = vmatprep.subr.bf16.mxu0 0
      %6848 = vmatpush1.bf16.msra.mxu0 %v6482
      %6849 = vmatprep.subr.bf16.mxu0 0
      %6850 = vmatpush1.bf16.msra.mxu0 %v6483
      %6851 = vmatprep.subr.bf16.mxu0 0
      %6852 = vmatpush1.bf16.msra.mxu0 %v6484
      %6853 = vmatprep.subr.bf16.mxu0 0
      %6854 = vmatpush1.bf16.msra.mxu0 %v6485
      %6855 = vmatprep.mubr.bf16.mxu0 %v4789
      %6856 = vmatmul.mubr.bf16.gmra.mrb[0].mxu0 %v4772
      %v6857 = vpop.f32.mrb[0].mxu0
      %v6858 = vadd.f32 %v6633, %v6857
      %v6859 = vpop.f32.mrb[0].mxu0
      %v6860 = vpop.f32.mrb[0].mxu0
      %v6861 = vadd.f32 %v6636, %v6860
      %v6862 = vpop.f32.mrb[0].mxu0
      %6863 = vmatprep.mubr.bf16.mxu0 %v4895
      %6864 = vmatmul.mubr.bf16.gmra.mrb[0].mxu0 %v4886
      %v6865 = vpop.f32.mrb[0].mxu0
      %v6866 = vadd.f32 %v6641, %v6865
      %v6867 = vpop.f32.mrb[0].mxu0
      %v6868 = vpop.f32.mrb[0].mxu0
      %v6869 = vadd.f32 %v6644, %v6868
      %v6870 = vpop.f32.mrb[0].mxu0
      %6871 = vmatprep.mubr.bf16.mxu0 %v4947
      %6872 = vmatmul.mubr.bf16.gmra.mrb[0].mxu0 %v4938
      %v6873 = vpop.f32.mrb[0].mxu0
      %v6874 = vadd.f32 %v6649, %v6873
      %v6875 = vpop.f32.mrb[0].mxu0
      %v6876 = vpop.f32.mrb[0].mxu0
      %v6877 = vadd.f32 %v6652, %v6876
      %v6878 = vpop.f32.mrb[0].mxu0
      %6879 = vmatprep.mubr.bf16.mxu0 %v4996
      %6880 = vmatmul.mubr.bf16.gmra.mrb[0].mxu0 %v4864
      %v6881 = vpop.f32.mrb[0].mxu0
      %v6882 = vadd.f32 %v6657, %v6881
      %v6883 = vpop.f32.mrb[0].mxu0
      %v6884 = vpop.f32.mrb[0].mxu0
      %v6885 = vadd.f32 %v6660, %v6884
      %v6886 = vpop.f32.mrb[0].mxu0
      %6887 = vmatprep.mubr.bf16.mxu0 %v5045
      %6888 = vmatmul.mubr.bf16.gmra.mrb[0].mxu0 %v4935
      %v6889 = vpop.f32.mrb[0].mxu0
      %v6890 = vadd.f32 %v6665, %v6889
      %v6891 = vpop.f32.mrb[0].mxu0
      %v6892 = vpop.f32.mrb[0].mxu0
      %v6893 = vadd.f32 %v6668, %v6892
      %v6894 = vpop.f32.mrb[0].mxu0
      %6895 = vmatprep.mubr.bf16.mxu0 %v5094
      %6896 = vmatmul.mubr.bf16.gmra.mrb[0].mxu0 %v4987
      %v6897 = vpop.f32.mrb[0].mxu0
      %v6898 = vadd.f32 %v6673, %v6897
      %v6899 = vpop.f32.mrb[0].mxu0
      %v6900 = vpop.f32.mrb[0].mxu0
      %v6901 = vadd.f32 %v6676, %v6900
      %v6902 = vpop.f32.mrb[0].mxu0
      %6903 = vmatprep.mubr.bf16.mxu0 %v5143
      %6904 = vmatmul.mubr.bf16.gmra.mrb[0].mxu0 %v5036
      %v6905 = vpop.f32.mrb[0].mxu0
      %v6906 = vadd.f32 %v6681, %v6905
      %v6907 = vpop.f32.mrb[0].mxu0
      %v6908 = vpop.f32.mrb[0].mxu0
      %v6909 = vadd.f32 %v6684, %v6908
      %v6910 = vpop.f32.mrb[0].mxu0
      %6911 = vmatprep.mubr.bf16.mxu0 %v5192
      %6912 = vmatmul.mubr.bf16.gmra.mrb[0].mxu0 %v5085
      %v6913 = vpop.f32.mrb[0].mxu0
      %v6914 = vadd.f32 %v6689, %v6913
      %v6915 = vpop.f32.mrb[0].mxu0
      %v6916 = vpop.f32.mrb[0].mxu0
      %v6917 = vadd.f32 %v6692, %v6916
      %v6918 = vpop.f32.mrb[0].mxu0
      %6919 = vmatprep.mubr.bf16.mxu0 %v5241
      %6920 = vmatmul.mubr.bf16.gmra.mrb[0].mxu0 %v5134
      %v6921 = vpop.f32.mrb[0].mxu0
      %v6922 = vadd.f32 %v6697, %v6921
      %v6923 = vpop.f32.mrb[0].mxu0
      %v6924 = vpop.f32.mrb[0].mxu0
      %v6925 = vadd.f32 %v6700, %v6924
      %v6926 = vpop.f32.mrb[0].mxu0
      %6927 = vmatprep.mubr.bf16.mxu0 %v5290
      %6928 = vmatmul.mubr.bf16.gmra.mrb[0].mxu0 %v5183
      %v6929 = vpop.f32.mrb[0].mxu0
      %v6930 = vadd.f32 %v6705, %v6929
      %v6931 = vpop.f32.mrb[0].mxu0
      %v6932 = vpop.f32.mrb[0].mxu0
      %v6933 = vadd.f32 %v6708, %v6932
      %v6934 = vpop.f32.mrb[0].mxu0
      %6935 = vmatprep.mubr.bf16.mxu0 %v5339
      %6936 = vmatmul.mubr.bf16.gmra.mrb[0].mxu0 %v5232
      %v6937 = vpop.f32.mrb[0].mxu0
      %v6938 = vadd.f32 %v6713, %v6937
      %v6939 = vpop.f32.mrb[0].mxu0
      %v6940 = vpop.f32.mrb[0].mxu0
      %v6941 = vadd.f32 %v6716, %v6940
      %v6942 = vpop.f32.mrb[0].mxu0
      %6943 = vmatprep.mubr.bf16.mxu0 %v5388
      %6944 = vmatmul.mubr.bf16.gmra.mrb[0].mxu0 %v5281
      %v6945 = vpop.f32.mrb[0].mxu0
      %v6946 = vadd.f32 %v6721, %v6945
      %v6947 = vpop.f32.mrb[0].mxu0
      %v6948 = vpop.f32.mrb[0].mxu0
      %v6949 = vadd.f32 %v6724, %v6948
      %v6950 = vpop.f32.mrb[0].mxu0
      %6951 = vmatprep.mubr.bf16.mxu0 %v5437
      %6952 = vmatmul.mubr.bf16.gmra.mrb[0].mxu0 %v5330
      %v6953 = vpop.f32.mrb[0].mxu0
      %v6954 = vadd.f32 %v6729, %v6953
      %v6955 = vpop.f32.mrb[0].mxu0
      %v6956 = vpop.f32.mrb[0].mxu0
      %v6957 = vadd.f32 %v6732, %v6956
      %v6958 = vpop.f32.mrb[0].mxu0
      %6959 = vmatprep.mubr.bf16.mxu0 %v5486
      %6960 = vmatmul.mubr.bf16.gmra.mrb[0].mxu0 %v5379
      %v6961 = vpop.f32.mrb[0].mxu0
      %v6962 = vadd.f32 %v6737, %v6961
      %v6963 = vpop.f32.mrb[0].mxu0
      %v6964 = vpop.f32.mrb[0].mxu0
      %v6965 = vadd.f32 %v6740, %v6964
      %v6966 = vpop.f32.mrb[0].mxu0
      %6967 = vmatprep.mubr.bf16.mxu0 %v5535
      %6968 = vmatmul.mubr.bf16.gmra.mrb[0].mxu0 %v5428
      %v6969 = vpop.f32.mrb[0].mxu0
      %v6970 = vadd.f32 %v6745, %v6969
      %v6971 = vpop.f32.mrb[0].mxu0
      %v6972 = vpop.f32.mrb[0].mxu0
      %v6973 = vadd.f32 %v6748, %v6972
      %v6974 = vpop.f32.mrb[0].mxu0
      %6975 = vmatprep.mubr.bf16.mxu0 %v5584
      %6976 = vmatmul.mubr.bf16.gmra.mrb[0].mxu0 %v5477
      %v6977 = vpop.f32.mrb[0].mxu0
      %v6978 = vadd.f32 %v6753, %v6977
      %v6979 = vpop.f32.mrb[0].mxu0
      %v6980 = vpop.f32.mrb[0].mxu0
      %v6981 = vadd.f32 %v6756, %v6980
      %v6982 = vpop.f32.mrb[0].mxu0
      %6983 = vmatprep.mubr.bf16.mxu0 %v5633
      %6984 = vmatmul.mubr.bf16.gmra.mrb[0].mxu0 %v5526
      %v6985 = vpop.f32.mrb[0].mxu0
      %v6986 = vadd.f32 %v6761, %v6985
      %v6987 = vpop.f32.mrb[0].mxu0
      %v6988 = vpop.f32.mrb[0].mxu0
      %v6989 = vadd.f32 %v6764, %v6988
      %v6990 = vpop.f32.mrb[0].mxu0
      %6991 = vmatprep.mubr.bf16.mxu0 %v5682
      %6992 = vmatmul.mubr.bf16.gmra.mrb[0].mxu0 %v5575
      %v6993 = vpop.f32.mrb[0].mxu0
      %v6994 = vadd.f32 %v6769, %v6993
      %v6995 = vpop.f32.mrb[0].mxu0
      %v6996 = vpop.f32.mrb[0].mxu0
      %v6997 = vadd.f32 %v6772, %v6996
      %v6998 = vpop.f32.mrb[0].mxu0
      %6999 = vmatprep.mubr.bf16.mxu0 %v5731
      %7000 = vmatmul.mubr.bf16.gmra.mrb[0].mxu0 %v5624
      %v7001 = vpop.f32.mrb[0].mxu0
      %v7002 = vadd.f32 %v6777, %v7001
      %v7003 = vpop.f32.mrb[0].mxu0
      %v7004 = vpop.f32.mrb[0].mxu0
      %v7005 = vadd.f32 %v6780, %v7004
      %v7006 = vpop.f32.mrb[0].mxu0
      %7007 = vmatprep.mubr.bf16.mxu0 %v5780
      %7008 = vmatmul.mubr.bf16.gmra.mrb[0].mxu0 %v5673
      %v7009 = vpop.f32.mrb[0].mxu0
      %v7010 = vadd.f32 %v6785, %v7009
      %v7011 = vpop.f32.mrb[0].mxu0
      %v7012 = vpop.f32.mrb[0].mxu0
      %v7013 = vadd.f32 %v6788, %v7012
      %v7014 = vpop.f32.mrb[0].mxu0
      %7015 = vmatprep.mubr.bf16.mxu0 %v5829
      %7016 = vmatmul.mubr.bf16.gmra.mrb[0].mxu0 %v5722
      %v7017 = vpop.f32.mrb[0].mxu0
      %v7018 = vadd.f32 %v6793, %v7017
      %v7019 = vpop.f32.mrb[0].mxu0
      %v7020 = vpop.f32.mrb[0].mxu0
      %v7021 = vadd.f32 %v6796, %v7020
      %v7022 = vpop.f32.mrb[0].mxu0
      %7023 = vmatprep.mubr.bf16.mxu0 %v5878
      %7024 = vmatmul.mubr.bf16.gmra.mrb[0].mxu0 %v5771
      %v7025 = vpop.f32.mrb[0].mxu0
      %v7026 = vadd.f32 %v6801, %v7025
      %v7027 = vpop.f32.mrb[0].mxu0
      %v7028 = vpop.f32.mrb[0].mxu0
      %v7029 = vadd.f32 %v6804, %v7028
      %v7030 = vpop.f32.mrb[0].mxu0
      %7031 = vmatprep.mubr.bf16.mxu0 %v5927
      %7032 = vmatmul.mubr.bf16.gmra.mrb[0].mxu0 %v5820
      %v7033 = vpop.f32.mrb[0].mxu0
      %v7034 = vadd.f32 %v6809, %v7033
      %v7035 = vpop.f32.mrb[0].mxu0
      %v7036 = vpop.f32.mrb[0].mxu0
      %v7037 = vadd.f32 %v6812, %v7036
      %v7038 = vpop.f32.mrb[0].mxu0
      %7039 = vmatprep.mubr.bf16.mxu0 %v5975
      %7040 = vmatmul.mubr.bf16.gmra.mrb[0].mxu0 %v5966
      %v7041 = vpop.f32.mrb[0].mxu0
      %v7042 = vadd.f32 %v6817, %v7041
      %v7043 = vpop.f32.mrb[0].mxu0
      %v7044 = vpop.f32.mrb[0].mxu0
      %v7045 = vadd.f32 %v6820, %v7044
      %v7046 = vpop.f32.mrb[0].mxu0
      %7047 = vdwg.mxu0
      %7048 = vmatprep.subr.bf16.mxu0 0
      %7049 = vmatpush1.bf16.msra.mxu0 %v6486
      %7050 = vmatprep.subr.bf16.mxu0 0
      %7051 = vmatpush1.bf16.msra.mxu0 %v6487
      %7052 = vmatprep.subr.bf16.mxu0 0
      %7053 = vmatpush1.bf16.msra.mxu0 %v6488
      %7054 = vmatprep.subr.bf16.mxu0 0
      %7055 = vmatpush1.bf16.msra.mxu0 %v6489
      %7056 = vmatprep.subr.bf16.mxu0 0
      %7057 = vmatpush1.bf16.msra.mxu0 %v6490
      %7058 = vmatprep.subr.bf16.mxu0 0
      %7059 = vmatpush1.bf16.msra.mxu0 %v6491
      %7060 = vmatprep.subr.bf16.mxu0 0
      %7061 = vmatpush1.bf16.msra.mxu0 %v6492
      %7062 = vmatprep.subr.bf16.mxu0 0
      %7063 = vmatpush1.bf16.msra.mxu0 %v6493
      %7064 = vmatprep.subr.bf16.mxu0 0
      %7065 = vmatpush1.bf16.msra.mxu0 %v6494
      %7066 = vmatprep.subr.bf16.mxu0 0
      %7067 = vmatpush1.bf16.msra.mxu0 %v6495
      %7068 = vmatprep.subr.bf16.mxu0 0
      %7069 = vmatpush1.bf16.msra.mxu0 %v6496
      %7070 = vmatprep.subr.bf16.mxu0 0
      %7071 = vmatpush1.bf16.msra.mxu0 %v6497
      %7072 = vmatprep.subr.bf16.mxu0 0
      %7073 = vmatpush1.bf16.msra.mxu0 %v6498
      %7074 = vmatprep.subr.bf16.mxu0 0
      %7075 = vmatpush1.bf16.msra.mxu0 %v6499
      %7076 = vmatprep.subr.bf16.mxu0 0
      %7077 = vmatpush1.bf16.msra.mxu0 %v6500
      %7078 = vmatprep.subr.bf16.mxu0 0
      %7079 = vmatpush1.bf16.msra.mxu0 %v6501
      %7080 = vmatprep.mubr.bf16.mxu0 %v4823
      %7081 = vmatmul.mubr.bf16.gmra.mrb[0].mxu0 %v4806
      %v7082 = vpop.f32.mrb[0].mxu0
      %v7083 = vadd.f32 %v6858, %v7082
      %v7084 = vpop.f32.mrb[0].mxu0
      %v7085 = vpop.f32.mrb[0].mxu0
      %v7086 = vadd.f32 %v6861, %v7085
      %v7087 = vpop.f32.mrb[0].mxu0
      %7088 = vmatprep.mubr.bf16.mxu0 %v4913
      %7089 = vmatmul.mubr.bf16.gmra.mrb[0].mxu0 %v4904
      %v7090 = vpop.f32.mrb[0].mxu0
      %v7091 = vadd.f32 %v6866, %v7090
      %v7092 = vpop.f32.mrb[0].mxu0
      %v7093 = vpop.f32.mrb[0].mxu0
      %v7094 = vadd.f32 %v6869, %v7093
      %v7095 = vpop.f32.mrb[0].mxu0
      %7096 = vmatprep.mubr.bf16.mxu0 %v4965
      %7097 = vmatmul.mubr.bf16.gmra.mrb[0].mxu0 %v4956
      %v7098 = vpop.f32.mrb[0].mxu0
      %v7099 = vadd.f32 %v6874, %v7098
      %v7100 = vpop.f32.mrb[0].mxu0
      %v7101 = vpop.f32.mrb[0].mxu0
      %v7102 = vadd.f32 %v6877, %v7101
      %v7103 = vpop.f32.mrb[0].mxu0
      %7104 = vmatprep.mubr.bf16.mxu0 %v5014
      %7105 = vmatmul.mubr.bf16.gmra.mrb[0].mxu0 %v5005
      %v7106 = vpop.f32.mrb[0].mxu0
      %v7107 = vadd.f32 %v6882, %v7106
      %v7108 = vpop.f32.mrb[0].mxu0
      %v7109 = vpop.f32.mrb[0].mxu0
      %v7110 = vadd.f32 %v6885, %v7109
      %v7111 = vpop.f32.mrb[0].mxu0
      %7112 = vmatprep.mubr.bf16.mxu0 %v5063
      %7113 = vmatmul.mubr.bf16.gmra.mrb[0].mxu0 %v5054
      %v7114 = vpop.f32.mrb[0].mxu0
      %v7115 = vadd.f32 %v6890, %v7114
      %v7116 = vpop.f32.mrb[0].mxu0
      %v7117 = vpop.f32.mrb[0].mxu0
      %v7118 = vadd.f32 %v6893, %v7117
      %v7119 = vpop.f32.mrb[0].mxu0
      %7120 = vmatprep.mubr.bf16.mxu0 %v5112
      %7121 = vmatmul.mubr.bf16.gmra.mrb[0].mxu0 %v5103
      %v7122 = vpop.f32.mrb[0].mxu0
      %v7123 = vadd.f32 %v6898, %v7122
      %v7124 = vpop.f32.mrb[0].mxu0
      %v7125 = vpop.f32.mrb[0].mxu0
      %v7126 = vadd.f32 %v6901, %v7125
      %v7127 = vpop.f32.mrb[0].mxu0
      %7128 = vmatprep.mubr.bf16.mxu0 %v5161
      %7129 = vmatmul.mubr.bf16.gmra.mrb[0].mxu0 %v5152
      %v7130 = vpop.f32.mrb[0].mxu0
      %v7131 = vadd.f32 %v6906, %v7130
      %v7132 = vpop.f32.mrb[0].mxu0
      %v7133 = vpop.f32.mrb[0].mxu0
      %v7134 = vadd.f32 %v6909, %v7133
      %v7135 = vpop.f32.mrb[0].mxu0
      %7136 = vmatprep.mubr.bf16.mxu0 %v5210
      %7137 = vmatmul.mubr.bf16.gmra.mrb[0].mxu0 %v5201
      %v7138 = vpop.f32.mrb[0].mxu0
      %v7139 = vadd.f32 %v6914, %v7138
      %v7140 = vpop.f32.mrb[0].mxu0
      %v7141 = vpop.f32.mrb[0].mxu0
      %v7142 = vadd.f32 %v6917, %v7141
      %v7143 = vpop.f32.mrb[0].mxu0
      %7144 = vmatprep.mubr.bf16.mxu0 %v5259
      %7145 = vmatmul.mubr.bf16.gmra.mrb[0].mxu0 %v5250
      %v7146 = vpop.f32.mrb[0].mxu0
      %v7147 = vadd.f32 %v6922, %v7146
      %v7148 = vpop.f32.mrb[0].mxu0
      %v7149 = vpop.f32.mrb[0].mxu0
      %v7150 = vadd.f32 %v6925, %v7149
      %v7151 = vpop.f32.mrb[0].mxu0
      %7152 = vmatprep.mubr.bf16.mxu0 %v5308
      %7153 = vmatmul.mubr.bf16.gmra.mrb[0].mxu0 %v5299
      %v7154 = vpop.f32.mrb[0].mxu0
      %v7155 = vadd.f32 %v6930, %v7154
      %v7156 = vpop.f32.mrb[0].mxu0
      %v7157 = vpop.f32.mrb[0].mxu0
      %v7158 = vadd.f32 %v6933, %v7157
      %v7159 = vpop.f32.mrb[0].mxu0
      %7160 = vmatprep.mubr.bf16.mxu0 %v5357
      %7161 = vmatmul.mubr.bf16.gmra.mrb[0].mxu0 %v5348
      %v7162 = vpop.f32.mrb[0].mxu0
      %v7163 = vadd.f32 %v6938, %v7162
      %v7164 = vpop.f32.mrb[0].mxu0
      %v7165 = vpop.f32.mrb[0].mxu0
      %v7166 = vadd.f32 %v6941, %v7165
      %v7167 = vpop.f32.mrb[0].mxu0
      %7168 = vmatprep.mubr.bf16.mxu0 %v5406
      %7169 = vmatmul.mubr.bf16.gmra.mrb[0].mxu0 %v5397
      %v7170 = vpop.f32.mrb[0].mxu0
      %v7171 = vadd.f32 %v6946, %v7170
      %v7172 = vpop.f32.mrb[0].mxu0
      %v7173 = vpop.f32.mrb[0].mxu0
      %v7174 = vadd.f32 %v6949, %v7173
      %v7175 = vpop.f32.mrb[0].mxu0
      %7176 = vmatprep.mubr.bf16.mxu0 %v5455
      %7177 = vmatmul.mubr.bf16.gmra.mrb[0].mxu0 %v5446
      %v7178 = vpop.f32.mrb[0].mxu0
      %v7179 = vadd.f32 %v6954, %v7178
      %v7180 = vpop.f32.mrb[0].mxu0
      %v7181 = vpop.f32.mrb[0].mxu0
      %v7182 = vadd.f32 %v6957, %v7181
      %v7183 = vpop.f32.mrb[0].mxu0
      %7184 = vmatprep.mubr.bf16.mxu0 %v5504
      %7185 = vmatmul.mubr.bf16.gmra.mrb[0].mxu0 %v5495
      %v7186 = vpop.f32.mrb[0].mxu0
      %v7187 = vadd.f32 %v6962, %v7186
      %v7188 = vpop.f32.mrb[0].mxu0
      %v7189 = vpop.f32.mrb[0].mxu0
      %v7190 = vadd.f32 %v6965, %v7189
      %v7191 = vpop.f32.mrb[0].mxu0
      %7192 = vmatprep.mubr.bf16.mxu0 %v5553
      %7193 = vmatmul.mubr.bf16.gmra.mrb[0].mxu0 %v5544
      %v7194 = vpop.f32.mrb[0].mxu0
      %v7195 = vadd.f32 %v6970, %v7194
      %v7196 = vpop.f32.mrb[0].mxu0
      %v7197 = vpop.f32.mrb[0].mxu0
      %v7198 = vadd.f32 %v6973, %v7197
      %v7199 = vpop.f32.mrb[0].mxu0
      %7200 = vmatprep.mubr.bf16.mxu0 %v5602
      %7201 = vmatmul.mubr.bf16.gmra.mrb[0].mxu0 %v5593
      %v7202 = vpop.f32.mrb[0].mxu0
      %v7203 = vadd.f32 %v6978, %v7202
      %v7204 = vpop.f32.mrb[0].mxu0
      %v7205 = vpop.f32.mrb[0].mxu0
      %v7206 = vadd.f32 %v6981, %v7205
      %v7207 = vpop.f32.mrb[0].mxu0
      %7208 = vmatprep.mubr.bf16.mxu0 %v5651
      %7209 = vmatmul.mubr.bf16.gmra.mrb[0].mxu0 %v5642
      %v7210 = vpop.f32.mrb[0].mxu0
      %v7211 = vadd.f32 %v6986, %v7210
      %v7212 = vpop.f32.mrb[0].mxu0
      %v7213 = vpop.f32.mrb[0].mxu0
      %v7214 = vadd.f32 %v6989, %v7213
      %v7215 = vpop.f32.mrb[0].mxu0
      %7216 = vmatprep.mubr.bf16.mxu0 %v5700
      %7217 = vmatmul.mubr.bf16.gmra.mrb[0].mxu0 %v5691
      %v7218 = vpop.f32.mrb[0].mxu0
      %v7219 = vadd.f32 %v6994, %v7218
      %v7220 = vpop.f32.mrb[0].mxu0
      %v7221 = vpop.f32.mrb[0].mxu0
      %v7222 = vadd.f32 %v6997, %v7221
      %v7223 = vpop.f32.mrb[0].mxu0
      %7224 = vmatprep.mubr.bf16.mxu0 %v5749
      %7225 = vmatmul.mubr.bf16.gmra.mrb[0].mxu0 %v5740
      %v7226 = vpop.f32.mrb[0].mxu0
      %v7227 = vadd.f32 %v7002, %v7226
      %v7228 = vpop.f32.mrb[0].mxu0
      %v7229 = vpop.f32.mrb[0].mxu0
      %v7230 = vadd.f32 %v7005, %v7229
      %v7231 = vpop.f32.mrb[0].mxu0
      %7232 = vmatprep.mubr.bf16.mxu0 %v5798
      %7233 = vmatmul.mubr.bf16.gmra.mrb[0].mxu0 %v5789
      %v7234 = vpop.f32.mrb[0].mxu0
      %v7235 = vadd.f32 %v7010, %v7234
      %v7236 = vpop.f32.mrb[0].mxu0
      %v7237 = vpop.f32.mrb[0].mxu0
      %v7238 = vadd.f32 %v7013, %v7237
      %v7239 = vpop.f32.mrb[0].mxu0
      %7240 = vmatprep.mubr.bf16.mxu0 %v5847
      %7241 = vmatmul.mubr.bf16.gmra.mrb[0].mxu0 %v5838
      %v7242 = vpop.f32.mrb[0].mxu0
      %v7243 = vadd.f32 %v7018, %v7242
      %v7244 = vpop.f32.mrb[0].mxu0
      %v7245 = vpop.f32.mrb[0].mxu0
      %v7246 = vadd.f32 %v7021, %v7245
      %v7247 = vpop.f32.mrb[0].mxu0
      %7248 = vmatprep.mubr.bf16.mxu0 %v5896
      %7249 = vmatmul.mubr.bf16.gmra.mrb[0].mxu0 %v5887
      %v7250 = vpop.f32.mrb[0].mxu0
      %v7251 = vadd.f32 %v7026, %v7250
      %v7252 = vpop.f32.mrb[0].mxu0
      %v7253 = vpop.f32.mrb[0].mxu0
      %v7254 = vadd.f32 %v7029, %v7253
      %v7255 = vpop.f32.mrb[0].mxu0
      %7256 = vmatprep.mubr.bf16.mxu0 %v5945
      %7257 = vmatmul.mubr.bf16.gmra.mrb[0].mxu0 %v5936
      %v7258 = vpop.f32.mrb[0].mxu0
      %v7259 = vadd.f32 %v7034, %v7258
      %v7260 = vpop.f32.mrb[0].mxu0
      %v7261 = vpop.f32.mrb[0].mxu0
      %v7262 = vadd.f32 %v7037, %v7261
      %v7263 = vpop.f32.mrb[0].mxu0
      %7264 = vmatprep.mubr.bf16.mxu0 %v5993
      %7265 = vmatmul.mubr.bf16.gmra.mrb[0].mxu0 %v5984
      %v7266 = vpop.f32.mrb[0].mxu0
      %v7267 = vadd.f32 %v7042, %v7266
      %v7268 = vpop.f32.mrb[0].mxu0
      %v7269 = vpop.f32.mrb[0].mxu0
      %v7270 = vadd.f32 %v7045, %v7269
      %v7271 = vpop.f32.mrb[0].mxu0
      %7272 = vdwg.mxu0
      %7273 = vmatprep.subr.bf16.mxu0 0
      %7274 = vmatpush1.bf16.msra.mxu0 %v6502
      %7275 = vmatprep.subr.bf16.mxu0 0
      %7276 = vmatpush1.bf16.msra.mxu0 %v6503
      %7277 = vmatprep.subr.bf16.mxu0 0
      %7278 = vmatpush1.bf16.msra.mxu0 %v6504
      %7279 = vmatprep.subr.bf16.mxu0 0
      %7280 = vmatpush1.bf16.msra.mxu0 %v6505
      %7281 = vmatprep.subr.bf16.mxu0 0
      %7282 = vmatpush1.bf16.msra.mxu0 %v6506
      %7283 = vmatprep.subr.bf16.mxu0 0
      %7284 = vmatpush1.bf16.msra.mxu0 %v6507
      %7285 = vmatprep.subr.bf16.mxu0 0
      %7286 = vmatpush1.bf16.msra.mxu0 %v6508
      %7287 = vmatprep.subr.bf16.mxu0 0
      %7288 = vmatpush1.bf16.msra.mxu0 %v6509
      %7289 = vmatprep.subr.bf16.mxu0 0
      %7290 = vmatpush1.bf16.msra.mxu0 %v6510
      %7291 = vmatprep.subr.bf16.mxu0 0
      %7292 = vmatpush1.bf16.msra.mxu0 %v6511
      %7293 = vmatprep.subr.bf16.mxu0 0
      %7294 = vmatpush1.bf16.msra.mxu0 %v6512
      %7295 = vmatprep.subr.bf16.mxu0 0
      %7296 = vmatpush1.bf16.msra.mxu0 %v6513
      %7297 = vmatprep.subr.bf16.mxu0 0
      %7298 = vmatpush1.bf16.msra.mxu0 %v6514
      %7299 = vmatprep.subr.bf16.mxu0 0
      %7300 = vmatpush1.bf16.msra.mxu0 %v6515
      %7301 = vmatprep.subr.bf16.mxu0 0
      %7302 = vmatpush1.bf16.msra.mxu0 %v6516
      %7303 = vmatprep.subr.bf16.mxu0 0
      %7304 = vmatpush1.bf16.msra.mxu0 %v6517
      %7305 = vmatprep.mubr.bf16.mxu0 %v4847
      %7306 = vmatmul.mubr.bf16.gmra.mrb[0].mxu0 %v4830
      %v7307 = vpop.f32.mrb[0].mxu0
      %v7308 = vadd.f32 %v7083, %v7307
      %v7309 = vpop.f32.mrb[0].mxu0
      %v7310 = vpop.f32.mrb[0].mxu0
      %v7311 = vadd.f32 %v7086, %v7310
      %v7312 = vpop.f32.mrb[0].mxu0
      %7313 = vmatprep.mubr.bf16.mxu0 %v4926
      %7314 = vmatmul.mubr.bf16.gmra.mrb[0].mxu0 %v4917
      %v7315 = vpop.f32.mrb[0].mxu0
      %v7316 = vadd.f32 %v7091, %v7315
      %v7317 = vpop.f32.mrb[0].mxu0
      %v7318 = vpop.f32.mrb[0].mxu0
      %v7319 = vadd.f32 %v7094, %v7318
      %v7320 = vpop.f32.mrb[0].mxu0
      %7321 = vmatprep.mubr.bf16.mxu0 %v4978
      %7322 = vmatmul.mubr.bf16.gmra.mrb[0].mxu0 %v4969
      %v7323 = vpop.f32.mrb[0].mxu0
      %v7324 = vadd.f32 %v7099, %v7323
      %v7325 = vpop.f32.mrb[0].mxu0
      %v7326 = vpop.f32.mrb[0].mxu0
      %v7327 = vadd.f32 %v7102, %v7326
      %v7328 = vpop.f32.mrb[0].mxu0
      %7329 = vmatprep.mubr.bf16.mxu0 %v5027
      %7330 = vmatmul.mubr.bf16.gmra.mrb[0].mxu0 %v5018
      %v7331 = vpop.f32.mrb[0].mxu0
      %v7332 = vadd.f32 %v7107, %v7331
      %v7333 = vpop.f32.mrb[0].mxu0
      %v7334 = vpop.f32.mrb[0].mxu0
      %v7335 = vadd.f32 %v7110, %v7334
      %v7336 = vpop.f32.mrb[0].mxu0
      %7337 = vmatprep.mubr.bf16.mxu0 %v5076
      %7338 = vmatmul.mubr.bf16.gmra.mrb[0].mxu0 %v5067
      %v7339 = vpop.f32.mrb[0].mxu0
      %v7340 = vadd.f32 %v7115, %v7339
      %v7341 = vpop.f32.mrb[0].mxu0
      %v7342 = vpop.f32.mrb[0].mxu0
      %v7343 = vadd.f32 %v7118, %v7342
      %v7344 = vpop.f32.mrb[0].mxu0
      %7345 = vmatprep.mubr.bf16.mxu0 %v5125
      %7346 = vmatmul.mubr.bf16.gmra.mrb[0].mxu0 %v5116
      %v7347 = vpop.f32.mrb[0].mxu0
      %v7348 = vadd.f32 %v7123, %v7347
      %v7349 = vpop.f32.mrb[0].mxu0
      %v7350 = vpop.f32.mrb[0].mxu0
      %v7351 = vadd.f32 %v7126, %v7350
      %v7352 = vpop.f32.mrb[0].mxu0
      %7353 = vmatprep.mubr.bf16.mxu0 %v5174
      %7354 = vmatmul.mubr.bf16.gmra.mrb[0].mxu0 %v5165
      %v7355 = vpop.f32.mrb[0].mxu0
      %v7356 = vadd.f32 %v7131, %v7355
      %v7357 = vpop.f32.mrb[0].mxu0
      %v7358 = vpop.f32.mrb[0].mxu0
      %v7359 = vadd.f32 %v7134, %v7358
      %v7360 = vpop.f32.mrb[0].mxu0
      %7361 = vmatprep.mubr.bf16.mxu0 %v5223
      %7362 = vmatmul.mubr.bf16.gmra.mrb[0].mxu0 %v5214
      %v7363 = vpop.f32.mrb[0].mxu0
      %v7364 = vadd.f32 %v7139, %v7363
      %v7365 = vpop.f32.mrb[0].mxu0
      %v7366 = vpop.f32.mrb[0].mxu0
      %v7367 = vadd.f32 %v7142, %v7366
      %v7368 = vpop.f32.mrb[0].mxu0
      %7369 = vmatprep.mubr.bf16.mxu0 %v5272
      %7370 = vmatmul.mubr.bf16.gmra.mrb[0].mxu0 %v5263
      %v7371 = vpop.f32.mrb[0].mxu0
      %v7372 = vadd.f32 %v7147, %v7371
      %v7373 = vpop.f32.mrb[0].mxu0
      %v7374 = vpop.f32.mrb[0].mxu0
      %v7375 = vadd.f32 %v7150, %v7374
      %v7376 = vpop.f32.mrb[0].mxu0
      %7377 = vmatprep.mubr.bf16.mxu0 %v5321
      %7378 = vmatmul.mubr.bf16.gmra.mrb[0].mxu0 %v5312
      %v7379 = vpop.f32.mrb[0].mxu0
      %v7380 = vadd.f32 %v7155, %v7379
      %v7381 = vpop.f32.mrb[0].mxu0
      %v7382 = vpop.f32.mrb[0].mxu0
      %v7383 = vadd.f32 %v7158, %v7382
      %v7384 = vpop.f32.mrb[0].mxu0
      %7385 = vmatprep.mubr.bf16.mxu0 %v5370
      %7386 = vmatmul.mubr.bf16.gmra.mrb[0].mxu0 %v5361
      %v7387 = vpop.f32.mrb[0].mxu0
      %v7388 = vadd.f32 %v7163, %v7387
      %v7389 = vpop.f32.mrb[0].mxu0
      %v7390 = vpop.f32.mrb[0].mxu0
      %v7391 = vadd.f32 %v7166, %v7390
      %v7392 = vpop.f32.mrb[0].mxu0
      %7393 = vmatprep.mubr.bf16.mxu0 %v5419
      %7394 = vmatmul.mubr.bf16.gmra.mrb[0].mxu0 %v5410
      %v7395 = vpop.f32.mrb[0].mxu0
      %v7396 = vadd.f32 %v7171, %v7395
      %v7397 = vpop.f32.mrb[0].mxu0
      %v7398 = vpop.f32.mrb[0].mxu0
      %v7399 = vadd.f32 %v7174, %v7398
      %v7400 = vpop.f32.mrb[0].mxu0
      %7401 = vmatprep.mubr.bf16.mxu0 %v5468
      %7402 = vmatmul.mubr.bf16.gmra.mrb[0].mxu0 %v5459
      %v7403 = vpop.f32.mrb[0].mxu0
      %v7404 = vadd.f32 %v7179, %v7403
      %v7405 = vpop.f32.mrb[0].mxu0
      %v7406 = vpop.f32.mrb[0].mxu0
      %v7407 = vadd.f32 %v7182, %v7406
      %v7408 = vpop.f32.mrb[0].mxu0
      %7409 = vmatprep.mubr.bf16.mxu0 %v5517
      %7410 = vmatmul.mubr.bf16.gmra.mrb[0].mxu0 %v5508
      %v7411 = vpop.f32.mrb[0].mxu0
      %v7412 = vadd.f32 %v7187, %v7411
      %v7413 = vpop.f32.mrb[0].mxu0
      %v7414 = vpop.f32.mrb[0].mxu0
      %v7415 = vadd.f32 %v7190, %v7414
      %v7416 = vpop.f32.mrb[0].mxu0
      %7417 = vmatprep.mubr.bf16.mxu0 %v5566
      %7418 = vmatmul.mubr.bf16.gmra.mrb[0].mxu0 %v5557
      %v7419 = vpop.f32.mrb[0].mxu0
      %v7420 = vadd.f32 %v7195, %v7419
      %v7421 = vpop.f32.mrb[0].mxu0
      %v7422 = vpop.f32.mrb[0].mxu0
      %v7423 = vadd.f32 %v7198, %v7422
      %v7424 = vpop.f32.mrb[0].mxu0
      %7425 = vmatprep.mubr.bf16.mxu0 %v5615
      %7426 = vmatmul.mubr.bf16.gmra.mrb[0].mxu0 %v5606
      %v7427 = vpop.f32.mrb[0].mxu0
      %v7428 = vadd.f32 %v7203, %v7427
      %v7429 = vpop.f32.mrb[0].mxu0
      %v7430 = vpop.f32.mrb[0].mxu0
      %v7431 = vadd.f32 %v7206, %v7430
      %v7432 = vpop.f32.mrb[0].mxu0
      %7433 = vmatprep.mubr.bf16.mxu0 %v5664
      %7434 = vmatmul.mubr.bf16.gmra.mrb[0].mxu0 %v5655
      %v7435 = vpop.f32.mrb[0].mxu0
      %v7436 = vadd.f32 %v7211, %v7435
      %v7437 = vpop.f32.mrb[0].mxu0
      %v7438 = vpop.f32.mrb[0].mxu0
      %v7439 = vadd.f32 %v7214, %v7438
      %v7440 = vpop.f32.mrb[0].mxu0
      %7441 = vmatprep.mubr.bf16.mxu0 %v5713
      %7442 = vmatmul.mubr.bf16.gmra.mrb[0].mxu0 %v5704
      %v7443 = vpop.f32.mrb[0].mxu0
      %v7444 = vadd.f32 %v7219, %v7443
      %v7445 = vpop.f32.mrb[0].mxu0
      %v7446 = vpop.f32.mrb[0].mxu0
      %v7447 = vadd.f32 %v7222, %v7446
      %v7448 = vpop.f32.mrb[0].mxu0
      %7449 = vmatprep.mubr.bf16.mxu0 %v5762
      %7450 = vmatmul.mubr.bf16.gmra.mrb[0].mxu0 %v5753
      %v7451 = vpop.f32.mrb[0].mxu0
      %v7452 = vadd.f32 %v7227, %v7451
      %v7453 = vpop.f32.mrb[0].mxu0
      %v7454 = vpop.f32.mrb[0].mxu0
      %v7455 = vadd.f32 %v7230, %v7454
      %v7456 = vpop.f32.mrb[0].mxu0
      %7457 = vmatprep.mubr.bf16.mxu0 %v5811
      %7458 = vmatmul.mubr.bf16.gmra.mrb[0].mxu0 %v5802
      %v7459 = vpop.f32.mrb[0].mxu0
      %v7460 = vadd.f32 %v7235, %v7459
      %v7461 = vpop.f32.mrb[0].mxu0
      %v7462 = vpop.f32.mrb[0].mxu0
      %v7463 = vadd.f32 %v7238, %v7462
      %v7464 = vpop.f32.mrb[0].mxu0
      %7465 = vmatprep.mubr.bf16.mxu0 %v5860
      %7466 = vmatmul.mubr.bf16.gmra.mrb[0].mxu0 %v5851
      %v7467 = vpop.f32.mrb[0].mxu0
      %v7468 = vadd.f32 %v7243, %v7467
      %v7469 = vpop.f32.mrb[0].mxu0
      %v7470 = vpop.f32.mrb[0].mxu0
      %v7471 = vadd.f32 %v7246, %v7470
      %v7472 = vpop.f32.mrb[0].mxu0
      %7473 = vmatprep.mubr.bf16.mxu0 %v5909
      %7474 = vmatmul.mubr.bf16.gmra.mrb[0].mxu0 %v5900
      %v7475 = vpop.f32.mrb[0].mxu0
      %v7476 = vadd.f32 %v7251, %v7475
      %v7477 = vpop.f32.mrb[0].mxu0
      %v7478 = vpop.f32.mrb[0].mxu0
      %v7479 = vadd.f32 %v7254, %v7478
      %v7480 = vpop.f32.mrb[0].mxu0
      %7481 = vmatprep.mubr.bf16.mxu0 %v5947
      %7482 = vmatmul.mubr.bf16.gmra.mrb[0].mxu0 %v5946
      %v7483 = vpop.f32.mrb[0].mxu0
      %v7484 = vadd.f32 %v7259, %v7483
      %v7485 = vpop.f32.mrb[0].mxu0
      %v7486 = vpop.f32.mrb[0].mxu0
      %v7487 = vadd.f32 %v7262, %v7486
      %v7488 = vpop.f32.mrb[0].mxu0
      %7489 = vmatprep.mubr.bf16.mxu0 %v6002
      %7490 = vmatmul.mubr.bf16.gmra.mrb[0].mxu0 %v4738
      %v7491 = vpop.f32.mrb[0].mxu0
      %v7492 = vadd.f32 %v7267, %v7491
      %v7493 = vpop.f32.mrb[0].mxu0
      %v7494 = vpop.f32.mrb[0].mxu0
      %v7495 = vadd.f32 %v7270, %v7494
      %v7496 = vpop.f32.mrb[0].mxu0
      %7497 = vdwg.mxu0
      %7498 = vmatprep.subr.bf16.mxu0 0
      %7499 = vmatpush1.bf16.msra.mxu0 %v6518
      %7500 = vmatprep.subr.bf16.mxu0 0
      %7501 = vmatpush1.bf16.msra.mxu0 %v6519
      %7502 = vmatprep.subr.bf16.mxu0 0
      %7503 = vmatpush1.bf16.msra.mxu0 %v6520
      %7504 = vmatprep.subr.bf16.mxu0 0
      %7505 = vmatpush1.bf16.msra.mxu0 %v6521
      %7506 = vmatprep.subr.bf16.mxu0 0
      %7507 = vmatpush1.bf16.msra.mxu0 %v6522
      %7508 = vmatprep.subr.bf16.mxu0 0
      %7509 = vmatpush1.bf16.msra.mxu0 %v6523
      %7510 = vmatprep.subr.bf16.mxu0 0
      %7511 = vmatpush1.bf16.msra.mxu0 %v6524
      %7512 = vmatprep.subr.bf16.mxu0 0
      %7513 = vmatpush1.bf16.msra.mxu0 %v6525
      %7514 = vmatprep.subr.bf16.mxu0 0
      %7515 = vmatpush1.bf16.msra.mxu0 0
      %7516 = vmatprep.subr.bf16.mxu0 0
      %7517 = vmatpush1.bf16.msra.mxu0 0
      %7518 = vmatprep.subr.bf16.mxu0 0
      %7519 = vmatpush1.bf16.msra.mxu0 0
      %7520 = vmatprep.subr.bf16.mxu0 0
      %7521 = vmatpush1.bf16.msra.mxu0 0
      %7522 = vmatprep.subr.bf16.mxu0 0
      %7523 = vmatpush1.bf16.msra.mxu0 0
      %7524 = vmatprep.subr.bf16.mxu0 0
      %7525 = vmatpush1.bf16.msra.mxu0 0
      %7526 = vmatprep.subr.bf16.mxu0 0
      %7527 = vmatpush1.bf16.msra.mxu0 0
      %7528 = vmatprep.subr.bf16.mxu0 0
      %7529 = vmatpush1.bf16.msra.mxu0 0
      %7530 = vmatprep.mubr.bf16.mxu0 0
      %7531 = vmatmul.mubr.bf16.gmra.mrb[0].mxu0 %v4864
      %v7532 = vpop.f32.mrb[0].mxu0
      %v7533 = vadd.f32 %v7308, %v7532
      %v7534 = vpop.f32.mrb[0].mxu0
      %v7535 = vpop.f32.mrb[0].mxu0
      %v7536 = vadd.f32 %v7311, %v7535
      %v7537 = vpop.f32.mrb[0].mxu0
      %7538 = vmatprep.mubr.bf16.mxu0 0
      %7539 = vmatmul.mubr.bf16.gmra.mrb[0].mxu0 %v4935
      %v7540 = vpop.f32.mrb[0].mxu0
      %v7541 = vadd.f32 %v7316, %v7540
      %v7542 = vpop.f32.mrb[0].mxu0
      %v7543 = vpop.f32.mrb[0].mxu0
      %v7544 = vadd.f32 %v7319, %v7543
      %v7545 = vpop.f32.mrb[0].mxu0
      %7546 = vmatprep.mubr.bf16.mxu0 0
      %7547 = vmatmul.mubr.bf16.gmra.mrb[0].mxu0 %v4987
      %v7548 = vpop.f32.mrb[0].mxu0
      %v7549 = vadd.f32 %v7324, %v7548
      %v7550 = vpop.f32.mrb[0].mxu0
      %v7551 = vpop.f32.mrb[0].mxu0
      %v7552 = vadd.f32 %v7327, %v7551
      %v7553 = vpop.f32.mrb[0].mxu0
      %7554 = vmatprep.mubr.bf16.mxu0 0
      %7555 = vmatmul.mubr.bf16.gmra.mrb[0].mxu0 %v5036
      %v7556 = vpop.f32.mrb[0].mxu0
      %v7557 = vadd.f32 %v7332, %v7556
      %v7558 = vpop.f32.mrb[0].mxu0
      %v7559 = vpop.f32.mrb[0].mxu0
      %v7560 = vadd.f32 %v7335, %v7559
      %v7561 = vpop.f32.mrb[0].mxu0
      %7562 = vmatprep.mubr.bf16.mxu0 0
      %7563 = vmatmul.mubr.bf16.gmra.mrb[0].mxu0 %v5085
      %v7564 = vpop.f32.mrb[0].mxu0
      %v7565 = vadd.f32 %v7340, %v7564
      %v7566 = vpop.f32.mrb[0].mxu0
      %v7567 = vpop.f32.mrb[0].mxu0
      %v7568 = vadd.f32 %v7343, %v7567
      %v7569 = vpop.f32.mrb[0].mxu0
      %7570 = vmatprep.mubr.bf16.mxu0 0
      %7571 = vmatmul.mubr.bf16.gmra.mrb[0].mxu0 %v5134
      %v7572 = vpop.f32.mrb[0].mxu0
      %v7573 = vadd.f32 %v7348, %v7572
      %v7574 = vpop.f32.mrb[0].mxu0
      %v7575 = vpop.f32.mrb[0].mxu0
      %v7576 = vadd.f32 %v7351, %v7575
      %v7577 = vpop.f32.mrb[0].mxu0
      %7578 = vmatprep.mubr.bf16.mxu0 0
      %7579 = vmatmul.mubr.bf16.gmra.mrb[0].mxu0 %v5183
      %v7580 = vpop.f32.mrb[0].mxu0
      %v7581 = vadd.f32 %v7356, %v7580
      %v7582 = vpop.f32.mrb[0].mxu0
      %v7583 = vpop.f32.mrb[0].mxu0
      %v7584 = vadd.f32 %v7359, %v7583
      %v7585 = vpop.f32.mrb[0].mxu0
      %7586 = vmatprep.mubr.bf16.mxu0 0
      %7587 = vmatmul.mubr.bf16.gmra.mrb[0].mxu0 %v5232
      %v7588 = vpop.f32.mrb[0].mxu0
      %v7589 = vadd.f32 %v7364, %v7588
      %v7590 = vpop.f32.mrb[0].mxu0
      %v7591 = vpop.f32.mrb[0].mxu0
      %v7592 = vadd.f32 %v7367, %v7591
      %v7593 = vpop.f32.mrb[0].mxu0
      %7594 = vmatprep.mubr.bf16.mxu0 0
      %7595 = vmatmul.mubr.bf16.gmra.mrb[0].mxu0 %v5281
      %v7596 = vpop.f32.mrb[0].mxu0
      %v7597 = vadd.f32 %v7372, %v7596
      %v7598 = vpop.f32.mrb[0].mxu0
      %v7599 = vpop.f32.mrb[0].mxu0
      %v7600 = vadd.f32 %v7375, %v7599
      %v7601 = vpop.f32.mrb[0].mxu0
      %7602 = vmatprep.mubr.bf16.mxu0 0
      %7603 = vmatmul.mubr.bf16.gmra.mrb[0].mxu0 %v5330
      %v7604 = vpop.f32.mrb[0].mxu0
      %v7605 = vadd.f32 %v7380, %v7604
      %v7606 = vpop.f32.mrb[0].mxu0
      %v7607 = vpop.f32.mrb[0].mxu0
      %v7608 = vadd.f32 %v7383, %v7607
      %v7609 = vpop.f32.mrb[0].mxu0
      %7610 = vmatprep.mubr.bf16.mxu0 0
      %7611 = vmatmul.mubr.bf16.gmra.mrb[0].mxu0 %v5379
      %v7612 = vpop.f32.mrb[0].mxu0
      %v7613 = vadd.f32 %v7388, %v7612
      %v7614 = vpop.f32.mrb[0].mxu0
      %v7615 = vpop.f32.mrb[0].mxu0
      %v7616 = vadd.f32 %v7391, %v7615
      %v7617 = vpop.f32.mrb[0].mxu0
      %7618 = vmatprep.mubr.bf16.mxu0 0
      %7619 = vmatmul.mubr.bf16.gmra.mrb[0].mxu0 %v5428
      %v7620 = vpop.f32.mrb[0].mxu0
      %v7621 = vadd.f32 %v7396, %v7620
      %v7622 = vpop.f32.mrb[0].mxu0
      %v7623 = vpop.f32.mrb[0].mxu0
      %v7624 = vadd.f32 %v7399, %v7623
      %v7625 = vpop.f32.mrb[0].mxu0
      %7626 = vmatprep.mubr.bf16.mxu0 0
      %7627 = vmatmul.mubr.bf16.gmra.mrb[0].mxu0 %v5477
      %v7628 = vpop.f32.mrb[0].mxu0
      %v7629 = vadd.f32 %v7404, %v7628
      %v7630 = vpop.f32.mrb[0].mxu0
      %v7631 = vpop.f32.mrb[0].mxu0
      %v7632 = vadd.f32 %v7407, %v7631
      %v7633 = vpop.f32.mrb[0].mxu0
      %7634 = vmatprep.mubr.bf16.mxu0 0
      %7635 = vmatmul.mubr.bf16.gmra.mrb[0].mxu0 %v5526
      %v7636 = vpop.f32.mrb[0].mxu0
      %v7637 = vadd.f32 %v7412, %v7636
      %v7638 = vpop.f32.mrb[0].mxu0
      %v7639 = vpop.f32.mrb[0].mxu0
      %v7640 = vadd.f32 %v7415, %v7639
      %v7641 = vpop.f32.mrb[0].mxu0
      %7642 = vmatprep.mubr.bf16.mxu0 0
      %7643 = vmatmul.mubr.bf16.gmra.mrb[0].mxu0 %v5575
      %v7644 = vpop.f32.mrb[0].mxu0
      %v7645 = vadd.f32 %v7420, %v7644
      %v7646 = vpop.f32.mrb[0].mxu0
      %v7647 = vpop.f32.mrb[0].mxu0
      %v7648 = vadd.f32 %v7423, %v7647
      %v7649 = vpop.f32.mrb[0].mxu0
      %7650 = vmatprep.mubr.bf16.mxu0 0
      %7651 = vmatmul.mubr.bf16.gmra.mrb[0].mxu0 %v5624
      %v7652 = vpop.f32.mrb[0].mxu0
      %v7653 = vadd.f32 %v7428, %v7652
      %v7654 = vpop.f32.mrb[0].mxu0
      %v7655 = vpop.f32.mrb[0].mxu0
      %v7656 = vadd.f32 %v7431, %v7655
      %v7657 = vpop.f32.mrb[0].mxu0
      %7658 = vmatprep.mubr.bf16.mxu0 0
      %7659 = vmatmul.mubr.bf16.gmra.mrb[0].mxu0 %v5673
      %v7660 = vpop.f32.mrb[0].mxu0
      %v7661 = vadd.f32 %v7436, %v7660
      %v7662 = vpop.f32.mrb[0].mxu0
      %v7663 = vpop.f32.mrb[0].mxu0
      %v7664 = vadd.f32 %v7439, %v7663
      %v7665 = vpop.f32.mrb[0].mxu0
      %7666 = vmatprep.mubr.bf16.mxu0 0
      %7667 = vmatmul.mubr.bf16.gmra.mrb[0].mxu0 %v5722
      %v7668 = vpop.f32.mrb[0].mxu0
      %v7669 = vadd.f32 %v7444, %v7668
      %v7670 = vpop.f32.mrb[0].mxu0
      %v7671 = vpop.f32.mrb[0].mxu0
      %v7672 = vadd.f32 %v7447, %v7671
      %v7673 = vpop.f32.mrb[0].mxu0
      %7674 = vmatprep.mubr.bf16.mxu0 0
      %7675 = vmatmul.mubr.bf16.gmra.mrb[0].mxu0 %v5771
      %v7676 = vpop.f32.mrb[0].mxu0
      %v7677 = vadd.f32 %v7452, %v7676
      %v7678 = vpop.f32.mrb[0].mxu0
      %v7679 = vpop.f32.mrb[0].mxu0
      %v7680 = vadd.f32 %v7455, %v7679
      %v7681 = vpop.f32.mrb[0].mxu0
      %7682 = vmatprep.mubr.bf16.mxu0 0
      %7683 = vmatmul.mubr.bf16.gmra.mrb[0].mxu0 %v5820
      %v7684 = vpop.f32.mrb[0].mxu0
      %v7685 = vadd.f32 %v7460, %v7684
      %v7686 = vpop.f32.mrb[0].mxu0
      %v7687 = vpop.f32.mrb[0].mxu0
      %v7688 = vadd.f32 %v7463, %v7687
      %v7689 = vpop.f32.mrb[0].mxu0
      %7690 = vmatprep.mubr.bf16.mxu0 0
      %7691 = vmatmul.mubr.bf16.gmra.mrb[0].mxu0 %v5869
      %v7692 = vpop.f32.mrb[0].mxu0
      %v7693 = vadd.f32 %v7468, %v7692
      %v7694 = vpop.f32.mrb[0].mxu0
      %v7695 = vpop.f32.mrb[0].mxu0
      %v7696 = vadd.f32 %v7471, %v7695
      %v7697 = vpop.f32.mrb[0].mxu0
      %7698 = vmatprep.mubr.bf16.mxu0 0
      %7699 = vmatmul.mubr.bf16.gmra.mrb[0].mxu0 %v5918
      %v7700 = vpop.f32.mrb[0].mxu0
      %v7701 = vadd.f32 %v7476, %v7700
      %v7702 = vpop.f32.mrb[0].mxu0
      %v7703 = vpop.f32.mrb[0].mxu0
      %v7704 = vadd.f32 %v7479, %v7703
      %v7705 = vpop.f32.mrb[0].mxu0
      %7706 = vmatprep.mubr.bf16.mxu0 0
      %7707 = vmatmul.mubr.bf16.gmra.mrb[0].mxu0 %v5948
      %v7708 = vpop.f32.mrb[0].mxu0
      %v7709 = vadd.f32 %v7484, %v7708
      %v7710 = vpop.f32.mrb[0].mxu0
      %v7711 = vpop.f32.mrb[0].mxu0
      %v7712 = vadd.f32 %v7487, %v7711
      %v7713 = vpop.f32.mrb[0].mxu0
      %7714 = vmatprep.mubr.bf16.mxu0 0
      %7715 = vmatmul.mubr.bf16.gmra.mrb[0].mxu0 %v6011
      %v7716 = vpop.f32.mrb[0].mxu0
      %v7717 = vadd.f32 %v7492, %v7716
      %v7718 = vpop.f32.mrb[0].mxu0
      %v7719 = vpop.f32.mrb[0].mxu0
      %v7720 = vadd.f32 %v7495, %v7719
      %v7721 = vpop.f32.mrb[0].mxu0
      %7722 = vdwg.mxu0
      %v7723 = vadd.f32 %v7533, %v230
      %v7724 = vadd.f32 %v7536, %v231
      %v7725 = vadd.f32 %v7541, %v232
      %v7726 = vadd.f32 %v7544, %v233
      %v7727 = vadd.f32 %v7549, %v234
      %v7728 = vadd.f32 %v7552, %v235
      %v7729 = vadd.f32 %v7557, %v236
      %v7730 = vadd.f32 %v7560, %v237
      %v7731 = vadd.f32 %v7565, %v238
      %v7732 = vadd.f32 %v7568, %v239
      %v7733 = vadd.f32 %v7573, %v240
      %v7734 = vadd.f32 %v7576, %v241
      %v7735 = vadd.f32 %v7581, %v242
      %v7736 = vadd.f32 %v7584, %v243
      %v7737 = vadd.f32 %v7589, %v244
      %v7738 = vadd.f32 %v7592, %v245
      %v7739 = vadd.f32 %v7597, %v246
      %v7740 = vadd.f32 %v7600, %v247
      %v7741 = vadd.f32 %v7605, %v248
      %v7742 = vadd.f32 %v7608, %v249
      %v7743 = vadd.f32 %v7613, %v250
      %v7744 = vadd.f32 %v7616, %v251
      %v7745 = vadd.f32 %v7621, %v252
      %v7746 = vadd.f32 %v7624, %v253
      %v7747 = vadd.f32 %v7629, %v254
      %v7748 = vadd.f32 %v7632, %v255
      %v7749 = vadd.f32 %v7637, %v256
      %v7750 = vadd.f32 %v7640, %v257
      %v7751 = vadd.f32 %v7645, %v258
      %v7752 = vadd.f32 %v7648, %v259
      %v7753 = vadd.f32 %v7653, %v260
      %v7754 = vadd.f32 %v7656, %v261
      %v7755 = vadd.f32 %v7661, %v262
      %v7756 = vadd.f32 %v7664, %v263
      %v7757 = vadd.f32 %v7669, %v264
      %v7758 = vadd.f32 %v7672, %v265
      %v7759 = vadd.f32 %v7677, %v266
      %v7760 = vadd.f32 %v7680, %v267
      %v7761 = vadd.f32 %v7685, %v268
      %v7762 = vadd.f32 %v7688, %v269
      %v7763 = vadd.f32 %v7693, %v270
      %v7764 = vadd.f32 %v7696, %v271
      %v7765 = vadd.f32 %v7701, %v272
      %v7766 = vadd.f32 %v7704, %v273
      %v7767 = vadd.f32 %v7709, %v274
      %v7768 = vadd.f32 %v7712, %v275
      %v7769 = vadd.f32 %v7717, %v276
      %v7770 = vadd.f32 %v7720, %v277
      %7771 = vst [vmem:[%s224] sm:$0xff] %v7723
      %7772 = vst [vmem:[%s224 + $0x8] sm:$0xff] %v7724
      %7773 = vst [vmem:[%s224 + $0x10] sm:$0xff] %v7725
      %7774 = vst [vmem:[%s224 + $0x18] sm:$0xff] %v7726
      %7775 = vst [vmem:[%s224 + $0x20] sm:$0xff] %v7727
      %7776 = vst [vmem:[%s224 + $0x28] sm:$0xff] %v7728
      %7777 = vst [vmem:[%s224 + $0x30] sm:$0xff] %v7729
      %7778 = vst [vmem:[%s224 + $0x38] sm:$0xff] %v7730
      %7779 = vst [vmem:[%s224 + $0x40] sm:$0xff] %v7731
      %7780 = vst [vmem:[%s224 + $0x48] sm:$0xff] %v7732
      %7781 = vst [vmem:[%s224 + $0x50] sm:$0xff] %v7733
      %7782 = vst [vmem:[%s224 + $0x58] sm:$0xff] %v7734
      %7783 = vst [vmem:[%s224 + $0x60] sm:$0xff] %v7735
      %7784 = vst [vmem:[%s224 + $0x68] sm:$0xff] %v7736
      %7785 = vst [vmem:[%s224 + $0x70] sm:$0xff] %v7737
      %7786 = vst [vmem:[%s224 + $0x78] sm:$0xff] %v7738
      %7787 = vst [vmem:[%s224 + $0x80] sm:$0xff] %v7739
      %7788 = vst [vmem:[%s224 + $0x88] sm:$0xff] %v7740
      %7789 = vst [vmem:[%s224 + $0x90] sm:$0xff] %v7741
      %7790 = vst [vmem:[%s224 + $0x98] sm:$0xff] %v7742
      %7791 = vst [vmem:[%s224 + $0xa0] sm:$0xff] %v7743
      %7792 = vst [vmem:[%s224 + $0xa8] sm:$0xff] %v7744
      %7793 = vst [vmem:[%s224 + $0xb0] sm:$0xff] %v7745
      %7794 = vst [vmem:[%s224 + $0xb8] sm:$0xff] %v7746
      %7795 = vst [vmem:[%s224 + $0xc0] sm:$0xff] %v7747
      %7796 = vst [vmem:[%s224 + $0xc8] sm:$0xff] %v7748
      %7797 = vst [vmem:[%s224 + $0xd0] sm:$0xff] %v7749
      %7798 = vst [vmem:[%s224 + $0xd8] sm:$0xff] %v7750
      %7799 = vst [vmem:[%s224 + $0xe0] sm:$0xff] %v7751
      %7800 = vst [vmem:[%s224 + $0xe8] sm:$0xff] %v7752
      %7801 = vst [vmem:[%s224 + $0xf0] sm:$0xff] %v7753
      %7802 = vst [vmem:[%s224 + $0xf8] sm:$0xff] %v7754
      %7803 = vst [vmem:[%s224 + $0x100] sm:$0xff] %v7755
      %7804 = vst [vmem:[%s224 + $0x108] sm:$0xff] %v7756
      %7805 = vst [vmem:[%s224 + $0x110] sm:$0xff] %v7757
      %7806 = vst [vmem:[%s224 + $0x118] sm:$0xff] %v7758
      %7807 = vst [vmem:[%s224 + $0x120] sm:$0xff] %v7759
      %7808 = vst [vmem:[%s224 + $0x128] sm:$0xff] %v7760
      %7809 = vst [vmem:[%s224 + $0x130] sm:$0xff] %v7761
      %7810 = vst [vmem:[%s224 + $0x138] sm:$0xff] %v7762
      %7811 = vst [vmem:[%s224 + $0x140] sm:$0xff] %v7763
      %7812 = vst [vmem:[%s224 + $0x148] sm:$0xff] %v7764
      %7813 = vst [vmem:[%s224 + $0x150] sm:$0xff] %v7765
      %7814 = vst [vmem:[%s224 + $0x158] sm:$0xff] %v7766
      %7815 = vst [vmem:[%s224 + $0x160] sm:$0xff] %v7767
      %7816 = vst [vmem:[%s224 + $0x168] sm:$0xff] %v7768
      %7817 = vst [vmem:[%s224 + $0x170] sm:$0xff] %v7769
      %7818 = vst [vmem:[%s224 + $0x178] sm:$0xff] %v7770
      %p7819 = scmp.lt.s32.totalorder %s16, 1
      %s7820 = scalar_select %p7819, %s16, 1
      %s7821 = smul.addr %s7820, 48
      %s7822 = smul.addr %s7821, 8
      %s7823 = scalar_lea.vmem %s5, %s7822
      // Predicated region
      $region41: #{resblock_forward.1} parent=39 // pred_check
        %p7824 = pneg %p144
      $region42: #{resblock_forward.1} parent=39 // pred_check_branch
        %7826 = sbr.rel (%p7824) target = $region44
      $region43: #{resblock_forward.1} parent=39 // pred_region
        _
      $region44: #{resblock_forward.1} parent=39 // pred_fallthru
        _
    $region40: #{resblock_forward.1} parent=5 // pred_fallthru
      _
    %p7827 = scmp.le.s32.totalorder 2, %s11
    // Predicated region
    $region45: #{resblock_forward.1} parent=5 // pred_check
      %p7828 = pneg %p7827
    $region46: #{resblock_forward.1} parent=5 // pred_check_branch
      %7830 = sbr.rel (%p7828) target = $region48
    $region47: #{resblock_forward.1} parent=5 // pred_region
      %s7831 = ssub.s32 %s11, 2
      // Predicated region
      $region49: #{resblock_forward.1} parent=47 // pred_check
        %p7832 = pneg %p150
      $region50: #{resblock_forward.1} parent=47 // pred_check_branch
        %7834 = sbr.rel (%p7832) target = $region52
      $region51: #{resblock_forward.1} parent=47 // pred_region
        %p7835 = scmp.lt.s32.totalorder %s17, 1
        %s7836 = scalar_select %p7835, %s17, 1
        %s7837 = smul.addr %s7836, 48
        %s7838 = smul.addr %s7837, 8
        %s7839 = scalar_lea.vmem %s5, %s7838
      $region52: #{resblock_forward.1} parent=47 // pred_fallthru
        _
    $region48: #{resblock_forward.1} parent=5 // pred_fallthru
      _
  $region6: #{resblock_forward.1} parent=0 // loop_footer
    %s15 = sadd.s32 1, %s11
  $region7: #{resblock_forward.1} parent=0 // loop_footer_branch
    %10 = sbr.rel target = $region3
  $region8: #{resblock_forward.1} parent=0 // loop_exit
    _

</llo_original>
